<compile_context>
chip_gen: v7x
topology: tpu7x:2x2x1
jax: 0.10.0
libtpu: 0.0.40
codegen_flags: <defaults>
</compile_context>

<pallas_src>
import functools

import jax
import jax.numpy as jnp
from jax.experimental import pallas as pl
from jax.experimental.pallas import tpu as pltpu


def _encoder_kernel(
    src_ref, pos_q_ref, pos_k_ref,          # (Bb, L, E) activations
    wqkv_ref, wo_ref, w1_ref, w2_ref,       # bf16 weights in x @ W layout
    vecs_ref, b1_ref,                       # packed f32 bias / LayerNorm vectors
    o_ref,                                  # (Bb, L, E) output
    *, nhead, num_layers,
):
    f32 = jnp.float32
    bf16 = jnp.bfloat16

    Bb, L, E = src_ref.shape
    M = Bb * L                               # MXU M-dimension (batch folded in)
    H = nhead
    Dh = E // H
    F = b1_ref.shape[1]
    eps = 1e-5

    # Flatten the batch block into the row dimension for all dense matmuls.
    x = src_ref[...].reshape(M, E).astype(f32)
    # pos_q / pos_k already contain the in-projection of pos, the q/k biases
    # and the 1/sqrt(Dh) scale (folded in the wrapper / prepare_params).
    pos_q = pos_q_ref[...].reshape(M, E).astype(f32)
    pos_k = pos_k_ref[...].reshape(M, E).astype(f32)

    # --- hoist all small-vector broadcasts out of the layer loop -------------
    vecs = vecs_ref[...]                     # (7, E) f32
    bv_b = jnp.broadcast_to(vecs[0], (M, E))
    bo_b = jnp.broadcast_to(vecs[1], (M, E))
    b2_b = jnp.broadcast_to(vecs[2], (M, E))
    g1_b = jnp.broadcast_to(vecs[3], (M, E))
    e1_b = jnp.broadcast_to(vecs[4], (M, E))
    g2_b = jnp.broadcast_to(vecs[5], (M, E))
    e2_b = jnp.broadcast_to(vecs[6], (M, E))
    b1_b = jnp.broadcast_to(b1_ref[0], (M, F))

    def layernorm(v, g, b):
        mu = jnp.mean(v, axis=-1, keepdims=True)
        var = jnp.mean((v - mu) ** 2, axis=-1, keepdims=True)
        return (v - mu) * jax.lax.rsqrt(var + eps) * g + b

    def layer(_, x):
        # ---- self-attention block (pre-norm) ----
        src2 = layernorm(x, g1_b, e1_b)
        qkv = jnp.dot(src2.astype(bf16), wqkv_ref[...],
                      preferred_element_type=f32)              # (M, 3E)
        q = qkv[:, :E] + pos_q                                  # q = k = src2+pos
        k = qkv[:, E:2 * E] + pos_k
        v = qkv[:, 2 * E:] + bv_b                               # value = src2

        # Leading-dim reshape (free relayout): heads stay lane slices, the
        # batch block becomes the leading (batched-einsum) axis.
        q3 = q.reshape(Bb, L, E).astype(bf16)
        k3 = k.reshape(Bb, L, E).astype(bf16)
        v3 = v.reshape(Bb, L, E).astype(bf16)

        # TODO(synk): for large L, tile the key axis with an online-softmax
        # (flash) accumulator instead of materializing the (Bb, L, L) scores.
        ctx_parts = []
        for h in range(H):                                      # static, H small
            sl = slice(h * Dh, (h + 1) * Dh)
            s = jnp.einsum("bqd,bkd->bqk", q3[:, :, sl], k3[:, :, sl],
                           preferred_element_type=f32)          # (Bb, L, L)
            s = s - jnp.max(s, axis=-1, keepdims=True)
            p = jnp.exp(s)                                      # f32 exp (v5e-safe)
            p = p * pl.reciprocal(jnp.sum(p, axis=-1, keepdims=True),
                                  approx=True)
            c = jnp.einsum("bqk,bkd->bqd", p.astype(bf16), v3[:, :, sl],
                           preferred_element_type=f32)          # (Bb, L, Dh)
            ctx_parts.append(c.reshape(M, Dh))
        merged = jnp.concatenate(ctx_parts, axis=-1)            # (M, E)

        attn = jnp.dot(merged.astype(bf16), wo_ref[...],
                       preferred_element_type=f32) + bo_b
        # dropout1 / attention-dropout are identity (eval mode).
        x = x + attn

        # ---- feed-forward block (pre-norm) ----
        src2 = layernorm(x, g2_b, e2_b)
        ff = jnp.dot(src2.astype(bf16), w1_ref[...],
                     preferred_element_type=f32) + b1_b
        ff = jnp.maximum(ff, 0.0)                               # ReLU
        ff = jnp.dot(ff.astype(bf16), w2_ref[...],
                     preferred_element_type=f32) + b2_b
        return x + ff                                           # dropout2 = id

    # Short fixed trip count over weight-shared layers: fully unroll so the
    # scheduler overlaps adjacent layers (weights are shared => no extra DMA).
    x = jax.lax.fori_loop(0, num_layers, layer, x, unroll=True)
    o_ref[...] = x.reshape(Bb, L, E).astype(o_ref.dtype)


def transformer_encoder(src, pos, params, nhead, num_layers, batch_block=None):
    """TransformerEncoder.forward: the shared layer applied num_layers times.

    src, pos: (B, L, E) float32.  params: output of prepare_params().
    """
    B, L, E = src.shape
    F = params["w1_t"].shape[1]
    assert E % nhead == 0, "d_model must be divisible by nhead"

    if batch_block is None:
        # Fold batch elements into the MXU M-dimension: aim for a few hundred
        # rows per grid step.  NOTE(v7x): with very small B this can leave only
        # one grid step (one TensorCore busy); pass batch_block=1 there if the
        # per-step M is already large enough.
        target = max(1, 256 // max(L, 1))
        batch_block = 1
        for d in range(1, B + 1):
            if B % d == 0 and d <= target:
                batch_block = d
    assert B % batch_block == 0
    grid_b = B // batch_block
    M = batch_block * L

    # pos only feeds Q and K, and the in-projection is linear, so project it
    # once here (plain XLA matmul) through the Q/K weight columns only.  The
    # Q columns / q-bias already carry the 1/sqrt(Dh) softmax scale.
    w_qk = params["w_qkv_t"][:, :2 * E].astype(jnp.float32)      # (E, 2E)
    pqk = jnp.dot(pos.reshape(B * L, E), w_qk) + params["b_qk"]  # (B*L, 2E)
    pos_q = pqk[:, :E].reshape(B, L, E)
    pos_k = pqk[:, E:].reshape(B, L, E)

    def per_block():
        return pl.BlockSpec((batch_block, L, E), lambda b: (b, 0, 0))

    def full(shape):
        # Constant index_map: Pallas does not re-DMA these between grid steps.
        # (If VMEM is tight on v7x they could also be single-buffered via
        #  pipeline_mode=pl.Buffered(1).)
        return pl.BlockSpec(shape, lambda b: (0,) * len(shape))

    in_specs = [
        per_block(), per_block(), per_block(),   # src, pos_q, pos_k
        full((E, 3 * E)),                        # fused W_qkv (bf16, Q pre-scaled)
        full((E, E)),                            # W_out (bf16)
        full((E, F)),                            # W_ffn1 (bf16)
        full((F, E)),                            # W_ffn2 (bf16)
        full((7, E)),                            # packed biases / LayerNorm params
        full((1, F)),                            # FFN bias 1
    ]

    # Explicit VMEM budget from the actual footprint, clamped to 48 MiB so the
    # request also fits a v7x TensorCore (64 MiB physical); 128 MiB chips
    # (v5e/v6e) have plenty of headroom either way.
    weight_bytes = 2 * 2 * (3 * E * E + E * E + 2 * E * F)       # bf16, double-buffered
    io_bytes = 2 * 4 * 4 * M * E                                 # src/pos_q/pos_k/out f32, x2
    live_bytes = 4 * M * (9 * E + F) + 4 * batch_block * nhead * L * L
    vmem_limit = int(min(max(2 * (weight_bytes + io_bytes + live_bytes),
                             16 << 20), 48 << 20))

    kernel = functools.partial(_encoder_kernel, nhead=nhead,
                               num_layers=num_layers)
    return pl.pallas_call(
        kernel,
        out_shape=jax.ShapeDtypeStruct((B, L, E), src.dtype),
        grid=(grid_b,),
        in_specs=in_specs,
        out_specs=pl.BlockSpec((batch_block, L, E), lambda b: (b, 0, 0)),
        compiler_params=pltpu.CompilerParams(
            # Batch blocks are independent -> megacore-shardable (v7x 2 TCs).
            dimension_semantics=("parallel",),
            vmem_limit_bytes=vmem_limit,
        ),
    )(
        src, pos_q, pos_k,
        params["w_qkv_t"], params["w_o_t"], params["w1_t"], params["w2_t"],
        params["vecs"], params["b1"],
    )


def init_params(key, d_model, dim_ff):
    """Deterministic synthetic parameters in PyTorch shapes / conventions."""
    E, F = d_model, dim_ff
    ks = jax.random.split(key, 8)
    std = 0.02
    return {
        "in_proj_w": jax.random.normal(ks[0], (3 * E, E), jnp.float32) * std,
        "in_proj_b": jax.random.normal(ks[1], (3 * E,), jnp.float32) * std,
        "out_w":     jax.random.normal(ks[2], (E, E), jnp.float32) * std,
        "out_b":     jax.random.normal(ks[3], (E,), jnp.float32) * std,
        "w1":        jax.random.normal(ks[4], (F, E), jnp.float32) * std,
        "b1":        jax.random.normal(ks[5], (F,), jnp.float32) * std,
        "w2":        jax.random.normal(ks[6], (E, F), jnp.float32) * std,
        "b2":        jax.random.normal(ks[7], (E,), jnp.float32) * std,
        "n1_g": jnp.ones((E,), jnp.float32), "n1_b": jnp.zeros((E,), jnp.float32),
        "n2_g": jnp.ones((E,), jnp.float32), "n2_b": jnp.zeros((E,), jnp.float32),
    }


def prepare_params(raw, nhead):
    """Fuse / pack / cast PyTorch-convention params into the kernel layout.

    Weights are transposed to `x @ W` layout, QKV is fused into one (E, 3E)
    matrix with the 1/sqrt(Dh) attention scale folded into the Q columns and
    q-bias, matmul weights are cast to bf16 (f32 accumulation in-kernel), and
    the small vectors are packed into a (7, E) array plus a (1, F) array.

    NOTE: for the realistic IPT d_model=576 the lane dim is 4.5x128; if masked
    output stores ever show up as the bottleneck, pad E to 640 here (zero
    columns) and mask the LayerNorm reduction accordingly.
    """
    E = raw["out_w"].shape[0]
    F = raw["w1"].shape[0]
    Dh = E // nhead
    scale = 1.0 / (Dh ** 0.5)

    w_q = raw["in_proj_w"][:E] * scale          # pre-scaled Q projection
    w_k = raw["in_proj_w"][E:2 * E]
    w_v = raw["in_proj_w"][2 * E:]
    w_qkv_t = jnp.concatenate([w_q.T, w_k.T, w_v.T], axis=1)    # (E, 3E)

    b_qk = jnp.concatenate([raw["in_proj_b"][:E] * scale,        # scaled q-bias
                            raw["in_proj_b"][E:2 * E]]).astype(jnp.float32)

    vecs = jnp.stack([
        raw["in_proj_b"][2 * E:],        # bv
        raw["out_b"],                    # bo
        raw["b2"],                       # FFN bias 2
        raw["n1_g"], raw["n1_b"],        # LayerNorm 1 gamma / beta
        raw["n2_g"], raw["n2_b"],        # LayerNorm 2 gamma / beta
    ], axis=0).astype(jnp.float32)

    return {
        "w_qkv_t": w_qkv_t.astype(jnp.bfloat16),               # (E, 3E)
        "w_o_t":   raw["out_w"].T.astype(jnp.bfloat16),        # (E, E)
        "w1_t":    raw["w1"].T.astype(jnp.bfloat16),           # (E, F)
        "w2_t":    raw["w2"].T.astype(jnp.bfloat16),           # (F, E)
        "vecs":    vecs,                                       # (7, E)
        "b1":      raw["b1"].reshape(1, F).astype(jnp.float32),
        "b_qk":    b_qk,                                       # (2E,) for pos proj
    }


if __name__ == "__main__":
    B, L, E = 2, 8, 128       # batch, sequence length, d_model (lane-dense)
    NHEAD, FF = 4, 256        # heads, feed-forward width
    NUM_LAYERS = 2

    key = jax.random.PRNGKey(0)
    k_src, k_pos, k_par = jax.random.split(key, 3)
    src = jax.random.normal(k_src, (B, L, E), jnp.float32)
    pos = jax.random.normal(k_pos, (B, L, E), jnp.float32) * 0.1
    params = prepare_params(init_params(k_par, E, FF), NHEAD)

    out = transformer_encoder(src, pos, params, NHEAD, NUM_LAYERS)
    out = jax.block_until_ready(out)
    assert out.shape == (B, L, E)
    assert bool(jnp.all(jnp.isfinite(out)))
    print("KERNEL_OK")
</pallas_src>

<mosaic_0001>
module attributes {stable_mosaic.version = 11 : i64} {
  func.func @_encoder_kernel(%arg0: i32, %arg1: memref<2x8x128xf32, #tpu.memory_space<vmem>>, %arg2: memref<2x8x128xf32, #tpu.memory_space<vmem>>, %arg3: memref<2x8x128xf32, #tpu.memory_space<vmem>>, %arg4: memref<128x384xbf16, #tpu.memory_space<vmem>>, %arg5: memref<128x128xbf16, #tpu.memory_space<vmem>>, %arg6: memref<128x256xbf16, #tpu.memory_space<vmem>>, %arg7: memref<256x128xbf16, #tpu.memory_space<vmem>>, %arg8: memref<7x128xf32, #tpu.memory_space<vmem>>, %arg9: memref<1x256xf32, #tpu.memory_space<vmem>>, %arg10: memref<2x8x128xf32, #tpu.memory_space<vmem>>) attributes {dimension_semantics = [#tpu.dimension_semantics<parallel>], iteration_bounds = array<i64: 1>, scalar_prefetch = 0 : i64, scratch_operands = 0 : i64, tpu.core_type = #tpu.core_type<tc>, window_params = [{transform_indices = @transform_0, window_bounds = array<i64: 2, 8, 128>}, {transform_indices = @transform_1, window_bounds = array<i64: 2, 8, 128>}, {transform_indices = @transform_2, window_bounds = array<i64: 2, 8, 128>}, {pipeline_mode = #tpu.pipeline_mode<synchronous>, transform_indices = @transform_3, window_bounds = array<i64: 128, 384>}, {pipeline_mode = #tpu.pipeline_mode<synchronous>, transform_indices = @transform_4, window_bounds = array<i64: 128, 128>}, {pipeline_mode = #tpu.pipeline_mode<synchronous>, transform_indices = @transform_5, window_bounds = array<i64: 128, 256>}, {pipeline_mode = #tpu.pipeline_mode<synchronous>, transform_indices = @transform_6, window_bounds = array<i64: 256, 128>}, {pipeline_mode = #tpu.pipeline_mode<synchronous>, transform_indices = @transform_7, window_bounds = array<i64: 7, 128>}, {pipeline_mode = #tpu.pipeline_mode<synchronous>, transform_indices = @transform_8, window_bounds = array<i64: 1, 256>}, {transform_indices = @transform_9, window_bounds = array<i64: 2, 8, 128>}]} {
    %c0 = arith.constant 0 : index
    %c0_0 = arith.constant 0 : index
    %c0_1 = arith.constant 0 : index
    %0 = vector.load %arg1[%c0, %c0_0, %c0_1] : memref<2x8x128xf32, #tpu.memory_space<vmem>>, vector<2x8x128xf32>
    %1 = vector.shape_cast %0 : vector<2x8x128xf32> to vector<16x128xf32>
    %c0_2 = arith.constant 0 : index
    %c0_3 = arith.constant 0 : index
    %c0_4 = arith.constant 0 : index
    %2 = vector.load %arg2[%c0_2, %c0_3, %c0_4] : memref<2x8x128xf32, #tpu.memory_space<vmem>>, vector<2x8x128xf32>
    %3 = vector.shape_cast %2 : vector<2x8x128xf32> to vector<16x128xf32>
    %c0_5 = arith.constant 0 : index
    %c0_6 = arith.constant 0 : index
    %c0_7 = arith.constant 0 : index
    %4 = vector.load %arg3[%c0_5, %c0_6, %c0_7] : memref<2x8x128xf32, #tpu.memory_space<vmem>>, vector<2x8x128xf32>
    %5 = vector.shape_cast %4 : vector<2x8x128xf32> to vector<16x128xf32>
    %c0_8 = arith.constant 0 : index
    %c0_9 = arith.constant 0 : index
    %6 = vector.load %arg8[%c0_8, %c0_9] : memref<7x128xf32, #tpu.memory_space<vmem>>, vector<7x128xf32>
    %7 = vector.extract_strided_slice %6 {offsets = [0, 0], sizes = [1, 128], strides = [1, 1]} : vector<7x128xf32> to vector<1x128xf32>
    %8 = vector.shape_cast %7 : vector<1x128xf32> to vector<128xf32>
    %9 = vector.shape_cast %8 : vector<128xf32> to vector<1x128xf32>
    %10 = vector.broadcast %9 : vector<1x128xf32> to vector<16x128xf32>
    %11 = vector.extract_strided_slice %6 {offsets = [1, 0], sizes = [1, 128], strides = [1, 1]} : vector<7x128xf32> to vector<1x128xf32>
    %12 = vector.shape_cast %11 : vector<1x128xf32> to vector<128xf32>
    %13 = vector.shape_cast %12 : vector<128xf32> to vector<1x128xf32>
    %14 = vector.broadcast %13 : vector<1x128xf32> to vector<16x128xf32>
    %15 = vector.extract_strided_slice %6 {offsets = [2, 0], sizes = [1, 128], strides = [1, 1]} : vector<7x128xf32> to vector<1x128xf32>
    %16 = vector.shape_cast %15 : vector<1x128xf32> to vector<128xf32>
    %17 = vector.shape_cast %16 : vector<128xf32> to vector<1x128xf32>
    %18 = vector.broadcast %17 : vector<1x128xf32> to vector<16x128xf32>
    %19 = vector.extract_strided_slice %6 {offsets = [3, 0], sizes = [1, 128], strides = [1, 1]} : vector<7x128xf32> to vector<1x128xf32>
    %20 = vector.shape_cast %19 : vector<1x128xf32> to vector<128xf32>
    %21 = vector.shape_cast %20 : vector<128xf32> to vector<1x128xf32>
    %22 = vector.broadcast %21 : vector<1x128xf32> to vector<16x128xf32>
    %23 = vector.extract_strided_slice %6 {offsets = [4, 0], sizes = [1, 128], strides = [1, 1]} : vector<7x128xf32> to vector<1x128xf32>
    %24 = vector.shape_cast %23 : vector<1x128xf32> to vector<128xf32>
    %25 = vector.shape_cast %24 : vector<128xf32> to vector<1x128xf32>
    %26 = vector.broadcast %25 : vector<1x128xf32> to vector<16x128xf32>
    %27 = vector.extract_strided_slice %6 {offsets = [5, 0], sizes = [1, 128], strides = [1, 1]} : vector<7x128xf32> to vector<1x128xf32>
    %28 = vector.shape_cast %27 : vector<1x128xf32> to vector<128xf32>
    %29 = vector.shape_cast %28 : vector<128xf32> to vector<1x128xf32>
    %30 = vector.broadcast %29 : vector<1x128xf32> to vector<16x128xf32>
    %31 = vector.extract_strided_slice %6 {offsets = [6, 0], sizes = [1, 128], strides = [1, 1]} : vector<7x128xf32> to vector<1x128xf32>
    %32 = vector.shape_cast %31 : vector<1x128xf32> to vector<128xf32>
    %33 = vector.shape_cast %32 : vector<128xf32> to vector<1x128xf32>
    %34 = vector.broadcast %33 : vector<1x128xf32> to vector<16x128xf32>
    %c0_10 = arith.constant 0 : index
    %c0_11 = arith.constant 0 : index
    %35 = vector.load %arg9[%c0_10, %c0_11] : memref<1x256xf32, #tpu.memory_space<vmem>>, vector<1x256xf32>
    %36 = vector.shape_cast %35 : vector<1x256xf32> to vector<256xf32>
    %37 = vector.shape_cast %36 : vector<256xf32> to vector<1x256xf32>
    %38 = vector.broadcast %37 : vector<1x256xf32> to vector<16x256xf32>
    %c0_i32 = arith.constant 0 : i32
    %cst = arith.constant dense<0.000000e+00> : vector<16xf32>
    %39 = vector.multi_reduction <add>, %1, %cst [1] : vector<16x128xf32> to vector<16xf32>
    %40 = vector.shape_cast %39 : vector<16xf32> to vector<16x1xf32>
    %cst_12 = arith.constant 1.280000e+02 : f32
    %41 = vector.broadcast %cst_12 : f32 to vector<16x1xf32>
    %42 = arith.divf %40, %41 : vector<16x1xf32>
    %43 = vector.broadcast %42 : vector<16x1xf32> to vector<16x128xf32>
    %44 = arith.subf %1, %43 : vector<16x128xf32>
    %45 = arith.mulf %44, %44 : vector<16x128xf32>
    %cst_13 = arith.constant dense<0.000000e+00> : vector<16xf32>
    %46 = vector.multi_reduction <add>, %45, %cst_13 [1] : vector<16x128xf32> to vector<16xf32>
    %47 = vector.shape_cast %46 : vector<16xf32> to vector<16x1xf32>
    %cst_14 = arith.constant 1.280000e+02 : f32
    %48 = vector.broadcast %cst_14 : f32 to vector<16x1xf32>
    %49 = arith.divf %47, %48 : vector<16x1xf32>
    %50 = vector.broadcast %42 : vector<16x1xf32> to vector<16x128xf32>
    %51 = arith.subf %1, %50 : vector<16x128xf32>
    %cst_15 = arith.constant 9.99999974E-6 : f32
    %52 = vector.broadcast %cst_15 : f32 to vector<16x1xf32>
    %53 = arith.addf %49, %52 : vector<16x1xf32>
    %54 = math.rsqrt %53 : vector<16x1xf32>
    %55 = vector.broadcast %54 : vector<16x1xf32> to vector<16x128xf32>
    %56 = arith.mulf %51, %55 : vector<16x128xf32>
    %57 = arith.mulf %56, %22 : vector<16x128xf32>
    %58 = arith.addf %57, %26 : vector<16x128xf32>
    %59 = arith.truncf %58 : vector<16x128xf32> to vector<16x128xbf16>
    %c0_16 = arith.constant 0 : index
    %c0_17 = arith.constant 0 : index
    %60 = vector.load %arg4[%c0_16, %c0_17] : memref<128x384xbf16, #tpu.memory_space<vmem>>, vector<128x384xbf16>
    %cst_18 = arith.constant dense<0.000000e+00> : vector<16x384xf32>
    %61 = tpu.matmul %59, %60, %cst_18 {dimension_numbers = #tpu.dot_dimension_numbers<[1], [0], [0], [1], [0, 0, 1, 1], [], []>} : vector<16x128xbf16>, vector<128x384xbf16>, vector<16x384xf32> -> vector<16x384xf32>
    %62 = vector.extract_strided_slice %61 {offsets = [0, 0], sizes = [16, 128], strides = [1, 1]} : vector<16x384xf32> to vector<16x128xf32>
    %63 = arith.addf %62, %3 : vector<16x128xf32>
    %64 = vector.extract_strided_slice %61 {offsets = [0, 128], sizes = [16, 128], strides = [1, 1]} : vector<16x384xf32> to vector<16x128xf32>
    %65 = arith.addf %64, %5 : vector<16x128xf32>
    %66 = vector.extract_strided_slice %61 {offsets = [0, 256], sizes = [16, 128], strides = [1, 1]} : vector<16x384xf32> to vector<16x128xf32>
    %67 = arith.addf %66, %10 : vector<16x128xf32>
    %68 = vector.shape_cast %63 : vector<16x128xf32> to vector<2x8x128xf32>
    %69 = arith.truncf %68 : vector<2x8x128xf32> to vector<2x8x128xbf16>
    %70 = vector.shape_cast %65 : vector<16x128xf32> to vector<2x8x128xf32>
    %71 = arith.truncf %70 : vector<2x8x128xf32> to vector<2x8x128xbf16>
    %72 = vector.shape_cast %67 : vector<16x128xf32> to vector<2x8x128xf32>
    %73 = arith.truncf %72 : vector<2x8x128xf32> to vector<2x8x128xbf16>
    %74 = vector.extract_strided_slice %69 {offsets = [0, 0, 0], sizes = [2, 8, 32], strides = [1, 1, 1]} : vector<2x8x128xbf16> to vector<2x8x32xbf16>
    %75 = vector.extract_strided_slice %71 {offsets = [0, 0, 0], sizes = [2, 8, 32], strides = [1, 1, 1]} : vector<2x8x128xbf16> to vector<2x8x32xbf16>
    "tpu.trace_start"() <{level = 10 : i32, message = "bqd,bkd->bqk"}> : () -> ()
    %cst_19 = arith.constant dense<0.000000e+00> : vector<2x8x8xf32>
    %76 = tpu.matmul %74, %75, %cst_19 {dimension_numbers = #tpu.dot_dimension_numbers<[2], [2], [1], [1], [0, 0, 0, 1, 1, 1], [0], [0]>} : vector<2x8x32xbf16>, vector<2x8x32xbf16>, vector<2x8x8xf32> -> vector<2x8x8xf32>
    "tpu.trace_stop"() : () -> ()
    %cst_20 = arith.constant dense<0xFF800000> : vector<2x8xf32>
    %77 = vector.multi_reduction <maximumf>, %76, %cst_20 [2] : vector<2x8x8xf32> to vector<2x8xf32>
    %78 = vector.shape_cast %77 : vector<2x8xf32> to vector<2x8x1xf32>
    %79 = vector.broadcast %78 : vector<2x8x1xf32> to vector<2x8x8xf32>
    %80 = arith.subf %76, %79 : vector<2x8x8xf32>
    %81 = math.exp %80 : vector<2x8x8xf32>
    %cst_21 = arith.constant dense<0.000000e+00> : vector<2x8xf32>
    %82 = vector.multi_reduction <add>, %81, %cst_21 [2] : vector<2x8x8xf32> to vector<2x8xf32>
    %83 = vector.shape_cast %82 : vector<2x8xf32> to vector<2x8x1xf32>
    %84 = tpu.reciprocal %83 {approx = true} : vector<2x8x1xf32> -> vector<2x8x1xf32>
    %85 = vector.broadcast %84 : vector<2x8x1xf32> to vector<2x8x8xf32>
    %86 = arith.mulf %81, %85 : vector<2x8x8xf32>
    %87 = arith.truncf %86 : vector<2x8x8xf32> to vector<2x8x8xbf16>
    %88 = vector.extract_strided_slice %73 {offsets = [0, 0, 0], sizes = [2, 8, 32], strides = [1, 1, 1]} : vector<2x8x128xbf16> to vector<2x8x32xbf16>
    "tpu.trace_start"() <{level = 10 : i32, message = "bqk,bkd->bqd"}> : () -> ()
    %cst_22 = arith.constant dense<0.000000e+00> : vector<2x8x32xf32>
    %89 = tpu.matmul %87, %88, %cst_22 {dimension_numbers = #tpu.dot_dimension_numbers<[2], [1], [1], [2], [0, 0, 0, 1, 1, 2], [0], [0]>} : vector<2x8x8xbf16>, vector<2x8x32xbf16>, vector<2x8x32xf32> -> vector<2x8x32xf32>
    "tpu.trace_stop"() : () -> ()
    %90 = vector.shape_cast %89 : vector<2x8x32xf32> to vector<16x32xf32>
    %91 = vector.extract_strided_slice %69 {offsets = [0, 0, 32], sizes = [2, 8, 32], strides = [1, 1, 1]} : vector<2x8x128xbf16> to vector<2x8x32xbf16>
    %92 = vector.extract_strided_slice %71 {offsets = [0, 0, 32], sizes = [2, 8, 32], strides = [1, 1, 1]} : vector<2x8x128xbf16> to vector<2x8x32xbf16>
    "tpu.trace_start"() <{level = 10 : i32, message = "bqd,bkd->bqk"}> : () -> ()
    %cst_23 = arith.constant dense<0.000000e+00> : vector<2x8x8xf32>
    %93 = tpu.matmul %91, %92, %cst_23 {dimension_numbers = #tpu.dot_dimension_numbers<[2], [2], [1], [1], [0, 0, 0, 1, 1, 1], [0], [0]>} : vector<2x8x32xbf16>, vector<2x8x32xbf16>, vector<2x8x8xf32> -> vector<2x8x8xf32>
    "tpu.trace_stop"() : () -> ()
    %cst_24 = arith.constant dense<0xFF800000> : vector<2x8xf32>
    %94 = vector.multi_reduction <maximumf>, %93, %cst_24 [2] : vector<2x8x8xf32> to vector<2x8xf32>
    %95 = vector.shape_cast %94 : vector<2x8xf32> to vector<2x8x1xf32>
    %96 = vector.broadcast %95 : vector<2x8x1xf32> to vector<2x8x8xf32>
    %97 = arith.subf %93, %96 : vector<2x8x8xf32>
    %98 = math.exp %97 : vector<2x8x8xf32>
    %cst_25 = arith.constant dense<0.000000e+00> : vector<2x8xf32>
    %99 = vector.multi_reduction <add>, %98, %cst_25 [2] : vector<2x8x8xf32> to vector<2x8xf32>
    %100 = vector.shape_cast %99 : vector<2x8xf32> to vector<2x8x1xf32>
    %101 = tpu.reciprocal %100 {approx = true} : vector<2x8x1xf32> -> vector<2x8x1xf32>
    %102 = vector.broadcast %101 : vector<2x8x1xf32> to vector<2x8x8xf32>
    %103 = arith.mulf %98, %102 : vector<2x8x8xf32>
    %104 = arith.truncf %103 : vector<2x8x8xf32> to vector<2x8x8xbf16>
    %105 = vector.extract_strided_slice %73 {offsets = [0, 0, 32], sizes = [2, 8, 32], strides = [1, 1, 1]} : vector<2x8x128xbf16> to vector<2x8x32xbf16>
    "tpu.trace_start"() <{level = 10 : i32, message = "bqk,bkd->bqd"}> : () -> ()
    %cst_26 = arith.constant dense<0.000000e+00> : vector<2x8x32xf32>
    %106 = tpu.matmul %104, %105, %cst_26 {dimension_numbers = #tpu.dot_dimension_numbers<[2], [1], [1], [2], [0, 0, 0, 1, 1, 2], [0], [0]>} : vector<2x8x8xbf16>, vector<2x8x32xbf16>, vector<2x8x32xf32> -> vector<2x8x32xf32>
    "tpu.trace_stop"() : () -> ()
    %107 = vector.shape_cast %106 : vector<2x8x32xf32> to vector<16x32xf32>
    %108 = vector.extract_strided_slice %69 {offsets = [0, 0, 64], sizes = [2, 8, 32], strides = [1, 1, 1]} : vector<2x8x128xbf16> to vector<2x8x32xbf16>
    %109 = vector.extract_strided_slice %71 {offsets = [0, 0, 64], sizes = [2, 8, 32], strides = [1, 1, 1]} : vector<2x8x128xbf16> to vector<2x8x32xbf16>
    "tpu.trace_start"() <{level = 10 : i32, message = "bqd,bkd->bqk"}> : () -> ()
    %cst_27 = arith.constant dense<0.000000e+00> : vector<2x8x8xf32>
    %110 = tpu.matmul %108, %109, %cst_27 {dimension_numbers = #tpu.dot_dimension_numbers<[2], [2], [1], [1], [0, 0, 0, 1, 1, 1], [0], [0]>} : vector<2x8x32xbf16>, vector<2x8x32xbf16>, vector<2x8x8xf32> -> vector<2x8x8xf32>
    "tpu.trace_stop"() : () -> ()
    %cst_28 = arith.constant dense<0xFF800000> : vector<2x8xf32>
    %111 = vector.multi_reduction <maximumf>, %110, %cst_28 [2] : vector<2x8x8xf32> to vector<2x8xf32>
    %112 = vector.shape_cast %111 : vector<2x8xf32> to vector<2x8x1xf32>
    %113 = vector.broadcast %112 : vector<2x8x1xf32> to vector<2x8x8xf32>
    %114 = arith.subf %110, %113 : vector<2x8x8xf32>
    %115 = math.exp %114 : vector<2x8x8xf32>
    %cst_29 = arith.constant dense<0.000000e+00> : vector<2x8xf32>
    %116 = vector.multi_reduction <add>, %115, %cst_29 [2] : vector<2x8x8xf32> to vector<2x8xf32>
    %117 = vector.shape_cast %116 : vector<2x8xf32> to vector<2x8x1xf32>
    %118 = tpu.reciprocal %117 {approx = true} : vector<2x8x1xf32> -> vector<2x8x1xf32>
    %119 = vector.broadcast %118 : vector<2x8x1xf32> to vector<2x8x8xf32>
    %120 = arith.mulf %115, %119 : vector<2x8x8xf32>
    %121 = arith.truncf %120 : vector<2x8x8xf32> to vector<2x8x8xbf16>
    %122 = vector.extract_strided_slice %73 {offsets = [0, 0, 64], sizes = [2, 8, 32], strides = [1, 1, 1]} : vector<2x8x128xbf16> to vector<2x8x32xbf16>
    "tpu.trace_start"() <{level = 10 : i32, message = "bqk,bkd->bqd"}> : () -> ()
    %cst_30 = arith.constant dense<0.000000e+00> : vector<2x8x32xf32>
    %123 = tpu.matmul %121, %122, %cst_30 {dimension_numbers = #tpu.dot_dimension_numbers<[2], [1], [1], [2], [0, 0, 0, 1, 1, 2], [0], [0]>} : vector<2x8x8xbf16>, vector<2x8x32xbf16>, vector<2x8x32xf32> -> vector<2x8x32xf32>
    "tpu.trace_stop"() : () -> ()
    %124 = vector.shape_cast %123 : vector<2x8x32xf32> to vector<16x32xf32>
    %125 = vector.extract_strided_slice %69 {offsets = [0, 0, 96], sizes = [2, 8, 32], strides = [1, 1, 1]} : vector<2x8x128xbf16> to vector<2x8x32xbf16>
    %126 = vector.extract_strided_slice %71 {offsets = [0, 0, 96], sizes = [2, 8, 32], strides = [1, 1, 1]} : vector<2x8x128xbf16> to vector<2x8x32xbf16>
    "tpu.trace_start"() <{level = 10 : i32, message = "bqd,bkd->bqk"}> : () -> ()
    %cst_31 = arith.constant dense<0.000000e+00> : vector<2x8x8xf32>
    %127 = tpu.matmul %125, %126, %cst_31 {dimension_numbers = #tpu.dot_dimension_numbers<[2], [2], [1], [1], [0, 0, 0, 1, 1, 1], [0], [0]>} : vector<2x8x32xbf16>, vector<2x8x32xbf16>, vector<2x8x8xf32> -> vector<2x8x8xf32>
    "tpu.trace_stop"() : () -> ()
    %cst_32 = arith.constant dense<0xFF800000> : vector<2x8xf32>
    %128 = vector.multi_reduction <maximumf>, %127, %cst_32 [2] : vector<2x8x8xf32> to vector<2x8xf32>
    %129 = vector.shape_cast %128 : vector<2x8xf32> to vector<2x8x1xf32>
    %130 = vector.broadcast %129 : vector<2x8x1xf32> to vector<2x8x8xf32>
    %131 = arith.subf %127, %130 : vector<2x8x8xf32>
    %132 = math.exp %131 : vector<2x8x8xf32>
    %cst_33 = arith.constant dense<0.000000e+00> : vector<2x8xf32>
    %133 = vector.multi_reduction <add>, %132, %cst_33 [2] : vector<2x8x8xf32> to vector<2x8xf32>
    %134 = vector.shape_cast %133 : vector<2x8xf32> to vector<2x8x1xf32>
    %135 = tpu.reciprocal %134 {approx = true} : vector<2x8x1xf32> -> vector<2x8x1xf32>
    %136 = vector.broadcast %135 : vector<2x8x1xf32> to vector<2x8x8xf32>
    %137 = arith.mulf %132, %136 : vector<2x8x8xf32>
    %138 = arith.truncf %137 : vector<2x8x8xf32> to vector<2x8x8xbf16>
    %139 = vector.extract_strided_slice %73 {offsets = [0, 0, 96], sizes = [2, 8, 32], strides = [1, 1, 1]} : vector<2x8x128xbf16> to vector<2x8x32xbf16>
    "tpu.trace_start"() <{level = 10 : i32, message = "bqk,bkd->bqd"}> : () -> ()
    %cst_34 = arith.constant dense<0.000000e+00> : vector<2x8x32xf32>
    %140 = tpu.matmul %138, %139, %cst_34 {dimension_numbers = #tpu.dot_dimension_numbers<[2], [1], [1], [2], [0, 0, 0, 1, 1, 2], [0], [0]>} : vector<2x8x8xbf16>, vector<2x8x32xbf16>, vector<2x8x32xf32> -> vector<2x8x32xf32>
    "tpu.trace_stop"() : () -> ()
    %141 = vector.shape_cast %140 : vector<2x8x32xf32> to vector<16x32xf32>
    %142 = tpu.concatenate %90, %107, %124, %141 in 1 : vector<16x32xf32>, vector<16x32xf32>, vector<16x32xf32>, vector<16x32xf32> -> vector<16x128xf32>
    %143 = arith.truncf %142 : vector<16x128xf32> to vector<16x128xbf16>
    %c0_35 = arith.constant 0 : index
    %c0_36 = arith.constant 0 : index
    %144 = vector.load %arg5[%c0_35, %c0_36] : memref<128x128xbf16, #tpu.memory_space<vmem>>, vector<128x128xbf16>
    %cst_37 = arith.constant dense<0.000000e+00> : vector<16x128xf32>
    %145 = tpu.matmul %143, %144, %cst_37 {dimension_numbers = #tpu.dot_dimension_numbers<[1], [0], [0], [1], [0, 0, 1, 1], [], []>} : vector<16x128xbf16>, vector<128x128xbf16>, vector<16x128xf32> -> vector<16x128xf32>
    %146 = arith.addf %145, %14 : vector<16x128xf32>
    %147 = arith.addf %1, %146 : vector<16x128xf32>
    %cst_38 = arith.constant dense<0.000000e+00> : vector<16xf32>
    %148 = vector.multi_reduction <add>, %147, %cst_38 [1] : vector<16x128xf32> to vector<16xf32>
    %149 = vector.shape_cast %148 : vector<16xf32> to vector<16x1xf32>
    %cst_39 = arith.constant 1.280000e+02 : f32
    %150 = vector.broadcast %cst_39 : f32 to vector<16x1xf32>
    %151 = arith.divf %149, %150 : vector<16x1xf32>
    %152 = vector.broadcast %151 : vector<16x1xf32> to vector<16x128xf32>
    %153 = arith.subf %147, %152 : vector<16x128xf32>
    %154 = arith.mulf %153, %153 : vector<16x128xf32>
    %cst_40 = arith.constant dense<0.000000e+00> : vector<16xf32>
    %155 = vector.multi_reduction <add>, %154, %cst_40 [1] : vector<16x128xf32> to vector<16xf32>
    %156 = vector.shape_cast %155 : vector<16xf32> to vector<16x1xf32>
    %cst_41 = arith.constant 1.280000e+02 : f32
    %157 = vector.broadcast %cst_41 : f32 to vector<16x1xf32>
    %158 = arith.divf %156, %157 : vector<16x1xf32>
    %159 = vector.broadcast %151 : vector<16x1xf32> to vector<16x128xf32>
    %160 = arith.subf %147, %159 : vector<16x128xf32>
    %cst_42 = arith.constant 9.99999974E-6 : f32
    %161 = vector.broadcast %cst_42 : f32 to vector<16x1xf32>
    %162 = arith.addf %158, %161 : vector<16x1xf32>
    %163 = math.rsqrt %162 : vector<16x1xf32>
    %164 = vector.broadcast %163 : vector<16x1xf32> to vector<16x128xf32>
    %165 = arith.mulf %160, %164 : vector<16x128xf32>
    %166 = arith.mulf %165, %30 : vector<16x128xf32>
    %167 = arith.addf %166, %34 : vector<16x128xf32>
    %168 = arith.truncf %167 : vector<16x128xf32> to vector<16x128xbf16>
    %c0_43 = arith.constant 0 : index
    %c0_44 = arith.constant 0 : index
    %169 = vector.load %arg6[%c0_43, %c0_44] : memref<128x256xbf16, #tpu.memory_space<vmem>>, vector<128x256xbf16>
    %cst_45 = arith.constant dense<0.000000e+00> : vector<16x256xf32>
    %170 = tpu.matmul %168, %169, %cst_45 {dimension_numbers = #tpu.dot_dimension_numbers<[1], [0], [0], [1], [0, 0, 1, 1], [], []>} : vector<16x128xbf16>, vector<128x256xbf16>, vector<16x256xf32> -> vector<16x256xf32>
    %171 = arith.addf %170, %38 : vector<16x256xf32>
    %cst_46 = arith.constant 0.000000e+00 : f32
    %172 = vector.broadcast %cst_46 : f32 to vector<16x256xf32>
    %173 = arith.maximumf %171, %172 : vector<16x256xf32>
    %174 = arith.truncf %173 : vector<16x256xf32> to vector<16x256xbf16>
    %c0_47 = arith.constant 0 : index
    %c0_48 = arith.constant 0 : index
    %175 = vector.load %arg7[%c0_47, %c0_48] : memref<256x128xbf16, #tpu.memory_space<vmem>>, vector<256x128xbf16>
    %cst_49 = arith.constant dense<0.000000e+00> : vector<16x128xf32>
    %176 = tpu.matmul %174, %175, %cst_49 {dimension_numbers = #tpu.dot_dimension_numbers<[1], [0], [0], [1], [0, 0, 1, 1], [], []>} : vector<16x256xbf16>, vector<256x128xbf16>, vector<16x128xf32> -> vector<16x128xf32>
    %177 = arith.addf %176, %18 : vector<16x128xf32>
    %178 = arith.addf %147, %177 : vector<16x128xf32>
    %c1_i32 = arith.constant 1 : i32
    %cst_50 = arith.constant dense<0.000000e+00> : vector<16xf32>
    %179 = vector.multi_reduction <add>, %178, %cst_50 [1] : vector<16x128xf32> to vector<16xf32>
    %180 = vector.shape_cast %179 : vector<16xf32> to vector<16x1xf32>
    %cst_51 = arith.constant 1.280000e+02 : f32
    %181 = vector.broadcast %cst_51 : f32 to vector<16x1xf32>
    %182 = arith.divf %180, %181 : vector<16x1xf32>
    %183 = vector.broadcast %182 : vector<16x1xf32> to vector<16x128xf32>
    %184 = arith.subf %178, %183 : vector<16x128xf32>
    %185 = arith.mulf %184, %184 : vector<16x128xf32>
    %cst_52 = arith.constant dense<0.000000e+00> : vector<16xf32>
    %186 = vector.multi_reduction <add>, %185, %cst_52 [1] : vector<16x128xf32> to vector<16xf32>
    %187 = vector.shape_cast %186 : vector<16xf32> to vector<16x1xf32>
    %cst_53 = arith.constant 1.280000e+02 : f32
    %188 = vector.broadcast %cst_53 : f32 to vector<16x1xf32>
    %189 = arith.divf %187, %188 : vector<16x1xf32>
    %190 = vector.broadcast %182 : vector<16x1xf32> to vector<16x128xf32>
    %191 = arith.subf %178, %190 : vector<16x128xf32>
    %cst_54 = arith.constant 9.99999974E-6 : f32
    %192 = vector.broadcast %cst_54 : f32 to vector<16x1xf32>
    %193 = arith.addf %189, %192 : vector<16x1xf32>
    %194 = math.rsqrt %193 : vector<16x1xf32>
    %195 = vector.broadcast %194 : vector<16x1xf32> to vector<16x128xf32>
    %196 = arith.mulf %191, %195 : vector<16x128xf32>
    %197 = arith.mulf %196, %22 : vector<16x128xf32>
    %198 = arith.addf %197, %26 : vector<16x128xf32>
    %199 = arith.truncf %198 : vector<16x128xf32> to vector<16x128xbf16>
    %c0_55 = arith.constant 0 : index
    %c0_56 = arith.constant 0 : index
    %200 = vector.load %arg4[%c0_55, %c0_56] : memref<128x384xbf16, #tpu.memory_space<vmem>>, vector<128x384xbf16>
    %cst_57 = arith.constant dense<0.000000e+00> : vector<16x384xf32>
    %201 = tpu.matmul %199, %200, %cst_57 {dimension_numbers = #tpu.dot_dimension_numbers<[1], [0], [0], [1], [0, 0, 1, 1], [], []>} : vector<16x128xbf16>, vector<128x384xbf16>, vector<16x384xf32> -> vector<16x384xf32>
    %202 = vector.extract_strided_slice %201 {offsets = [0, 0], sizes = [16, 128], strides = [1, 1]} : vector<16x384xf32> to vector<16x128xf32>
    %203 = arith.addf %202, %3 : vector<16x128xf32>
    %204 = vector.extract_strided_slice %201 {offsets = [0, 128], sizes = [16, 128], strides = [1, 1]} : vector<16x384xf32> to vector<16x128xf32>
    %205 = arith.addf %204, %5 : vector<16x128xf32>
    %206 = vector.extract_strided_slice %201 {offsets = [0, 256], sizes = [16, 128], strides = [1, 1]} : vector<16x384xf32> to vector<16x128xf32>
    %207 = arith.addf %206, %10 : vector<16x128xf32>
    %208 = vector.shape_cast %203 : vector<16x128xf32> to vector<2x8x128xf32>
    %209 = arith.truncf %208 : vector<2x8x128xf32> to vector<2x8x128xbf16>
    %210 = vector.shape_cast %205 : vector<16x128xf32> to vector<2x8x128xf32>
    %211 = arith.truncf %210 : vector<2x8x128xf32> to vector<2x8x128xbf16>
    %212 = vector.shape_cast %207 : vector<16x128xf32> to vector<2x8x128xf32>
    %213 = arith.truncf %212 : vector<2x8x128xf32> to vector<2x8x128xbf16>
    %214 = vector.extract_strided_slice %209 {offsets = [0, 0, 0], sizes = [2, 8, 32], strides = [1, 1, 1]} : vector<2x8x128xbf16> to vector<2x8x32xbf16>
    %215 = vector.extract_strided_slice %211 {offsets = [0, 0, 0], sizes = [2, 8, 32], strides = [1, 1, 1]} : vector<2x8x128xbf16> to vector<2x8x32xbf16>
    "tpu.trace_start"() <{level = 10 : i32, message = "bqd,bkd->bqk"}> : () -> ()
    %cst_58 = arith.constant dense<0.000000e+00> : vector<2x8x8xf32>
    %216 = tpu.matmul %214, %215, %cst_58 {dimension_numbers = #tpu.dot_dimension_numbers<[2], [2], [1], [1], [0, 0, 0, 1, 1, 1], [0], [0]>} : vector<2x8x32xbf16>, vector<2x8x32xbf16>, vector<2x8x8xf32> -> vector<2x8x8xf32>
    "tpu.trace_stop"() : () -> ()
    %cst_59 = arith.constant dense<0xFF800000> : vector<2x8xf32>
    %217 = vector.multi_reduction <maximumf>, %216, %cst_59 [2] : vector<2x8x8xf32> to vector<2x8xf32>
    %218 = vector.shape_cast %217 : vector<2x8xf32> to vector<2x8x1xf32>
    %219 = vector.broadcast %218 : vector<2x8x1xf32> to vector<2x8x8xf32>
    %220 = arith.subf %216, %219 : vector<2x8x8xf32>
    %221 = math.exp %220 : vector<2x8x8xf32>
    %cst_60 = arith.constant dense<0.000000e+00> : vector<2x8xf32>
    %222 = vector.multi_reduction <add>, %221, %cst_60 [2] : vector<2x8x8xf32> to vector<2x8xf32>
    %223 = vector.shape_cast %222 : vector<2x8xf32> to vector<2x8x1xf32>
    %224 = tpu.reciprocal %223 {approx = true} : vector<2x8x1xf32> -> vector<2x8x1xf32>
    %225 = vector.broadcast %224 : vector<2x8x1xf32> to vector<2x8x8xf32>
    %226 = arith.mulf %221, %225 : vector<2x8x8xf32>
    %227 = arith.truncf %226 : vector<2x8x8xf32> to vector<2x8x8xbf16>
    %228 = vector.extract_strided_slice %213 {offsets = [0, 0, 0], sizes = [2, 8, 32], strides = [1, 1, 1]} : vector<2x8x128xbf16> to vector<2x8x32xbf16>
    "tpu.trace_start"() <{level = 10 : i32, message = "bqk,bkd->bqd"}> : () -> ()
    %cst_61 = arith.constant dense<0.000000e+00> : vector<2x8x32xf32>
    %229 = tpu.matmul %227, %228, %cst_61 {dimension_numbers = #tpu.dot_dimension_numbers<[2], [1], [1], [2], [0, 0, 0, 1, 1, 2], [0], [0]>} : vector<2x8x8xbf16>, vector<2x8x32xbf16>, vector<2x8x32xf32> -> vector<2x8x32xf32>
    "tpu.trace_stop"() : () -> ()
    %230 = vector.shape_cast %229 : vector<2x8x32xf32> to vector<16x32xf32>
    %231 = vector.extract_strided_slice %209 {offsets = [0, 0, 32], sizes = [2, 8, 32], strides = [1, 1, 1]} : vector<2x8x128xbf16> to vector<2x8x32xbf16>
    %232 = vector.extract_strided_slice %211 {offsets = [0, 0, 32], sizes = [2, 8, 32], strides = [1, 1, 1]} : vector<2x8x128xbf16> to vector<2x8x32xbf16>
    "tpu.trace_start"() <{level = 10 : i32, message = "bqd,bkd->bqk"}> : () -> ()
    %cst_62 = arith.constant dense<0.000000e+00> : vector<2x8x8xf32>
    %233 = tpu.matmul %231, %232, %cst_62 {dimension_numbers = #tpu.dot_dimension_numbers<[2], [2], [1], [1], [0, 0, 0, 1, 1, 1], [0], [0]>} : vector<2x8x32xbf16>, vector<2x8x32xbf16>, vector<2x8x8xf32> -> vector<2x8x8xf32>
    "tpu.trace_stop"() : () -> ()
    %cst_63 = arith.constant dense<0xFF800000> : vector<2x8xf32>
    %234 = vector.multi_reduction <maximumf>, %233, %cst_63 [2] : vector<2x8x8xf32> to vector<2x8xf32>
    %235 = vector.shape_cast %234 : vector<2x8xf32> to vector<2x8x1xf32>
    %236 = vector.broadcast %235 : vector<2x8x1xf32> to vector<2x8x8xf32>
    %237 = arith.subf %233, %236 : vector<2x8x8xf32>
    %238 = math.exp %237 : vector<2x8x8xf32>
    %cst_64 = arith.constant dense<0.000000e+00> : vector<2x8xf32>
    %239 = vector.multi_reduction <add>, %238, %cst_64 [2] : vector<2x8x8xf32> to vector<2x8xf32>
    %240 = vector.shape_cast %239 : vector<2x8xf32> to vector<2x8x1xf32>
    %241 = tpu.reciprocal %240 {approx = true} : vector<2x8x1xf32> -> vector<2x8x1xf32>
    %242 = vector.broadcast %241 : vector<2x8x1xf32> to vector<2x8x8xf32>
    %243 = arith.mulf %238, %242 : vector<2x8x8xf32>
    %244 = arith.truncf %243 : vector<2x8x8xf32> to vector<2x8x8xbf16>
    %245 = vector.extract_strided_slice %213 {offsets = [0, 0, 32], sizes = [2, 8, 32], strides = [1, 1, 1]} : vector<2x8x128xbf16> to vector<2x8x32xbf16>
    "tpu.trace_start"() <{level = 10 : i32, message = "bqk,bkd->bqd"}> : () -> ()
    %cst_65 = arith.constant dense<0.000000e+00> : vector<2x8x32xf32>
    %246 = tpu.matmul %244, %245, %cst_65 {dimension_numbers = #tpu.dot_dimension_numbers<[2], [1], [1], [2], [0, 0, 0, 1, 1, 2], [0], [0]>} : vector<2x8x8xbf16>, vector<2x8x32xbf16>, vector<2x8x32xf32> -> vector<2x8x32xf32>
    "tpu.trace_stop"() : () -> ()
    %247 = vector.shape_cast %246 : vector<2x8x32xf32> to vector<16x32xf32>
    %248 = vector.extract_strided_slice %209 {offsets = [0, 0, 64], sizes = [2, 8, 32], strides = [1, 1, 1]} : vector<2x8x128xbf16> to vector<2x8x32xbf16>
    %249 = vector.extract_strided_slice %211 {offsets = [0, 0, 64], sizes = [2, 8, 32], strides = [1, 1, 1]} : vector<2x8x128xbf16> to vector<2x8x32xbf16>
    "tpu.trace_start"() <{level = 10 : i32, message = "bqd,bkd->bqk"}> : () -> ()
    %cst_66 = arith.constant dense<0.000000e+00> : vector<2x8x8xf32>
    %250 = tpu.matmul %248, %249, %cst_66 {dimension_numbers = #tpu.dot_dimension_numbers<[2], [2], [1], [1], [0, 0, 0, 1, 1, 1], [0], [0]>} : vector<2x8x32xbf16>, vector<2x8x32xbf16>, vector<2x8x8xf32> -> vector<2x8x8xf32>
    "tpu.trace_stop"() : () -> ()
    %cst_67 = arith.constant dense<0xFF800000> : vector<2x8xf32>
    %251 = vector.multi_reduction <maximumf>, %250, %cst_67 [2] : vector<2x8x8xf32> to vector<2x8xf32>
    %252 = vector.shape_cast %251 : vector<2x8xf32> to vector<2x8x1xf32>
    %253 = vector.broadcast %252 : vector<2x8x1xf32> to vector<2x8x8xf32>
    %254 = arith.subf %250, %253 : vector<2x8x8xf32>
    %255 = math.exp %254 : vector<2x8x8xf32>
    %cst_68 = arith.constant dense<0.000000e+00> : vector<2x8xf32>
    %256 = vector.multi_reduction <add>, %255, %cst_68 [2] : vector<2x8x8xf32> to vector<2x8xf32>
    %257 = vector.shape_cast %256 : vector<2x8xf32> to vector<2x8x1xf32>
    %258 = tpu.reciprocal %257 {approx = true} : vector<2x8x1xf32> -> vector<2x8x1xf32>
    %259 = vector.broadcast %258 : vector<2x8x1xf32> to vector<2x8x8xf32>
    %260 = arith.mulf %255, %259 : vector<2x8x8xf32>
    %261 = arith.truncf %260 : vector<2x8x8xf32> to vector<2x8x8xbf16>
    %262 = vector.extract_strided_slice %213 {offsets = [0, 0, 64], sizes = [2, 8, 32], strides = [1, 1, 1]} : vector<2x8x128xbf16> to vector<2x8x32xbf16>
    "tpu.trace_start"() <{level = 10 : i32, message = "bqk,bkd->bqd"}> : () -> ()
    %cst_69 = arith.constant dense<0.000000e+00> : vector<2x8x32xf32>
    %263 = tpu.matmul %261, %262, %cst_69 {dimension_numbers = #tpu.dot_dimension_numbers<[2], [1], [1], [2], [0, 0, 0, 1, 1, 2], [0], [0]>} : vector<2x8x8xbf16>, vector<2x8x32xbf16>, vector<2x8x32xf32> -> vector<2x8x32xf32>
    "tpu.trace_stop"() : () -> ()
    %264 = vector.shape_cast %263 : vector<2x8x32xf32> to vector<16x32xf32>
    %265 = vector.extract_strided_slice %209 {offsets = [0, 0, 96], sizes = [2, 8, 32], strides = [1, 1, 1]} : vector<2x8x128xbf16> to vector<2x8x32xbf16>
    %266 = vector.extract_strided_slice %211 {offsets = [0, 0, 96], sizes = [2, 8, 32], strides = [1, 1, 1]} : vector<2x8x128xbf16> to vector<2x8x32xbf16>
    "tpu.trace_start"() <{level = 10 : i32, message = "bqd,bkd->bqk"}> : () -> ()
    %cst_70 = arith.constant dense<0.000000e+00> : vector<2x8x8xf32>
    %267 = tpu.matmul %265, %266, %cst_70 {dimension_numbers = #tpu.dot_dimension_numbers<[2], [2], [1], [1], [0, 0, 0, 1, 1, 1], [0], [0]>} : vector<2x8x32xbf16>, vector<2x8x32xbf16>, vector<2x8x8xf32> -> vector<2x8x8xf32>
    "tpu.trace_stop"() : () -> ()
    %cst_71 = arith.constant dense<0xFF800000> : vector<2x8xf32>
    %268 = vector.multi_reduction <maximumf>, %267, %cst_71 [2] : vector<2x8x8xf32> to vector<2x8xf32>
    %269 = vector.shape_cast %268 : vector<2x8xf32> to vector<2x8x1xf32>
    %270 = vector.broadcast %269 : vector<2x8x1xf32> to vector<2x8x8xf32>
    %271 = arith.subf %267, %270 : vector<2x8x8xf32>
    %272 = math.exp %271 : vector<2x8x8xf32>
    %cst_72 = arith.constant dense<0.000000e+00> : vector<2x8xf32>
    %273 = vector.multi_reduction <add>, %272, %cst_72 [2] : vector<2x8x8xf32> to vector<2x8xf32>
    %274 = vector.shape_cast %273 : vector<2x8xf32> to vector<2x8x1xf32>
    %275 = tpu.reciprocal %274 {approx = true} : vector<2x8x1xf32> -> vector<2x8x1xf32>
    %276 = vector.broadcast %275 : vector<2x8x1xf32> to vector<2x8x8xf32>
    %277 = arith.mulf %272, %276 : vector<2x8x8xf32>
    %278 = arith.truncf %277 : vector<2x8x8xf32> to vector<2x8x8xbf16>
    %279 = vector.extract_strided_slice %213 {offsets = [0, 0, 96], sizes = [2, 8, 32], strides = [1, 1, 1]} : vector<2x8x128xbf16> to vector<2x8x32xbf16>
    "tpu.trace_start"() <{level = 10 : i32, message = "bqk,bkd->bqd"}> : () -> ()
    %cst_73 = arith.constant dense<0.000000e+00> : vector<2x8x32xf32>
    %280 = tpu.matmul %278, %279, %cst_73 {dimension_numbers = #tpu.dot_dimension_numbers<[2], [1], [1], [2], [0, 0, 0, 1, 1, 2], [0], [0]>} : vector<2x8x8xbf16>, vector<2x8x32xbf16>, vector<2x8x32xf32> -> vector<2x8x32xf32>
    "tpu.trace_stop"() : () -> ()
    %281 = vector.shape_cast %280 : vector<2x8x32xf32> to vector<16x32xf32>
    %282 = tpu.concatenate %230, %247, %264, %281 in 1 : vector<16x32xf32>, vector<16x32xf32>, vector<16x32xf32>, vector<16x32xf32> -> vector<16x128xf32>
    %283 = arith.truncf %282 : vector<16x128xf32> to vector<16x128xbf16>
    %c0_74 = arith.constant 0 : index
    %c0_75 = arith.constant 0 : index
    %284 = vector.load %arg5[%c0_74, %c0_75] : memref<128x128xbf16, #tpu.memory_space<vmem>>, vector<128x128xbf16>
    %cst_76 = arith.constant dense<0.000000e+00> : vector<16x128xf32>
    %285 = tpu.matmul %283, %284, %cst_76 {dimension_numbers = #tpu.dot_dimension_numbers<[1], [0], [0], [1], [0, 0, 1, 1], [], []>} : vector<16x128xbf16>, vector<128x128xbf16>, vector<16x128xf32> -> vector<16x128xf32>
    %286 = arith.addf %285, %14 : vector<16x128xf32>
    %287 = arith.addf %178, %286 : vector<16x128xf32>
    %cst_77 = arith.constant dense<0.000000e+00> : vector<16xf32>
    %288 = vector.multi_reduction <add>, %287, %cst_77 [1] : vector<16x128xf32> to vector<16xf32>
    %289 = vector.shape_cast %288 : vector<16xf32> to vector<16x1xf32>
    %cst_78 = arith.constant 1.280000e+02 : f32
    %290 = vector.broadcast %cst_78 : f32 to vector<16x1xf32>
    %291 = arith.divf %289, %290 : vector<16x1xf32>
    %292 = vector.broadcast %291 : vector<16x1xf32> to vector<16x128xf32>
    %293 = arith.subf %287, %292 : vector<16x128xf32>
    %294 = arith.mulf %293, %293 : vector<16x128xf32>
    %cst_79 = arith.constant dense<0.000000e+00> : vector<16xf32>
    %295 = vector.multi_reduction <add>, %294, %cst_79 [1] : vector<16x128xf32> to vector<16xf32>
    %296 = vector.shape_cast %295 : vector<16xf32> to vector<16x1xf32>
    %cst_80 = arith.constant 1.280000e+02 : f32
    %297 = vector.broadcast %cst_80 : f32 to vector<16x1xf32>
    %298 = arith.divf %296, %297 : vector<16x1xf32>
    %299 = vector.broadcast %291 : vector<16x1xf32> to vector<16x128xf32>
    %300 = arith.subf %287, %299 : vector<16x128xf32>
    %cst_81 = arith.constant 9.99999974E-6 : f32
    %301 = vector.broadcast %cst_81 : f32 to vector<16x1xf32>
    %302 = arith.addf %298, %301 : vector<16x1xf32>
    %303 = math.rsqrt %302 : vector<16x1xf32>
    %304 = vector.broadcast %303 : vector<16x1xf32> to vector<16x128xf32>
    %305 = arith.mulf %300, %304 : vector<16x128xf32>
    %306 = arith.mulf %305, %30 : vector<16x128xf32>
    %307 = arith.addf %306, %34 : vector<16x128xf32>
    %308 = arith.truncf %307 : vector<16x128xf32> to vector<16x128xbf16>
    %c0_82 = arith.constant 0 : index
    %c0_83 = arith.constant 0 : index
    %309 = vector.load %arg6[%c0_82, %c0_83] : memref<128x256xbf16, #tpu.memory_space<vmem>>, vector<128x256xbf16>
    %cst_84 = arith.constant dense<0.000000e+00> : vector<16x256xf32>
    %310 = tpu.matmul %308, %309, %cst_84 {dimension_numbers = #tpu.dot_dimension_numbers<[1], [0], [0], [1], [0, 0, 1, 1], [], []>} : vector<16x128xbf16>, vector<128x256xbf16>, vector<16x256xf32> -> vector<16x256xf32>
    %311 = arith.addf %310, %38 : vector<16x256xf32>
    %cst_85 = arith.constant 0.000000e+00 : f32
    %312 = vector.broadcast %cst_85 : f32 to vector<16x256xf32>
    %313 = arith.maximumf %311, %312 : vector<16x256xf32>
    %314 = arith.truncf %313 : vector<16x256xf32> to vector<16x256xbf16>
    %c0_86 = arith.constant 0 : index
    %c0_87 = arith.constant 0 : index
    %315 = vector.load %arg7[%c0_86, %c0_87] : memref<256x128xbf16, #tpu.memory_space<vmem>>, vector<256x128xbf16>
    %cst_88 = arith.constant dense<0.000000e+00> : vector<16x128xf32>
    %316 = tpu.matmul %314, %315, %cst_88 {dimension_numbers = #tpu.dot_dimension_numbers<[1], [0], [0], [1], [0, 0, 1, 1], [], []>} : vector<16x256xbf16>, vector<256x128xbf16>, vector<16x128xf32> -> vector<16x128xf32>
    %317 = arith.addf %316, %18 : vector<16x128xf32>
    %318 = arith.addf %287, %317 : vector<16x128xf32>
    %319 = vector.shape_cast %318 : vector<16x128xf32> to vector<2x8x128xf32>
    %c0_89 = arith.constant 0 : index
    %c0_90 = arith.constant 0 : index
    %c0_91 = arith.constant 0 : index
    %320 = vector.load %arg10[%c0_89, %c0_90, %c0_91] : memref<2x8x128xf32, #tpu.memory_space<vmem>>, vector<2x8x128xf32>
    tpu.vector_store %arg10[%c0_89, %c0_90, %c0_91], %319 {strides = array<i32>} : memref<2x8x128xf32, #tpu.memory_space<vmem>>, vector<2x8x128xf32>,
    return
  }
  func.func @transform_0(%arg0: i32) -> (i32, i32, i32) {
    %c0_i32 = arith.constant 0 : i32
    %c0_i32_0 = arith.constant 0 : i32
    %c0_i32_1 = arith.constant 0 : i32
    return %arg0, %c0_i32, %c0_i32_0 : i32, i32, i32
  }
  func.func @transform_1(%arg0: i32) -> (i32, i32, i32) {
    %c0_i32 = arith.constant 0 : i32
    %c0_i32_0 = arith.constant 0 : i32
    %c0_i32_1 = arith.constant 0 : i32
    return %arg0, %c0_i32, %c0_i32_0 : i32, i32, i32
  }
  func.func @transform_2(%arg0: i32) -> (i32, i32, i32) {
    %c0_i32 = arith.constant 0 : i32
    %c0_i32_0 = arith.constant 0 : i32
    %c0_i32_1 = arith.constant 0 : i32
    return %arg0, %c0_i32, %c0_i32_0 : i32, i32, i32
  }
  func.func @transform_3(%arg0: i32) -> (i32, i32) {
    %c0_i32 = arith.constant 0 : i32
    %c0_i32_0 = arith.constant 0 : i32
    %c0_i32_1 = arith.constant 0 : i32
    return %c0_i32, %c0_i32_0 : i32, i32
  }
  func.func @transform_4(%arg0: i32) -> (i32, i32) {
    %c0_i32 = arith.constant 0 : i32
    %c0_i32_0 = arith.constant 0 : i32
    %c0_i32_1 = arith.constant 0 : i32
    return %c0_i32, %c0_i32_0 : i32, i32
  }
  func.func @transform_5(%arg0: i32) -> (i32, i32) {
    %c0_i32 = arith.constant 0 : i32
    %c0_i32_0 = arith.constant 0 : i32
    %c0_i32_1 = arith.constant 0 : i32
    return %c0_i32, %c0_i32_0 : i32, i32
  }
  func.func @transform_6(%arg0: i32) -> (i32, i32) {
    %c0_i32 = arith.constant 0 : i32
    %c0_i32_0 = arith.constant 0 : i32
    %c0_i32_1 = arith.constant 0 : i32
    return %c0_i32, %c0_i32_0 : i32, i32
  }
  func.func @transform_7(%arg0: i32) -> (i32, i32) {
    %c0_i32 = arith.constant 0 : i32
    %c0_i32_0 = arith.constant 0 : i32
    %c0_i32_1 = arith.constant 0 : i32
    return %c0_i32, %c0_i32_0 : i32, i32
  }
  func.func @transform_8(%arg0: i32) -> (i32, i32) {
    %c0_i32 = arith.constant 0 : i32
    %c0_i32_0 = arith.constant 0 : i32
    %c0_i32_1 = arith.constant 0 : i32
    return %c0_i32, %c0_i32_0 : i32, i32
  }
  func.func @transform_9(%arg0: i32) -> (i32, i32, i32) {
    %c0_i32 = arith.constant 0 : i32
    %c0_i32_0 = arith.constant 0 : i32
    %c0_i32_1 = arith.constant 0 : i32
    return %arg0, %c0_i32, %c0_i32_0 : i32, i32, i32
  }
}

</mosaic_0001>

<llo_original>
// kernel: tpu_custom_call.1
$region0: #{tpu_custom_call.1}
  #allocation0 [shape = 'u32[]', space=smem, size = 0x4, offset = 0x4, fixed_abs, tag = 'smem constant byte address 0x4 - core index']
  #allocation1 [shape = 'u32[144,128]{1,0:T(1,128)}', space=vmem, size = 0x12000, scoped, tag = 'internal scratch']
  %s0 = inlined_call_operand.hbm [shape: f32[2,8,128], index: 0, kind: input, shape index: {}]
  %s1 = inlined_call_operand.hbm [shape: f32[2,8,128], index: 1, kind: input, shape index: {}]
  %s2 = inlined_call_operand.hbm [shape: f32[2,8,128], index: 2, kind: input, shape index: {}]
  %s3 = inlined_call_operand.hbm [shape: bf16[128,384], index: 3, kind: input, shape index: {}]
  %s4 = inlined_call_operand.hbm [shape: bf16[128,128], index: 4, kind: input, shape index: {}]
  %s5 = inlined_call_operand.hbm [shape: bf16[128,256], index: 5, kind: input, shape index: {}]
  %s6 = inlined_call_operand.hbm [shape: bf16[256,128], index: 6, kind: input, shape index: {}]
  %s7 = inlined_call_operand.vmem [shape: f32[7,128], index: 7, kind: input, shape index: {}]
  %s8 = inlined_call_operand.vmem [shape: f32[1,256], index: 8, kind: input, shape index: {}]
  %s9 = inlined_call_operand.hbm [shape: f32[2,8,128], index: 9, kind: output, shape index: {}]
  %s10 = sld [smem:[#allocation0]]
  $region74: #{tpu_custom_call.1} parent=0
    _
  %s12 = ssub.s32 1, %s10
  %s13 = scalar_select 0, %s12, %s10
  $region1: #{tpu_custom_call.1} parent=0
    #allocation2 [shape = 'u8[8192]{0}', space=vmem, size = 0x2000, scoped, tag = 'input window, operand 0, single buffered']
    #allocation3 [shape = 's32[1]{0}', space=sflag, size = 0x4, scoped, tag = 'scoped memory for tpu_custom_call.1']
    #allocation4 [shape = 's32[1]{0}', space=sflag, size = 0x4, scoped, tag = 'scoped memory for tpu_custom_call.1']
    #allocation5 [shape = 'u8[8192]{0}', space=vmem, size = 0x2000, scoped, tag = 'input window, operand 1, single buffered']
    #allocation6 [shape = 's32[1]{0}', space=sflag, size = 0x4, scoped, tag = 'scoped memory for tpu_custom_call.1']
    #allocation7 [shape = 'u8[8192]{0}', space=vmem, size = 0x2000, scoped, tag = 'input window, operand 2, single buffered']
    #allocation8 [shape = 'u8[98304]{0}', space=vmem, size = 0x18000, scoped, tag = 'input window, operand 3, single buffered']
    #allocation9 [shape = 's32[1]{0}', space=sflag, size = 0x4, scoped, tag = 'scoped memory for tpu_custom_call.1']
    #allocation10 [shape = 'u8[32768]{0}', space=vmem, size = 0x8000, scoped, tag = 'input window, operand 4, single buffered']
    #allocation11 [shape = 'u8[65536]{0}', space=vmem, size = 0x10000, scoped, tag = 'input window, operand 5, single buffered']
    #allocation12 [shape = 's32[1]{0}', space=sflag, size = 0x4, scoped, tag = 'scoped memory for tpu_custom_call.1']
    #allocation13 [shape = 'u8[65536]{0}', space=vmem, size = 0x10000, scoped, tag = 'input window, operand 6, single buffered']
    #allocation14 [shape = 'u8[8192]{0}', space=vmem, size = 0x2000, scoped, tag = 'output window, operand 0, single buffered']
    %14 = vsyncpa [#allocation3], 0
    %15 = vsyncpa [#allocation6], 0
    %16 = vsyncpa [#allocation9], 0
    %17 = vsyncpa [#allocation12], 0
    %18 = vsyncpa [#allocation4], 0
    // Predicated region
    $region2: #{tpu_custom_call.1} parent=1 // pred_check
      _
    $region3: #{tpu_custom_call.1} parent=1 // pred_check_branch
      %20 = sbr.rel (0) target = $region5
    $region4: #{tpu_custom_call.1} parent=1 // pred_region
      %s22 = ssub.s32 256, 256
      %23 = vsyncadd [#allocation3], %s22
      %s24 = sshll.u32 [#allocation2], 4
      %s25 = int_to_ptr.vmem [resolvable:$true] %s24
      %30 = dma.hbm_to_vmem [thread:$0]  %s0, 256, %s25, [#allocation3], 128, 128, 8
    $region5: #{tpu_custom_call.1} parent=1 // pred_fallthru
      _
    // Predicated region
    $region6: #{tpu_custom_call.1} parent=1 // pred_check
      _
    $region7: #{tpu_custom_call.1} parent=1 // pred_check_branch
      %32 = sbr.rel (0) target = $region9
    $region8: #{tpu_custom_call.1} parent=1 // pred_region
      %s34 = ssub.s32 256, 256
      %35 = vsyncadd [#allocation6], %s34
      %s36 = sshll.u32 [#allocation5], 4
      %s37 = int_to_ptr.vmem [resolvable:$true] %s36
      %42 = dma.hbm_to_vmem [thread:$0]  %s1, 256, %s37, [#allocation6], 128, 128, 8
    $region9: #{tpu_custom_call.1} parent=1 // pred_fallthru
      _
    // Predicated region
    $region10: #{tpu_custom_call.1} parent=1 // pred_check
      _
    $region11: #{tpu_custom_call.1} parent=1 // pred_check_branch
      %44 = sbr.rel (0) target = $region13
    $region12: #{tpu_custom_call.1} parent=1 // pred_region
      %s46 = ssub.s32 256, 256
      %47 = vsyncadd [#allocation6], %s46
      %s48 = sshll.u32 [#allocation7], 4
      %s49 = int_to_ptr.vmem [resolvable:$true] %s48
      %54 = dma.hbm_to_vmem [thread:$0]  %s2, 256, %s49, [#allocation6], 128, 128, 8
    $region13: #{tpu_custom_call.1} parent=1 // pred_fallthru
      _
    // Predicated region
    $region14: #{tpu_custom_call.1} parent=1 // pred_check
      _
    $region15: #{tpu_custom_call.1} parent=1 // pred_check_branch
      %56 = sbr.rel (0) target = $region17
    $region16: #{tpu_custom_call.1} parent=1 // pred_region
      %s58 = ssub.s32 3072, 3072
      %59 = vsyncadd [#allocation9], %s58
      %s60 = sshll.u32 [#allocation8], 4
      %s61 = int_to_ptr.vmem [resolvable:$true] %s60
      %66 = dma.hbm_to_vmem [thread:$0]  %s3, 3072, %s61, [#allocation9], 192, 192, 12
    $region17: #{tpu_custom_call.1} parent=1 // pred_fallthru
      _
    // Predicated region
    $region18: #{tpu_custom_call.1} parent=1 // pred_check
      _
    $region19: #{tpu_custom_call.1} parent=1 // pred_check_branch
      %68 = sbr.rel (0) target = $region21
    $region20: #{tpu_custom_call.1} parent=1 // pred_region
      %s70 = ssub.s32 1024, 1024
      %71 = vsyncadd [#allocation9], %s70
      %s72 = sshll.u32 [#allocation10], 4
      %s73 = int_to_ptr.vmem [resolvable:$true] %s72
      %78 = dma.hbm_to_vmem [thread:$0]  %s4, 1024, %s73, [#allocation9], 64, 64, 4
    $region21: #{tpu_custom_call.1} parent=1 // pred_fallthru
      _
    // Predicated region
    $region22: #{tpu_custom_call.1} parent=1 // pred_check
      _
    $region23: #{tpu_custom_call.1} parent=1 // pred_check_branch
      %80 = sbr.rel (0) target = $region25
    $region24: #{tpu_custom_call.1} parent=1 // pred_region
      %s82 = ssub.s32 2048, 2048
      %83 = vsyncadd [#allocation12], %s82
      %s84 = sshll.u32 [#allocation11], 4
      %s85 = int_to_ptr.vmem [resolvable:$true] %s84
      %90 = dma.hbm_to_vmem [thread:$0]  %s5, 2048, %s85, [#allocation12], 128, 128, 8
    $region25: #{tpu_custom_call.1} parent=1 // pred_fallthru
      _
    // Predicated region
    $region26: #{tpu_custom_call.1} parent=1 // pred_check
      _
    $region27: #{tpu_custom_call.1} parent=1 // pred_check_branch
      %92 = sbr.rel (0) target = $region29
    $region28: #{tpu_custom_call.1} parent=1 // pred_region
      %s94 = ssub.s32 2048, 2048
      %95 = vsyncadd [#allocation12], %s94
      %s96 = sshll.u32 [#allocation13], 4
      %s97 = int_to_ptr.vmem [resolvable:$true] %s96
      %102 = dma.hbm_to_vmem [thread:$0]  %s6, 2048, %s97, [#allocation12], 64, 64, 4
    $region29: #{tpu_custom_call.1} parent=1 // pred_fallthru
      _
    // Predicated region
    $region30: #{tpu_custom_call.1} parent=1 // pred_check
      _
    $region31: #{tpu_custom_call.1} parent=1 // pred_check_branch
      %104 = sbr.rel (0) target = $region33
    $region32: #{tpu_custom_call.1} parent=1 // pred_region
      _
    $region33: #{tpu_custom_call.1} parent=1 // pred_fallthru
      _
    // Predicated region
    $region34: #{tpu_custom_call.1} parent=1 // pred_check
      _
    $region35: #{tpu_custom_call.1} parent=1 // pred_check_branch
      %106 = sbr.rel (0) target = $region37
    $region36: #{tpu_custom_call.1} parent=1 // pred_region
      _
    $region37: #{tpu_custom_call.1} parent=1 // pred_fallthru
      _
    // Predicated region
    $region38: #{tpu_custom_call.1} parent=1 // pred_check
      _
    $region39: #{tpu_custom_call.1} parent=1 // pred_check_branch
      %108 = sbr.rel (0) target = $region41
    $region40: #{tpu_custom_call.1} parent=1 // pred_region
      %109 = dma.done [#allocation3], 256
    $region41: #{tpu_custom_call.1} parent=1 // pred_fallthru
      _
    // Predicated region
    $region42: #{tpu_custom_call.1} parent=1 // pred_check
      _
    $region43: #{tpu_custom_call.1} parent=1 // pred_check_branch
      %111 = sbr.rel (0) target = $region45
    $region44: #{tpu_custom_call.1} parent=1 // pred_region
      %112 = dma.done [#allocation6], 256
    $region45: #{tpu_custom_call.1} parent=1 // pred_fallthru
      _
    // Predicated region
    $region46: #{tpu_custom_call.1} parent=1 // pred_check
      _
    $region47: #{tpu_custom_call.1} parent=1 // pred_check_branch
      %114 = sbr.rel (0) target = $region49
    $region48: #{tpu_custom_call.1} parent=1 // pred_region
      %115 = dma.done [#allocation6], 256
    $region49: #{tpu_custom_call.1} parent=1 // pred_fallthru
      _
    // Predicated region
    $region50: #{tpu_custom_call.1} parent=1 // pred_check
      _
    $region51: #{tpu_custom_call.1} parent=1 // pred_check_branch
      %117 = sbr.rel (0) target = $region53
    $region52: #{tpu_custom_call.1} parent=1 // pred_region
      %118 = dma.done [#allocation9], 3072
    $region53: #{tpu_custom_call.1} parent=1 // pred_fallthru
      _
    // Predicated region
    $region54: #{tpu_custom_call.1} parent=1 // pred_check
      _
    $region55: #{tpu_custom_call.1} parent=1 // pred_check_branch
      %120 = sbr.rel (0) target = $region57
    $region56: #{tpu_custom_call.1} parent=1 // pred_region
      %121 = dma.done [#allocation9], 1024
    $region57: #{tpu_custom_call.1} parent=1 // pred_fallthru
      _
    // Predicated region
    $region58: #{tpu_custom_call.1} parent=1 // pred_check
      _
    $region59: #{tpu_custom_call.1} parent=1 // pred_check_branch
      %123 = sbr.rel (0) target = $region61
    $region60: #{tpu_custom_call.1} parent=1 // pred_region
      %124 = dma.done [#allocation12], 2048
    $region61: #{tpu_custom_call.1} parent=1 // pred_fallthru
      _
    // Predicated region
    $region62: #{tpu_custom_call.1} parent=1 // pred_check
      _
    $region63: #{tpu_custom_call.1} parent=1 // pred_check_branch
      %126 = sbr.rel (0) target = $region65
    $region64: #{tpu_custom_call.1} parent=1 // pred_region
      %127 = dma.done [#allocation12], 2048
    $region65: #{tpu_custom_call.1} parent=1 // pred_fallthru
      _
    %v129 = vld [vmem:[#allocation2] sm:$0xff]
    %v130 = vld [vmem:[#allocation2 + $0x8] sm:$0xff]
    %v131 = vld [vmem:[#allocation5] sm:$0xff]
    %v132 = vld [vmem:[#allocation5 + $0x8] sm:$0xff]
    %v133 = vld [vmem:[#allocation7] sm:$0xff]
    %v134 = vld [vmem:[#allocation7 + $0x8] sm:$0xff]
    %v135 = vld [vmem:[%s7] sm:$0x7f]
    %v136 = vlaneseq
    %v137 = vshrl.u32 %v136, 7
    %v138 = vsub.s32 0, %v137
    %v139 = vrot.slane %v135, %v138
    %v140 = vlaneseq
    %v141 = vshrl.u32 %v140, 7
    %v142 = vsub.s32 1, %v141
    %v143 = vrot.slane %v135, %v142
    %v144 = vlaneseq
    %v145 = vshrl.u32 %v144, 7
    %v146 = vsub.s32 2, %v145
    %v147 = vrot.slane %v135, %v146
    %v148 = vlaneseq
    %v149 = vshrl.u32 %v148, 7
    %v150 = vsub.s32 3, %v149
    %v151 = vrot.slane %v135, %v150
    %v152 = vlaneseq
    %v153 = vshrl.u32 %v152, 7
    %v154 = vsub.s32 4, %v153
    %v155 = vrot.slane %v135, %v154
    %v156 = vlaneseq
    %v157 = vshrl.u32 %v156, 7
    %v158 = vsub.s32 5, %v157
    %v159 = vrot.slane %v135, %v158
    %v160 = vlaneseq
    %v161 = vshrl.u32 %v160, 7
    %v162 = vsub.s32 6, %v161
    %v163 = vrot.slane %v135, %v162
    %v164 = vld [vmem:[%s8] sm:$0x3]
    %v166 = vlaneseq
    %v167 = vshrl.u32 %v166, 7
    %v168 = vsub.s32 0, %v167
    %v169 = vrot.slane %v164, %v168
    %v170 = vlaneseq
    %v171 = vshrl.u32 %v170, 7
    %v172 = vsub.s32 1, %v171
    %v173 = vrot.slane %v164, %v172
    %176 = vadd.xlane.f32.xlu0 %v129
    %v177 = vpop.xlane.xlu0 %176
    %178 = vadd.xlane.f32.xlu0 %v130
    %v179 = vpop.xlane.xlu0 %178
    %v180 = vrcp.pop 128.0
    %v181 = vmul.f32 %v177, %v180
    %v182 = vmul.f32 %v179, %v180
    %v183 = vsub.f32 %v129, %v181
    %v184 = vsub.f32 %v130, %v182
    %v185 = vmul.f32 %v183, %v183
    %v186 = vmul.f32 %v184, %v184
    %187 = vadd.xlane.f32.xlu0 %v185
    %v188 = vpop.xlane.xlu0 %187
    %189 = vadd.xlane.f32.xlu0 %v186
    %v190 = vpop.xlane.xlu0 %189
    %v191 = vmul.f32 %v188, %v180
    %v192 = vmul.f32 %v190, %v180
    %v193 = vadd.f32 %v191, 1e-05
    %v194 = vadd.f32 %v192, 1e-05
    %v195 = vrsqrt.pop %v193
    %v196 = vrsqrt.pop %v194
    %v197 = vmul.f32 %v183, %v195
    %v198 = vmul.f32 %v184, %v196
    %v199 = vmul.f32 %v197, %v151
    %v200 = vmul.f32 %v198, %v151
    %v201 = vadd.f32 %v199, %v155
    %v202 = vadd.f32 %v200, %v155
    %v203 = vpack.c.bf16 %v202, %v201
    %v204 = vld [vmem:[#allocation8] sm:$0xff]
    %v205 = vld [vmem:[#allocation8 + $0x8] sm:$0xf]
    %v206 = vld [vmem:[#allocation8 + $0xc] sm:$0xff]
    %v207 = vld [vmem:[#allocation8 + $0x14] sm:$0xf]
    %v208 = vld [vmem:[#allocation8 + $0x18] sm:$0xff]
    %v209 = vld [vmem:[#allocation8 + $0x20] sm:$0xf]
    %v210 = vld [vmem:[#allocation8 + $0x24] sm:$0xff]
    %v211 = vld [vmem:[#allocation8 + $0x2c] sm:$0xf]
    %v212 = vld [vmem:[#allocation8 + $0x30] sm:$0xff]
    %v213 = vld [vmem:[#allocation8 + $0x38] sm:$0xf]
    %v214 = vld [vmem:[#allocation8 + $0x3c] sm:$0xff]
    %v215 = vld [vmem:[#allocation8 + $0x44] sm:$0xf]
    %v216 = vld [vmem:[#allocation8 + $0x48] sm:$0xff]
    %v217 = vld [vmem:[#allocation8 + $0x50] sm:$0xf]
    %v218 = vld [vmem:[#allocation8 + $0x54] sm:$0xff]
    %v219 = vld [vmem:[#allocation8 + $0x5c] sm:$0xf]
    %v220 = vld [vmem:[#allocation8 + $0x60] sm:$0xff]
    %v221 = vld [vmem:[#allocation8 + $0x68] sm:$0xf]
    %v222 = vld [vmem:[#allocation8 + $0x6c] sm:$0xff]
    %v223 = vld [vmem:[#allocation8 + $0x74] sm:$0xf]
    %v224 = vld [vmem:[#allocation8 + $0x78] sm:$0xff]
    %v225 = vld [vmem:[#allocation8 + $0x80] sm:$0xf]
    %v226 = vld [vmem:[#allocation8 + $0x84] sm:$0xff]
    %v227 = vld [vmem:[#allocation8 + $0x8c] sm:$0xf]
    %v228 = vld [vmem:[#allocation8 + $0x90] sm:$0xff]
    %v229 = vld [vmem:[#allocation8 + $0x98] sm:$0xf]
    %v230 = vld [vmem:[#allocation8 + $0x9c] sm:$0xff]
    %v231 = vld [vmem:[#allocation8 + $0xa4] sm:$0xf]
    %v232 = vld [vmem:[#allocation8 + $0xa8] sm:$0xff]
    %v233 = vld [vmem:[#allocation8 + $0xb0] sm:$0xf]
    %v234 = vld [vmem:[#allocation8 + $0xb4] sm:$0xff]
    %v235 = vld [vmem:[#allocation8 + $0xbc] sm:$0xf]
    %v268 = vunpack.c.l.b16 %v204
    %v269 = vunpack.c.h.b16 %v204
    %v270 = vunpack.c.l.b16 %v205
    %v271 = vunpack.c.l.b16 %v206
    %v272 = vunpack.c.h.b16 %v206
    %v273 = vunpack.c.l.b16 %v207
    %v274 = vunpack.c.l.b16 %v208
    %v275 = vunpack.c.h.b16 %v208
    %v276 = vunpack.c.l.b16 %v209
    %v277 = vunpack.c.l.b16 %v210
    %v278 = vunpack.c.h.b16 %v210
    %v279 = vunpack.c.l.b16 %v211
    %v280 = vunpack.c.l.b16 %v212
    %v281 = vunpack.c.h.b16 %v212
    %v282 = vunpack.c.l.b16 %v213
    %v283 = vunpack.c.l.b16 %v214
    %v284 = vunpack.c.h.b16 %v214
    %v285 = vunpack.c.l.b16 %v215
    %v286 = vunpack.c.l.b16 %v216
    %v287 = vunpack.c.h.b16 %v216
    %v288 = vunpack.c.l.b16 %v217
    %v289 = vunpack.c.l.b16 %v218
    %v290 = vunpack.c.h.b16 %v218
    %v291 = vunpack.c.l.b16 %v219
    %v292 = vunpack.c.l.b16 %v220
    %v293 = vunpack.c.h.b16 %v220
    %v294 = vunpack.c.l.b16 %v221
    %v295 = vunpack.c.l.b16 %v222
    %v296 = vunpack.c.h.b16 %v222
    %v297 = vunpack.c.l.b16 %v223
    %v298 = vunpack.c.l.b16 %v224
    %v299 = vunpack.c.h.b16 %v224
    %v300 = vunpack.c.l.b16 %v225
    %v301 = vunpack.c.l.b16 %v226
    %v302 = vunpack.c.h.b16 %v226
    %v303 = vunpack.c.l.b16 %v227
    %v304 = vunpack.c.l.b16 %v228
    %v305 = vunpack.c.h.b16 %v228
    %v306 = vunpack.c.l.b16 %v229
    %v307 = vunpack.c.l.b16 %v230
    %v308 = vunpack.c.h.b16 %v230
    %v309 = vunpack.c.l.b16 %v231
    %v310 = vunpack.c.l.b16 %v232
    %v311 = vunpack.c.h.b16 %v232
    %v312 = vunpack.c.l.b16 %v233
    %v313 = vunpack.c.l.b16 %v234
    %v314 = vunpack.c.h.b16 %v234
    %v315 = vunpack.c.l.b16 %v235
    %v316 = vpack.c.b16 %v271, %v268
    %v317 = vpack.c.b16 %v272, %v269
    %v318 = vpack.c.b16 %v273, %v270
    %v319 = vpack.c.b16 %v277, %v274
    %v320 = vpack.c.b16 %v278, %v275
    %v321 = vpack.c.b16 %v279, %v276
    %v322 = vpack.c.b16 %v283, %v280
    %v323 = vpack.c.b16 %v284, %v281
    %v324 = vpack.c.b16 %v285, %v282
    %v325 = vpack.c.b16 %v289, %v286
    %v326 = vpack.c.b16 %v290, %v287
    %v327 = vpack.c.b16 %v291, %v288
    %v328 = vpack.c.b16 %v295, %v292
    %v329 = vpack.c.b16 %v296, %v293
    %v330 = vpack.c.b16 %v297, %v294
    %v331 = vpack.c.b16 %v301, %v298
    %v332 = vpack.c.b16 %v302, %v299
    %v333 = vpack.c.b16 %v303, %v300
    %v334 = vpack.c.b16 %v307, %v304
    %v335 = vpack.c.b16 %v308, %v305
    %v336 = vpack.c.b16 %v309, %v306
    %v337 = vpack.c.b16 %v313, %v310
    %v338 = vpack.c.b16 %v314, %v311
    %v339 = vpack.c.b16 %v315, %v312
    %364 = vmatprep.subr.bf16.mxu0 %v317
    %365 = vmatpush1.bf16.msra.mxu0 %v316
    %366 = vmatprep.subr.bf16.mxu0 %v320
    %367 = vmatpush1.bf16.msra.mxu0 %v319
    %368 = vmatprep.subr.bf16.mxu0 %v323
    %369 = vmatpush1.bf16.msra.mxu0 %v322
    %370 = vmatprep.subr.bf16.mxu0 %v326
    %371 = vmatpush1.bf16.msra.mxu0 %v325
    %372 = vmatprep.subr.bf16.mxu0 %v329
    %373 = vmatpush1.bf16.msra.mxu0 %v328
    %374 = vmatprep.subr.bf16.mxu0 %v332
    %375 = vmatpush1.bf16.msra.mxu0 %v331
    %376 = vmatprep.subr.bf16.mxu0 %v335
    %377 = vmatpush1.bf16.msra.mxu0 %v334
    %378 = vmatprep.subr.bf16.mxu0 %v338
    %379 = vmatpush1.bf16.msra.mxu0 %v337
    %380 = vmatprep.subr.bf16.mxu0 0
    %381 = vmatpush1.bf16.msra.mxu0 0
    %382 = vmatprep.subr.bf16.mxu0 0
    %383 = vmatpush1.bf16.msra.mxu0 0
    %384 = vmatprep.subr.bf16.mxu0 0
    %385 = vmatpush1.bf16.msra.mxu0 0
    %386 = vmatprep.subr.bf16.mxu0 0
    %387 = vmatpush1.bf16.msra.mxu0 0
    %388 = vmatprep.subr.bf16.mxu0 0
    %389 = vmatpush1.bf16.msra.mxu0 0
    %390 = vmatprep.subr.bf16.mxu0 0
    %391 = vmatpush1.bf16.msra.mxu0 0
    %392 = vmatprep.subr.bf16.mxu0 0
    %393 = vmatpush1.bf16.msra.mxu0 0
    %394 = vmatprep.subr.bf16.mxu0 0
    %395 = vmatpush1.bf16.msra.mxu0 0
    %396 = vmatprep.mubr.bf16.mxu0 0
    %397 = vmatmul.mubr.bf16.gmra.mrb[0].mxu0 %v203
    %v398 = vpop.f32.mrb[0].mxu0
    %v399 = vadd.f32 0.0, %v398
    %v400 = vpop.f32.mrb[0].mxu0
    %v401 = vadd.f32 0.0, %v400
    %v402 = vpop.f32.mrb[0].mxu0
    %v403 = vadd.f32 0.0, %v402
    %v404 = vpop.f32.mrb[0].mxu0
    %v405 = vadd.f32 0.0, %v404
    %406 = vdwg.mxu0
    %407 = vmatprep.subr.bf16.mxu0 0
    %408 = vmatpush1.bf16.msra.mxu0 %v318
    %409 = vmatprep.subr.bf16.mxu0 0
    %410 = vmatpush1.bf16.msra.mxu0 %v321
    %411 = vmatprep.subr.bf16.mxu0 0
    %412 = vmatpush1.bf16.msra.mxu0 %v324
    %413 = vmatprep.subr.bf16.mxu0 0
    %414 = vmatpush1.bf16.msra.mxu0 %v327
    %415 = vmatprep.subr.bf16.mxu0 0
    %416 = vmatpush1.bf16.msra.mxu0 %v330
    %417 = vmatprep.subr.bf16.mxu0 0
    %418 = vmatpush1.bf16.msra.mxu0 %v333
    %419 = vmatprep.subr.bf16.mxu0 0
    %420 = vmatpush1.bf16.msra.mxu0 %v336
    %421 = vmatprep.subr.bf16.mxu0 0
    %422 = vmatpush1.bf16.msra.mxu0 %v339
    %423 = vmatprep.subr.bf16.mxu0 0
    %424 = vmatpush1.bf16.msra.mxu0 0
    %425 = vmatprep.subr.bf16.mxu0 0
    %426 = vmatpush1.bf16.msra.mxu0 0
    %427 = vmatprep.subr.bf16.mxu0 0
    %428 = vmatpush1.bf16.msra.mxu0 0
    %429 = vmatprep.subr.bf16.mxu0 0
    %430 = vmatpush1.bf16.msra.mxu0 0
    %431 = vmatprep.subr.bf16.mxu0 0
    %432 = vmatpush1.bf16.msra.mxu0 0
    %433 = vmatprep.subr.bf16.mxu0 0
    %434 = vmatpush1.bf16.msra.mxu0 0
    %435 = vmatprep.subr.bf16.mxu0 0
    %436 = vmatpush1.bf16.msra.mxu0 0
    %437 = vmatprep.subr.bf16.mxu0 0
    %438 = vmatpush1.bf16.msra.mxu0 0
    %439 = vmatprep.mubr.bf16.mxu0 0
    %440 = vmatmul.mubr.bf16.gmra.mrb[0].mxu0 %v203
    %v441 = vpop.f32.mrb[0].mxu0
    %v442 = vadd.f32 0.0, %v441
    %v443 = vpop.f32.mrb[0].mxu0
    %v444 = vpop.f32.mrb[0].mxu0
    %v445 = vadd.f32 0.0, %v444
    %v446 = vpop.f32.mrb[0].mxu0
    %447 = vdwg.mxu0
    %v448 = vadd.f32 %v399, %v131
    %v449 = vadd.f32 %v403, %v132
    %v450 = vadd.f32 %v401, %v133
    %v451 = vadd.f32 %v405, %v134
    %v452 = vadd.f32 %v442, %v139
    %v453 = vadd.f32 %v445, %v139
    %v454 = vpack.c.bf16 %v448, %v448
    %v455 = vpack.c.bf16 %v449, %v449
    %v456 = vpack.c.bf16 %v450, %v450
    %v457 = vpack.c.bf16 %v451, %v451
    %v458 = vpack.c.bf16 %v452, %v452
    %v459 = vpack.c.bf16 %v453, %v453
    %vm460 = vcmask 261120
    %v462 = vsel %vm460, %v454, 0
    %v465 = vsel %vm460, %v456, 0
    %467 = vmatprep.subr.bf16.mxu0 0
    %468 = vmatpush1.bf16.xpose.msra.mxu0 %v465
    %469 = vmatprep.subr.bf16.mxu0 0
    %470 = vmatpush1.bf16.xpose.msra.mxu0 0
    %471 = vmatprep.subr.bf16.mxu0 0
    %472 = vmatpush1.bf16.xpose.msra.mxu0 0
    %473 = vmatprep.subr.bf16.mxu0 0
    %474 = vmatpush1.bf16.xpose.msra.mxu0 0
    %475 = vmatprep.subr.bf16.mxu0 0
    %476 = vmatpush1.bf16.xpose.msra.mxu0 0
    %477 = vmatprep.subr.bf16.mxu0 0
    %478 = vmatpush1.bf16.xpose.msra.mxu0 0
    %479 = vmatprep.subr.bf16.mxu0 0
    %480 = vmatpush1.bf16.xpose.msra.mxu0 0
    %481 = vmatprep.subr.bf16.mxu0 0
    %482 = vmatpush1.bf16.xpose.msra.mxu0 0
    %483 = vmatprep.subr.bf16.mxu0 0
    %484 = vmatpush1.bf16.xpose.msra.mxu0 0
    %485 = vmatprep.subr.bf16.mxu0 0
    %486 = vmatpush1.bf16.xpose.msra.mxu0 0
    %487 = vmatprep.subr.bf16.mxu0 0
    %488 = vmatpush1.bf16.xpose.msra.mxu0 0
    %489 = vmatprep.subr.bf16.mxu0 0
    %490 = vmatpush1.bf16.xpose.msra.mxu0 0
    %491 = vmatprep.subr.bf16.mxu0 0
    %492 = vmatpush1.bf16.xpose.msra.mxu0 0
    %493 = vmatprep.subr.bf16.mxu0 0
    %494 = vmatpush1.bf16.xpose.msra.mxu0 0
    %495 = vmatprep.subr.bf16.mxu0 0
    %496 = vmatpush1.bf16.xpose.msra.mxu0 0
    %497 = vmatprep.subr.bf16.mxu0 0
    %498 = vmatpush1.bf16.xpose.msra.mxu0 0
    %499 = vmatprep.mubr.bf16.mxu0 0
    %500 = vmatmul.mubr.bf16.gmra.mrb[0].mxu0 %v462
    %v501 = vpop.f32.mrb[0].mxu0
    %v502 = vadd.f32 0.0, %v501
    %v503 = vpop.f32.mrb[0].mxu0
    %v504 = vpop.f32.mrb[0].mxu0
    %v505 = vpop.f32.mrb[0].mxu0
    %506 = vdwg.mxu0
    %v508 = vsel %vm460, %v455, 0
    %v511 = vsel %vm460, %v457, 0
    %513 = vmatprep.subr.bf16.mxu0 0
    %514 = vmatpush1.bf16.xpose.msra.mxu0 %v511
    %515 = vmatprep.subr.bf16.mxu0 0
    %516 = vmatpush1.bf16.xpose.msra.mxu0 0
    %517 = vmatprep.subr.bf16.mxu0 0
    %518 = vmatpush1.bf16.xpose.msra.mxu0 0
    %519 = vmatprep.subr.bf16.mxu0 0
    %520 = vmatpush1.bf16.xpose.msra.mxu0 0
    %521 = vmatprep.subr.bf16.mxu0 0
    %522 = vmatpush1.bf16.xpose.msra.mxu0 0
    %523 = vmatprep.subr.bf16.mxu0 0
    %524 = vmatpush1.bf16.xpose.msra.mxu0 0
    %525 = vmatprep.subr.bf16.mxu0 0
    %526 = vmatpush1.bf16.xpose.msra.mxu0 0
    %527 = vmatprep.subr.bf16.mxu0 0
    %528 = vmatpush1.bf16.xpose.msra.mxu0 0
    %529 = vmatprep.subr.bf16.mxu0 0
    %530 = vmatpush1.bf16.xpose.msra.mxu0 0
    %531 = vmatprep.subr.bf16.mxu0 0
    %532 = vmatpush1.bf16.xpose.msra.mxu0 0
    %533 = vmatprep.subr.bf16.mxu0 0
    %534 = vmatpush1.bf16.xpose.msra.mxu0 0
    %535 = vmatprep.subr.bf16.mxu0 0
    %536 = vmatpush1.bf16.xpose.msra.mxu0 0
    %537 = vmatprep.subr.bf16.mxu0 0
    %538 = vmatpush1.bf16.xpose.msra.mxu0 0
    %539 = vmatprep.subr.bf16.mxu0 0
    %540 = vmatpush1.bf16.xpose.msra.mxu0 0
    %541 = vmatprep.subr.bf16.mxu0 0
    %542 = vmatpush1.bf16.xpose.msra.mxu0 0
    %543 = vmatprep.subr.bf16.mxu0 0
    %544 = vmatpush1.bf16.xpose.msra.mxu0 0
    %545 = vmatprep.mubr.bf16.mxu0 0
    %546 = vmatmul.mubr.bf16.gmra.mrb[0].mxu0 %v508
    %v547 = vpop.f32.mrb[0].mxu0
    %v548 = vadd.f32 0.0, %v547
    %v549 = vpop.f32.mrb[0].mxu0
    %v550 = vpop.f32.mrb[0].mxu0
    %v551 = vpop.f32.mrb[0].mxu0
    %552 = vdwg.mxu0
    %vm553 = vcmask 64512
    %v554 = vsel %vm553, %v502, -inf
    %555 = vmax.xlane.f32.xlu0 %v554
    %v556 = vpop.xlane.xlu0 %555
    %v557 = vsel %vm553, %v548, -inf
    %558 = vmax.xlane.f32.xlu0 %v557
    %v559 = vpop.xlane.xlu0 %558
    %v560 = vsub.f32 %v502, %v556
    %v561 = vsub.f32 %v548, %v559
    %v562 = vmul.f32 %v560, 1.442695
    %v563 = vpow.pop %v562
    %v564 = vmul.f32 %v561, 1.442695
    %v565 = vpow.pop %v564
    %v566 = vsel %vm553, %v563, 0.0
    %567 = vadd.xlane.f32.xlu0 %v566
    %v568 = vpop.xlane.xlu0 %567
    %v569 = vsel %vm553, %v565, 0.0
    %570 = vadd.xlane.f32.xlu0 %v569
    %v571 = vpop.xlane.xlu0 %570
    %v572 = vrcp.pop %v568
    %v573 = vrcp.pop %v571
    %v574 = vmul.f32 %v563, %v572
    %v575 = vmul.f32 %v565, %v573
    %v576 = vpack.c.bf16 %v574, %v574
    %v577 = vpack.c.bf16 %v575, %v575
    %v579 = vsel %vm553, %v576, 0
    %vm581 = vcmask 1043456
    %v583 = vsel %vm581, %v458, 0
    %585 = vmatprep.subr.bf16.mxu0 0
    %586 = vmatpush1.bf16.msra.mxu0 %v583
    %587 = vmatprep.subr.bf16.mxu0 0
    %588 = vmatpush1.bf16.msra.mxu0 0
    %589 = vmatprep.subr.bf16.mxu0 0
    %590 = vmatpush1.bf16.msra.mxu0 0
    %591 = vmatprep.subr.bf16.mxu0 0
    %592 = vmatpush1.bf16.msra.mxu0 0
    %593 = vmatprep.subr.bf16.mxu0 0
    %594 = vmatpush1.bf16.msra.mxu0 0
    %595 = vmatprep.subr.bf16.mxu0 0
    %596 = vmatpush1.bf16.msra.mxu0 0
    %597 = vmatprep.subr.bf16.mxu0 0
    %598 = vmatpush1.bf16.msra.mxu0 0
    %599 = vmatprep.subr.bf16.mxu0 0
    %600 = vmatpush1.bf16.msra.mxu0 0
    %601 = vmatprep.subr.bf16.mxu0 0
    %602 = vmatpush1.bf16.msra.mxu0 0
    %603 = vmatprep.subr.bf16.mxu0 0
    %604 = vmatpush1.bf16.msra.mxu0 0
    %605 = vmatprep.subr.bf16.mxu0 0
    %606 = vmatpush1.bf16.msra.mxu0 0
    %607 = vmatprep.subr.bf16.mxu0 0
    %608 = vmatpush1.bf16.msra.mxu0 0
    %609 = vmatprep.subr.bf16.mxu0 0
    %610 = vmatpush1.bf16.msra.mxu0 0
    %611 = vmatprep.subr.bf16.mxu0 0
    %612 = vmatpush1.bf16.msra.mxu0 0
    %613 = vmatprep.subr.bf16.mxu0 0
    %614 = vmatpush1.bf16.msra.mxu0 0
    %615 = vmatprep.subr.bf16.mxu0 0
    %616 = vmatpush1.bf16.msra.mxu0 0
    %617 = vmatprep.mubr.bf16.mxu0 0
    %618 = vmatmul.mubr.bf16.gmra.mrb[0].mxu0 %v579
    %v619 = vpop.f32.mrb[0].mxu0
    %v620 = vadd.f32 0.0, %v619
    %v621 = vpop.f32.mrb[0].mxu0
    %v622 = vpop.f32.mrb[0].mxu0
    %v623 = vpop.f32.mrb[0].mxu0
    %624 = vdwg.mxu0
    %v626 = vsel %vm553, %v577, 0
    %v629 = vsel %vm581, %v459, 0
    %631 = vmatprep.subr.bf16.mxu0 0
    %632 = vmatpush1.bf16.msra.mxu0 %v629
    %633 = vmatprep.subr.bf16.mxu0 0
    %634 = vmatpush1.bf16.msra.mxu0 0
    %635 = vmatprep.subr.bf16.mxu0 0
    %636 = vmatpush1.bf16.msra.mxu0 0
    %637 = vmatprep.subr.bf16.mxu0 0
    %638 = vmatpush1.bf16.msra.mxu0 0
    %639 = vmatprep.subr.bf16.mxu0 0
    %640 = vmatpush1.bf16.msra.mxu0 0
    %641 = vmatprep.subr.bf16.mxu0 0
    %642 = vmatpush1.bf16.msra.mxu0 0
    %643 = vmatprep.subr.bf16.mxu0 0
    %644 = vmatpush1.bf16.msra.mxu0 0
    %645 = vmatprep.subr.bf16.mxu0 0
    %646 = vmatpush1.bf16.msra.mxu0 0
    %647 = vmatprep.subr.bf16.mxu0 0
    %648 = vmatpush1.bf16.msra.mxu0 0
    %649 = vmatprep.subr.bf16.mxu0 0
    %650 = vmatpush1.bf16.msra.mxu0 0
    %651 = vmatprep.subr.bf16.mxu0 0
    %652 = vmatpush1.bf16.msra.mxu0 0
    %653 = vmatprep.subr.bf16.mxu0 0
    %654 = vmatpush1.bf16.msra.mxu0 0
    %655 = vmatprep.subr.bf16.mxu0 0
    %656 = vmatpush1.bf16.msra.mxu0 0
    %657 = vmatprep.subr.bf16.mxu0 0
    %658 = vmatpush1.bf16.msra.mxu0 0
    %659 = vmatprep.subr.bf16.mxu0 0
    %660 = vmatpush1.bf16.msra.mxu0 0
    %661 = vmatprep.subr.bf16.mxu0 0
    %662 = vmatpush1.bf16.msra.mxu0 0
    %663 = vmatprep.mubr.bf16.mxu0 0
    %664 = vmatmul.mubr.bf16.gmra.mrb[0].mxu0 %v626
    %v665 = vpop.f32.mrb[0].mxu0
    %v666 = vadd.f32 0.0, %v665
    %v667 = vpop.f32.mrb[0].mxu0
    %v668 = vpop.f32.mrb[0].mxu0
    %v669 = vpop.f32.mrb[0].mxu0
    %670 = vdwg.mxu0
    %672 = vrot.lane.b32.xlu0 %v454, 96
    %v673 = vpop.permute.xlu0 %672
    %675 = vrot.lane.b32.xlu0 %v456, 96
    %v676 = vpop.permute.xlu0 %675
    %v678 = vsel %vm460, %v673, 0
    %v681 = vsel %vm460, %v676, 0
    %683 = vmatprep.subr.bf16.mxu0 0
    %684 = vmatpush1.bf16.xpose.msra.mxu0 %v681
    %685 = vmatprep.subr.bf16.mxu0 0
    %686 = vmatpush1.bf16.xpose.msra.mxu0 0
    %687 = vmatprep.subr.bf16.mxu0 0
    %688 = vmatpush1.bf16.xpose.msra.mxu0 0
    %689 = vmatprep.subr.bf16.mxu0 0
    %690 = vmatpush1.bf16.xpose.msra.mxu0 0
    %691 = vmatprep.subr.bf16.mxu0 0
    %692 = vmatpush1.bf16.xpose.msra.mxu0 0
    %693 = vmatprep.subr.bf16.mxu0 0
    %694 = vmatpush1.bf16.xpose.msra.mxu0 0
    %695 = vmatprep.subr.bf16.mxu0 0
    %696 = vmatpush1.bf16.xpose.msra.mxu0 0
    %697 = vmatprep.subr.bf16.mxu0 0
    %698 = vmatpush1.bf16.xpose.msra.mxu0 0
    %699 = vmatprep.subr.bf16.mxu0 0
    %700 = vmatpush1.bf16.xpose.msra.mxu0 0
    %701 = vmatprep.subr.bf16.mxu0 0
    %702 = vmatpush1.bf16.xpose.msra.mxu0 0
    %703 = vmatprep.subr.bf16.mxu0 0
    %704 = vmatpush1.bf16.xpose.msra.mxu0 0
    %705 = vmatprep.subr.bf16.mxu0 0
    %706 = vmatpush1.bf16.xpose.msra.mxu0 0
    %707 = vmatprep.subr.bf16.mxu0 0
    %708 = vmatpush1.bf16.xpose.msra.mxu0 0
    %709 = vmatprep.subr.bf16.mxu0 0
    %710 = vmatpush1.bf16.xpose.msra.mxu0 0
    %711 = vmatprep.subr.bf16.mxu0 0
    %712 = vmatpush1.bf16.xpose.msra.mxu0 0
    %713 = vmatprep.subr.bf16.mxu0 0
    %714 = vmatpush1.bf16.xpose.msra.mxu0 0
    %715 = vmatprep.mubr.bf16.mxu0 0
    %716 = vmatmul.mubr.bf16.gmra.mrb[0].mxu0 %v678
    %v717 = vpop.f32.mrb[0].mxu0
    %v718 = vadd.f32 0.0, %v717
    %v719 = vpop.f32.mrb[0].mxu0
    %v720 = vpop.f32.mrb[0].mxu0
    %v721 = vpop.f32.mrb[0].mxu0
    %722 = vdwg.mxu0
    %724 = vrot.lane.b32.xlu0 %v455, 96
    %v725 = vpop.permute.xlu0 %724
    %727 = vrot.lane.b32.xlu0 %v457, 96
    %v728 = vpop.permute.xlu0 %727
    %v730 = vsel %vm460, %v725, 0
    %v733 = vsel %vm460, %v728, 0
    %735 = vmatprep.subr.bf16.mxu0 0
    %736 = vmatpush1.bf16.xpose.msra.mxu0 %v733
    %737 = vmatprep.subr.bf16.mxu0 0
    %738 = vmatpush1.bf16.xpose.msra.mxu0 0
    %739 = vmatprep.subr.bf16.mxu0 0
    %740 = vmatpush1.bf16.xpose.msra.mxu0 0
    %741 = vmatprep.subr.bf16.mxu0 0
    %742 = vmatpush1.bf16.xpose.msra.mxu0 0
    %743 = vmatprep.subr.bf16.mxu0 0
    %744 = vmatpush1.bf16.xpose.msra.mxu0 0
    %745 = vmatprep.subr.bf16.mxu0 0
    %746 = vmatpush1.bf16.xpose.msra.mxu0 0
    %747 = vmatprep.subr.bf16.mxu0 0
    %748 = vmatpush1.bf16.xpose.msra.mxu0 0
    %749 = vmatprep.subr.bf16.mxu0 0
    %750 = vmatpush1.bf16.xpose.msra.mxu0 0
    %751 = vmatprep.subr.bf16.mxu0 0
    %752 = vmatpush1.bf16.xpose.msra.mxu0 0
    %753 = vmatprep.subr.bf16.mxu0 0
    %754 = vmatpush1.bf16.xpose.msra.mxu0 0
    %755 = vmatprep.subr.bf16.mxu0 0
    %756 = vmatpush1.bf16.xpose.msra.mxu0 0
    %757 = vmatprep.subr.bf16.mxu0 0
    %758 = vmatpush1.bf16.xpose.msra.mxu0 0
    %759 = vmatprep.subr.bf16.mxu0 0
    %760 = vmatpush1.bf16.xpose.msra.mxu0 0
    %761 = vmatprep.subr.bf16.mxu0 0
    %762 = vmatpush1.bf16.xpose.msra.mxu0 0
    %763 = vmatprep.subr.bf16.mxu0 0
    %764 = vmatpush1.bf16.xpose.msra.mxu0 0
    %765 = vmatprep.subr.bf16.mxu0 0
    %766 = vmatpush1.bf16.xpose.msra.mxu0 0
    %767 = vmatprep.mubr.bf16.mxu0 0
    %768 = vmatmul.mubr.bf16.gmra.mrb[0].mxu0 %v730
    %v769 = vpop.f32.mrb[0].mxu0
    %v770 = vadd.f32 0.0, %v769
    %v771 = vpop.f32.mrb[0].mxu0
    %v772 = vpop.f32.mrb[0].mxu0
    %v773 = vpop.f32.mrb[0].mxu0
    %774 = vdwg.mxu0
    %v775 = vsel %vm553, %v718, -inf
    %776 = vmax.xlane.f32.xlu0 %v775
    %v777 = vpop.xlane.xlu0 %776
    %v778 = vsel %vm553, %v770, -inf
    %779 = vmax.xlane.f32.xlu0 %v778
    %v780 = vpop.xlane.xlu0 %779
    %v781 = vsub.f32 %v718, %v777
    %v782 = vsub.f32 %v770, %v780
    %v783 = vmul.f32 %v781, 1.442695
    %v784 = vpow.pop %v783
    %v785 = vmul.f32 %v782, 1.442695
    %v786 = vpow.pop %v785
    %v787 = vsel %vm553, %v784, 0.0
    %788 = vadd.xlane.f32.xlu0 %v787
    %v789 = vpop.xlane.xlu0 %788
    %v790 = vsel %vm553, %v786, 0.0
    %791 = vadd.xlane.f32.xlu0 %v790
    %v792 = vpop.xlane.xlu0 %791
    %v793 = vrcp.pop %v789
    %v794 = vrcp.pop %v792
    %v795 = vmul.f32 %v784, %v793
    %v796 = vmul.f32 %v786, %v794
    %v797 = vpack.c.bf16 %v795, %v795
    %v798 = vpack.c.bf16 %v796, %v796
    %800 = vrot.lane.b32.xlu0 %v458, 96
    %v801 = vpop.permute.xlu0 %800
    %v803 = vsel %vm553, %v797, 0
    %v806 = vsel %vm581, %v801, 0
    %808 = vmatprep.subr.bf16.mxu0 0
    %809 = vmatpush1.bf16.msra.mxu0 %v806
    %810 = vmatprep.subr.bf16.mxu0 0
    %811 = vmatpush1.bf16.msra.mxu0 0
    %812 = vmatprep.subr.bf16.mxu0 0
    %813 = vmatpush1.bf16.msra.mxu0 0
    %814 = vmatprep.subr.bf16.mxu0 0
    %815 = vmatpush1.bf16.msra.mxu0 0
    %816 = vmatprep.subr.bf16.mxu0 0
    %817 = vmatpush1.bf16.msra.mxu0 0
    %818 = vmatprep.subr.bf16.mxu0 0
    %819 = vmatpush1.bf16.msra.mxu0 0
    %820 = vmatprep.subr.bf16.mxu0 0
    %821 = vmatpush1.bf16.msra.mxu0 0
    %822 = vmatprep.subr.bf16.mxu0 0
    %823 = vmatpush1.bf16.msra.mxu0 0
    %824 = vmatprep.subr.bf16.mxu0 0
    %825 = vmatpush1.bf16.msra.mxu0 0
    %826 = vmatprep.subr.bf16.mxu0 0
    %827 = vmatpush1.bf16.msra.mxu0 0
    %828 = vmatprep.subr.bf16.mxu0 0
    %829 = vmatpush1.bf16.msra.mxu0 0
    %830 = vmatprep.subr.bf16.mxu0 0
    %831 = vmatpush1.bf16.msra.mxu0 0
    %832 = vmatprep.subr.bf16.mxu0 0
    %833 = vmatpush1.bf16.msra.mxu0 0
    %834 = vmatprep.subr.bf16.mxu0 0
    %835 = vmatpush1.bf16.msra.mxu0 0
    %836 = vmatprep.subr.bf16.mxu0 0
    %837 = vmatpush1.bf16.msra.mxu0 0
    %838 = vmatprep.subr.bf16.mxu0 0
    %839 = vmatpush1.bf16.msra.mxu0 0
    %840 = vmatprep.mubr.bf16.mxu0 0
    %841 = vmatmul.mubr.bf16.gmra.mrb[0].mxu0 %v803
    %v842 = vpop.f32.mrb[0].mxu0
    %v843 = vadd.f32 0.0, %v842
    %v844 = vpop.f32.mrb[0].mxu0
    %v845 = vpop.f32.mrb[0].mxu0
    %v846 = vpop.f32.mrb[0].mxu0
    %847 = vdwg.mxu0
    %849 = vrot.lane.b32.xlu0 %v459, 96
    %v850 = vpop.permute.xlu0 %849
    %v852 = vsel %vm553, %v798, 0
    %v855 = vsel %vm581, %v850, 0
    %857 = vmatprep.subr.bf16.mxu0 0
    %858 = vmatpush1.bf16.msra.mxu0 %v855
    %859 = vmatprep.subr.bf16.mxu0 0
    %860 = vmatpush1.bf16.msra.mxu0 0
    %861 = vmatprep.subr.bf16.mxu0 0
    %862 = vmatpush1.bf16.msra.mxu0 0
    %863 = vmatprep.subr.bf16.mxu0 0
    %864 = vmatpush1.bf16.msra.mxu0 0
    %865 = vmatprep.subr.bf16.mxu0 0
    %866 = vmatpush1.bf16.msra.mxu0 0
    %867 = vmatprep.subr.bf16.mxu0 0
    %868 = vmatpush1.bf16.msra.mxu0 0
    %869 = vmatprep.subr.bf16.mxu0 0
    %870 = vmatpush1.bf16.msra.mxu0 0
    %871 = vmatprep.subr.bf16.mxu0 0
    %872 = vmatpush1.bf16.msra.mxu0 0
    %873 = vmatprep.subr.bf16.mxu0 0
    %874 = vmatpush1.bf16.msra.mxu0 0
    %875 = vmatprep.subr.bf16.mxu0 0
    %876 = vmatpush1.bf16.msra.mxu0 0
    %877 = vmatprep.subr.bf16.mxu0 0
    %878 = vmatpush1.bf16.msra.mxu0 0
    %879 = vmatprep.subr.bf16.mxu0 0
    %880 = vmatpush1.bf16.msra.mxu0 0
    %881 = vmatprep.subr.bf16.mxu0 0
    %882 = vmatpush1.bf16.msra.mxu0 0
    %883 = vmatprep.subr.bf16.mxu0 0
    %884 = vmatpush1.bf16.msra.mxu0 0
    %885 = vmatprep.subr.bf16.mxu0 0
    %886 = vmatpush1.bf16.msra.mxu0 0
    %887 = vmatprep.subr.bf16.mxu0 0
    %888 = vmatpush1.bf16.msra.mxu0 0
    %889 = vmatprep.mubr.bf16.mxu0 0
    %890 = vmatmul.mubr.bf16.gmra.mrb[0].mxu0 %v852
    %v891 = vpop.f32.mrb[0].mxu0
    %v892 = vadd.f32 0.0, %v891
    %v893 = vpop.f32.mrb[0].mxu0
    %v894 = vpop.f32.mrb[0].mxu0
    %v895 = vpop.f32.mrb[0].mxu0
    %896 = vdwg.mxu0
    %897 = vrot.lane.b32.xlu0 %v454, 64
    %v898 = vpop.permute.xlu0 %897
    %899 = vrot.lane.b32.xlu0 %v456, 64
    %v900 = vpop.permute.xlu0 %899
    %v902 = vsel %vm460, %v898, 0
    %v905 = vsel %vm460, %v900, 0
    %907 = vmatprep.subr.bf16.mxu0 0
    %908 = vmatpush1.bf16.xpose.msra.mxu0 %v905
    %909 = vmatprep.subr.bf16.mxu0 0
    %910 = vmatpush1.bf16.xpose.msra.mxu0 0
    %911 = vmatprep.subr.bf16.mxu0 0
    %912 = vmatpush1.bf16.xpose.msra.mxu0 0
    %913 = vmatprep.subr.bf16.mxu0 0
    %914 = vmatpush1.bf16.xpose.msra.mxu0 0
    %915 = vmatprep.subr.bf16.mxu0 0
    %916 = vmatpush1.bf16.xpose.msra.mxu0 0
    %917 = vmatprep.subr.bf16.mxu0 0
    %918 = vmatpush1.bf16.xpose.msra.mxu0 0
    %919 = vmatprep.subr.bf16.mxu0 0
    %920 = vmatpush1.bf16.xpose.msra.mxu0 0
    %921 = vmatprep.subr.bf16.mxu0 0
    %922 = vmatpush1.bf16.xpose.msra.mxu0 0
    %923 = vmatprep.subr.bf16.mxu0 0
    %924 = vmatpush1.bf16.xpose.msra.mxu0 0
    %925 = vmatprep.subr.bf16.mxu0 0
    %926 = vmatpush1.bf16.xpose.msra.mxu0 0
    %927 = vmatprep.subr.bf16.mxu0 0
    %928 = vmatpush1.bf16.xpose.msra.mxu0 0
    %929 = vmatprep.subr.bf16.mxu0 0
    %930 = vmatpush1.bf16.xpose.msra.mxu0 0
    %931 = vmatprep.subr.bf16.mxu0 0
    %932 = vmatpush1.bf16.xpose.msra.mxu0 0
    %933 = vmatprep.subr.bf16.mxu0 0
    %934 = vmatpush1.bf16.xpose.msra.mxu0 0
    %935 = vmatprep.subr.bf16.mxu0 0
    %936 = vmatpush1.bf16.xpose.msra.mxu0 0
    %937 = vmatprep.subr.bf16.mxu0 0
    %938 = vmatpush1.bf16.xpose.msra.mxu0 0
    %939 = vmatprep.mubr.bf16.mxu0 0
    %940 = vmatmul.mubr.bf16.gmra.mrb[0].mxu0 %v902
    %v941 = vpop.f32.mrb[0].mxu0
    %v942 = vadd.f32 0.0, %v941
    %v943 = vpop.f32.mrb[0].mxu0
    %v944 = vpop.f32.mrb[0].mxu0
    %v945 = vpop.f32.mrb[0].mxu0
    %946 = vdwg.mxu0
    %947 = vrot.lane.b32.xlu0 %v455, 64
    %v948 = vpop.permute.xlu0 %947
    %949 = vrot.lane.b32.xlu0 %v457, 64
    %v950 = vpop.permute.xlu0 %949
    %v952 = vsel %vm460, %v948, 0
    %v955 = vsel %vm460, %v950, 0
    %957 = vmatprep.subr.bf16.mxu0 0
    %958 = vmatpush1.bf16.xpose.msra.mxu0 %v955
    %959 = vmatprep.subr.bf16.mxu0 0
    %960 = vmatpush1.bf16.xpose.msra.mxu0 0
    %961 = vmatprep.subr.bf16.mxu0 0
    %962 = vmatpush1.bf16.xpose.msra.mxu0 0
    %963 = vmatprep.subr.bf16.mxu0 0
    %964 = vmatpush1.bf16.xpose.msra.mxu0 0
    %965 = vmatprep.subr.bf16.mxu0 0
    %966 = vmatpush1.bf16.xpose.msra.mxu0 0
    %967 = vmatprep.subr.bf16.mxu0 0
    %968 = vmatpush1.bf16.xpose.msra.mxu0 0
    %969 = vmatprep.subr.bf16.mxu0 0
    %970 = vmatpush1.bf16.xpose.msra.mxu0 0
    %971 = vmatprep.subr.bf16.mxu0 0
    %972 = vmatpush1.bf16.xpose.msra.mxu0 0
    %973 = vmatprep.subr.bf16.mxu0 0
    %974 = vmatpush1.bf16.xpose.msra.mxu0 0
    %975 = vmatprep.subr.bf16.mxu0 0
    %976 = vmatpush1.bf16.xpose.msra.mxu0 0
    %977 = vmatprep.subr.bf16.mxu0 0
    %978 = vmatpush1.bf16.xpose.msra.mxu0 0
    %979 = vmatprep.subr.bf16.mxu0 0
    %980 = vmatpush1.bf16.xpose.msra.mxu0 0
    %981 = vmatprep.subr.bf16.mxu0 0
    %982 = vmatpush1.bf16.xpose.msra.mxu0 0
    %983 = vmatprep.subr.bf16.mxu0 0
    %984 = vmatpush1.bf16.xpose.msra.mxu0 0
    %985 = vmatprep.subr.bf16.mxu0 0
    %986 = vmatpush1.bf16.xpose.msra.mxu0 0
    %987 = vmatprep.subr.bf16.mxu0 0
    %988 = vmatpush1.bf16.xpose.msra.mxu0 0
    %989 = vmatprep.mubr.bf16.mxu0 0
    %990 = vmatmul.mubr.bf16.gmra.mrb[0].mxu0 %v952
    %v991 = vpop.f32.mrb[0].mxu0
    %v992 = vadd.f32 0.0, %v991
    %v993 = vpop.f32.mrb[0].mxu0
    %v994 = vpop.f32.mrb[0].mxu0
    %v995 = vpop.f32.mrb[0].mxu0
    %996 = vdwg.mxu0
    %v997 = vsel %vm553, %v942, -inf
    %998 = vmax.xlane.f32.xlu0 %v997
    %v999 = vpop.xlane.xlu0 %998
    %v1000 = vsel %vm553, %v992, -inf
    %1001 = vmax.xlane.f32.xlu0 %v1000
    %v1002 = vpop.xlane.xlu0 %1001
    %v1003 = vsub.f32 %v942, %v999
    %v1004 = vsub.f32 %v992, %v1002
    %v1005 = vmul.f32 %v1003, 1.442695
    %v1006 = vpow.pop %v1005
    %v1007 = vmul.f32 %v1004, 1.442695
    %v1008 = vpow.pop %v1007
    %v1009 = vsel %vm553, %v1006, 0.0
    %1010 = vadd.xlane.f32.xlu0 %v1009
    %v1011 = vpop.xlane.xlu0 %1010
    %v1012 = vsel %vm553, %v1008, 0.0
    %1013 = vadd.xlane.f32.xlu0 %v1012
    %v1014 = vpop.xlane.xlu0 %1013
    %v1015 = vrcp.pop %v1011
    %v1016 = vrcp.pop %v1014
    %v1017 = vmul.f32 %v1006, %v1015
    %v1018 = vmul.f32 %v1008, %v1016
    %v1019 = vpack.c.bf16 %v1017, %v1017
    %v1020 = vpack.c.bf16 %v1018, %v1018
    %1021 = vrot.lane.b32.xlu0 %v458, 64
    %v1022 = vpop.permute.xlu0 %1021
    %v1024 = vsel %vm553, %v1019, 0
    %v1027 = vsel %vm581, %v1022, 0
    %1029 = vmatprep.subr.bf16.mxu0 0
    %1030 = vmatpush1.bf16.msra.mxu0 %v1027
    %1031 = vmatprep.subr.bf16.mxu0 0
    %1032 = vmatpush1.bf16.msra.mxu0 0
    %1033 = vmatprep.subr.bf16.mxu0 0
    %1034 = vmatpush1.bf16.msra.mxu0 0
    %1035 = vmatprep.subr.bf16.mxu0 0
    %1036 = vmatpush1.bf16.msra.mxu0 0
    %1037 = vmatprep.subr.bf16.mxu0 0
    %1038 = vmatpush1.bf16.msra.mxu0 0
    %1039 = vmatprep.subr.bf16.mxu0 0
    %1040 = vmatpush1.bf16.msra.mxu0 0
    %1041 = vmatprep.subr.bf16.mxu0 0
    %1042 = vmatpush1.bf16.msra.mxu0 0
    %1043 = vmatprep.subr.bf16.mxu0 0
    %1044 = vmatpush1.bf16.msra.mxu0 0
    %1045 = vmatprep.subr.bf16.mxu0 0
    %1046 = vmatpush1.bf16.msra.mxu0 0
    %1047 = vmatprep.subr.bf16.mxu0 0
    %1048 = vmatpush1.bf16.msra.mxu0 0
    %1049 = vmatprep.subr.bf16.mxu0 0
    %1050 = vmatpush1.bf16.msra.mxu0 0
    %1051 = vmatprep.subr.bf16.mxu0 0
    %1052 = vmatpush1.bf16.msra.mxu0 0
    %1053 = vmatprep.subr.bf16.mxu0 0
    %1054 = vmatpush1.bf16.msra.mxu0 0
    %1055 = vmatprep.subr.bf16.mxu0 0
    %1056 = vmatpush1.bf16.msra.mxu0 0
    %1057 = vmatprep.subr.bf16.mxu0 0
    %1058 = vmatpush1.bf16.msra.mxu0 0
    %1059 = vmatprep.subr.bf16.mxu0 0
    %1060 = vmatpush1.bf16.msra.mxu0 0
    %1061 = vmatprep.mubr.bf16.mxu0 0
    %1062 = vmatmul.mubr.bf16.gmra.mrb[0].mxu0 %v1024
    %v1063 = vpop.f32.mrb[0].mxu0
    %v1064 = vadd.f32 0.0, %v1063
    %v1065 = vpop.f32.mrb[0].mxu0
    %v1066 = vpop.f32.mrb[0].mxu0
    %v1067 = vpop.f32.mrb[0].mxu0
    %1068 = vdwg.mxu0
    %1069 = vrot.lane.b32.xlu0 %v459, 64
    %v1070 = vpop.permute.xlu0 %1069
    %v1072 = vsel %vm553, %v1020, 0
    %v1075 = vsel %vm581, %v1070, 0
    %1077 = vmatprep.subr.bf16.mxu0 0
    %1078 = vmatpush1.bf16.msra.mxu0 %v1075
    %1079 = vmatprep.subr.bf16.mxu0 0
    %1080 = vmatpush1.bf16.msra.mxu0 0
    %1081 = vmatprep.subr.bf16.mxu0 0
    %1082 = vmatpush1.bf16.msra.mxu0 0
    %1083 = vmatprep.subr.bf16.mxu0 0
    %1084 = vmatpush1.bf16.msra.mxu0 0
    %1085 = vmatprep.subr.bf16.mxu0 0
    %1086 = vmatpush1.bf16.msra.mxu0 0
    %1087 = vmatprep.subr.bf16.mxu0 0
    %1088 = vmatpush1.bf16.msra.mxu0 0
    %1089 = vmatprep.subr.bf16.mxu0 0
    %1090 = vmatpush1.bf16.msra.mxu0 0
    %1091 = vmatprep.subr.bf16.mxu0 0
    %1092 = vmatpush1.bf16.msra.mxu0 0
    %1093 = vmatprep.subr.bf16.mxu0 0
    %1094 = vmatpush1.bf16.msra.mxu0 0
    %1095 = vmatprep.subr.bf16.mxu0 0
    %1096 = vmatpush1.bf16.msra.mxu0 0
    %1097 = vmatprep.subr.bf16.mxu0 0
    %1098 = vmatpush1.bf16.msra.mxu0 0
    %1099 = vmatprep.subr.bf16.mxu0 0
    %1100 = vmatpush1.bf16.msra.mxu0 0
    %1101 = vmatprep.subr.bf16.mxu0 0
    %1102 = vmatpush1.bf16.msra.mxu0 0
    %1103 = vmatprep.subr.bf16.mxu0 0
    %1104 = vmatpush1.bf16.msra.mxu0 0
    %1105 = vmatprep.subr.bf16.mxu0 0
    %1106 = vmatpush1.bf16.msra.mxu0 0
    %1107 = vmatprep.subr.bf16.mxu0 0
    %1108 = vmatpush1.bf16.msra.mxu0 0
    %1109 = vmatprep.mubr.bf16.mxu0 0
    %1110 = vmatmul.mubr.bf16.gmra.mrb[0].mxu0 %v1072
    %v1111 = vpop.f32.mrb[0].mxu0
    %v1112 = vadd.f32 0.0, %v1111
    %v1113 = vpop.f32.mrb[0].mxu0
    %v1114 = vpop.f32.mrb[0].mxu0
    %v1115 = vpop.f32.mrb[0].mxu0
    %1116 = vdwg.mxu0
    %1117 = vrot.lane.b32.xlu0 %v454, 32
    %v1118 = vpop.permute.xlu0 %1117
    %1119 = vrot.lane.b32.xlu0 %v456, 32
    %v1120 = vpop.permute.xlu0 %1119
    %v1122 = vsel %vm460, %v1118, 0
    %v1125 = vsel %vm460, %v1120, 0
    %1127 = vmatprep.subr.bf16.mxu0 0
    %1128 = vmatpush1.bf16.xpose.msra.mxu0 %v1125
    %1129 = vmatprep.subr.bf16.mxu0 0
    %1130 = vmatpush1.bf16.xpose.msra.mxu0 0
    %1131 = vmatprep.subr.bf16.mxu0 0
    %1132 = vmatpush1.bf16.xpose.msra.mxu0 0
    %1133 = vmatprep.subr.bf16.mxu0 0
    %1134 = vmatpush1.bf16.xpose.msra.mxu0 0
    %1135 = vmatprep.subr.bf16.mxu0 0
    %1136 = vmatpush1.bf16.xpose.msra.mxu0 0
    %1137 = vmatprep.subr.bf16.mxu0 0
    %1138 = vmatpush1.bf16.xpose.msra.mxu0 0
    %1139 = vmatprep.subr.bf16.mxu0 0
    %1140 = vmatpush1.bf16.xpose.msra.mxu0 0
    %1141 = vmatprep.subr.bf16.mxu0 0
    %1142 = vmatpush1.bf16.xpose.msra.mxu0 0
    %1143 = vmatprep.subr.bf16.mxu0 0
    %1144 = vmatpush1.bf16.xpose.msra.mxu0 0
    %1145 = vmatprep.subr.bf16.mxu0 0
    %1146 = vmatpush1.bf16.xpose.msra.mxu0 0
    %1147 = vmatprep.subr.bf16.mxu0 0
    %1148 = vmatpush1.bf16.xpose.msra.mxu0 0
    %1149 = vmatprep.subr.bf16.mxu0 0
    %1150 = vmatpush1.bf16.xpose.msra.mxu0 0
    %1151 = vmatprep.subr.bf16.mxu0 0
    %1152 = vmatpush1.bf16.xpose.msra.mxu0 0
    %1153 = vmatprep.subr.bf16.mxu0 0
    %1154 = vmatpush1.bf16.xpose.msra.mxu0 0
    %1155 = vmatprep.subr.bf16.mxu0 0
    %1156 = vmatpush1.bf16.xpose.msra.mxu0 0
    %1157 = vmatprep.subr.bf16.mxu0 0
    %1158 = vmatpush1.bf16.xpose.msra.mxu0 0
    %1159 = vmatprep.mubr.bf16.mxu0 0
    %1160 = vmatmul.mubr.bf16.gmra.mrb[0].mxu0 %v1122
    %v1161 = vpop.f32.mrb[0].mxu0
    %v1162 = vadd.f32 0.0, %v1161
    %v1163 = vpop.f32.mrb[0].mxu0
    %v1164 = vpop.f32.mrb[0].mxu0
    %v1165 = vpop.f32.mrb[0].mxu0
    %1166 = vdwg.mxu0
    %1167 = vrot.lane.b32.xlu0 %v455, 32
    %v1168 = vpop.permute.xlu0 %1167
    %1169 = vrot.lane.b32.xlu0 %v457, 32
    %v1170 = vpop.permute.xlu0 %1169
    %v1172 = vsel %vm460, %v1168, 0
    %v1175 = vsel %vm460, %v1170, 0
    %1177 = vmatprep.subr.bf16.mxu0 0
    %1178 = vmatpush1.bf16.xpose.msra.mxu0 %v1175
    %1179 = vmatprep.subr.bf16.mxu0 0
    %1180 = vmatpush1.bf16.xpose.msra.mxu0 0
    %1181 = vmatprep.subr.bf16.mxu0 0
    %1182 = vmatpush1.bf16.xpose.msra.mxu0 0
    %1183 = vmatprep.subr.bf16.mxu0 0
    %1184 = vmatpush1.bf16.xpose.msra.mxu0 0
    %1185 = vmatprep.subr.bf16.mxu0 0
    %1186 = vmatpush1.bf16.xpose.msra.mxu0 0
    %1187 = vmatprep.subr.bf16.mxu0 0
    %1188 = vmatpush1.bf16.xpose.msra.mxu0 0
    %1189 = vmatprep.subr.bf16.mxu0 0
    %1190 = vmatpush1.bf16.xpose.msra.mxu0 0
    %1191 = vmatprep.subr.bf16.mxu0 0
    %1192 = vmatpush1.bf16.xpose.msra.mxu0 0
    %1193 = vmatprep.subr.bf16.mxu0 0
    %1194 = vmatpush1.bf16.xpose.msra.mxu0 0
    %1195 = vmatprep.subr.bf16.mxu0 0
    %1196 = vmatpush1.bf16.xpose.msra.mxu0 0
    %1197 = vmatprep.subr.bf16.mxu0 0
    %1198 = vmatpush1.bf16.xpose.msra.mxu0 0
    %1199 = vmatprep.subr.bf16.mxu0 0
    %1200 = vmatpush1.bf16.xpose.msra.mxu0 0
    %1201 = vmatprep.subr.bf16.mxu0 0
    %1202 = vmatpush1.bf16.xpose.msra.mxu0 0
    %1203 = vmatprep.subr.bf16.mxu0 0
    %1204 = vmatpush1.bf16.xpose.msra.mxu0 0
    %1205 = vmatprep.subr.bf16.mxu0 0
    %1206 = vmatpush1.bf16.xpose.msra.mxu0 0
    %1207 = vmatprep.subr.bf16.mxu0 0
    %1208 = vmatpush1.bf16.xpose.msra.mxu0 0
    %1209 = vmatprep.mubr.bf16.mxu0 0
    %1210 = vmatmul.mubr.bf16.gmra.mrb[0].mxu0 %v1172
    %v1211 = vpop.f32.mrb[0].mxu0
    %v1212 = vadd.f32 0.0, %v1211
    %v1213 = vpop.f32.mrb[0].mxu0
    %v1214 = vpop.f32.mrb[0].mxu0
    %v1215 = vpop.f32.mrb[0].mxu0
    %1216 = vdwg.mxu0
    %v1217 = vsel %vm553, %v1162, -inf
    %1218 = vmax.xlane.f32.xlu0 %v1217
    %v1219 = vpop.xlane.xlu0 %1218
    %v1220 = vsel %vm553, %v1212, -inf
    %1221 = vmax.xlane.f32.xlu0 %v1220
    %v1222 = vpop.xlane.xlu0 %1221
    %v1223 = vsub.f32 %v1162, %v1219
    %v1224 = vsub.f32 %v1212, %v1222
    %v1225 = vmul.f32 %v1223, 1.442695
    %v1226 = vpow.pop %v1225
    %v1227 = vmul.f32 %v1224, 1.442695
    %v1228 = vpow.pop %v1227
    %v1229 = vsel %vm553, %v1226, 0.0
    %1230 = vadd.xlane.f32.xlu0 %v1229
    %v1231 = vpop.xlane.xlu0 %1230
    %v1232 = vsel %vm553, %v1228, 0.0
    %1233 = vadd.xlane.f32.xlu0 %v1232
    %v1234 = vpop.xlane.xlu0 %1233
    %v1235 = vrcp.pop %v1231
    %v1236 = vrcp.pop %v1234
    %v1237 = vmul.f32 %v1226, %v1235
    %v1238 = vmul.f32 %v1228, %v1236
    %v1239 = vpack.c.bf16 %v1237, %v1237
    %v1240 = vpack.c.bf16 %v1238, %v1238
    %1241 = vrot.lane.b32.xlu0 %v458, 32
    %v1242 = vpop.permute.xlu0 %1241
    %v1244 = vsel %vm553, %v1239, 0
    %v1247 = vsel %vm581, %v1242, 0
    %1249 = vmatprep.subr.bf16.mxu0 0
    %1250 = vmatpush1.bf16.msra.mxu0 %v1247
    %1251 = vmatprep.subr.bf16.mxu0 0
    %1252 = vmatpush1.bf16.msra.mxu0 0
    %1253 = vmatprep.subr.bf16.mxu0 0
    %1254 = vmatpush1.bf16.msra.mxu0 0
    %1255 = vmatprep.subr.bf16.mxu0 0
    %1256 = vmatpush1.bf16.msra.mxu0 0
    %1257 = vmatprep.subr.bf16.mxu0 0
    %1258 = vmatpush1.bf16.msra.mxu0 0
    %1259 = vmatprep.subr.bf16.mxu0 0
    %1260 = vmatpush1.bf16.msra.mxu0 0
    %1261 = vmatprep.subr.bf16.mxu0 0
    %1262 = vmatpush1.bf16.msra.mxu0 0
    %1263 = vmatprep.subr.bf16.mxu0 0
    %1264 = vmatpush1.bf16.msra.mxu0 0
    %1265 = vmatprep.subr.bf16.mxu0 0
    %1266 = vmatpush1.bf16.msra.mxu0 0
    %1267 = vmatprep.subr.bf16.mxu0 0
    %1268 = vmatpush1.bf16.msra.mxu0 0
    %1269 = vmatprep.subr.bf16.mxu0 0
    %1270 = vmatpush1.bf16.msra.mxu0 0
    %1271 = vmatprep.subr.bf16.mxu0 0
    %1272 = vmatpush1.bf16.msra.mxu0 0
    %1273 = vmatprep.subr.bf16.mxu0 0
    %1274 = vmatpush1.bf16.msra.mxu0 0
    %1275 = vmatprep.subr.bf16.mxu0 0
    %1276 = vmatpush1.bf16.msra.mxu0 0
    %1277 = vmatprep.subr.bf16.mxu0 0
    %1278 = vmatpush1.bf16.msra.mxu0 0
    %1279 = vmatprep.subr.bf16.mxu0 0
    %1280 = vmatpush1.bf16.msra.mxu0 0
    %1281 = vmatprep.mubr.bf16.mxu0 0
    %1282 = vmatmul.mubr.bf16.gmra.mrb[0].mxu0 %v1244
    %v1283 = vpop.f32.mrb[0].mxu0
    %v1284 = vadd.f32 0.0, %v1283
    %v1285 = vpop.f32.mrb[0].mxu0
    %v1286 = vpop.f32.mrb[0].mxu0
    %v1287 = vpop.f32.mrb[0].mxu0
    %1288 = vdwg.mxu0
    %1289 = vrot.lane.b32.xlu0 %v459, 32
    %v1290 = vpop.permute.xlu0 %1289
    %v1292 = vsel %vm553, %v1240, 0
    %v1295 = vsel %vm581, %v1290, 0
    %1297 = vmatprep.subr.bf16.mxu0 0
    %1298 = vmatpush1.bf16.msra.mxu0 %v1295
    %1299 = vmatprep.subr.bf16.mxu0 0
    %1300 = vmatpush1.bf16.msra.mxu0 0
    %1301 = vmatprep.subr.bf16.mxu0 0
    %1302 = vmatpush1.bf16.msra.mxu0 0
    %1303 = vmatprep.subr.bf16.mxu0 0
    %1304 = vmatpush1.bf16.msra.mxu0 0
    %1305 = vmatprep.subr.bf16.mxu0 0
    %1306 = vmatpush1.bf16.msra.mxu0 0
    %1307 = vmatprep.subr.bf16.mxu0 0
    %1308 = vmatpush1.bf16.msra.mxu0 0
    %1309 = vmatprep.subr.bf16.mxu0 0
    %1310 = vmatpush1.bf16.msra.mxu0 0
    %1311 = vmatprep.subr.bf16.mxu0 0
    %1312 = vmatpush1.bf16.msra.mxu0 0
    %1313 = vmatprep.subr.bf16.mxu0 0
    %1314 = vmatpush1.bf16.msra.mxu0 0
    %1315 = vmatprep.subr.bf16.mxu0 0
    %1316 = vmatpush1.bf16.msra.mxu0 0
    %1317 = vmatprep.subr.bf16.mxu0 0
    %1318 = vmatpush1.bf16.msra.mxu0 0
    %1319 = vmatprep.subr.bf16.mxu0 0
    %1320 = vmatpush1.bf16.msra.mxu0 0
    %1321 = vmatprep.subr.bf16.mxu0 0
    %1322 = vmatpush1.bf16.msra.mxu0 0
    %1323 = vmatprep.subr.bf16.mxu0 0
    %1324 = vmatpush1.bf16.msra.mxu0 0
    %1325 = vmatprep.subr.bf16.mxu0 0
    %1326 = vmatpush1.bf16.msra.mxu0 0
    %1327 = vmatprep.subr.bf16.mxu0 0
    %1328 = vmatpush1.bf16.msra.mxu0 0
    %1329 = vmatprep.mubr.bf16.mxu0 0
    %1330 = vmatmul.mubr.bf16.gmra.mrb[0].mxu0 %v1292
    %v1331 = vpop.f32.mrb[0].mxu0
    %v1332 = vadd.f32 0.0, %v1331
    %v1333 = vpop.f32.mrb[0].mxu0
    %v1334 = vpop.f32.mrb[0].mxu0
    %v1335 = vpop.f32.mrb[0].mxu0
    %1336 = vdwg.mxu0
    %1339 = vrot.lane.b32.xlu0 %v843, 32
    %v1340 = vpop.permute.xlu0 %1339
    %1341 = vrot.lane.b32.xlu0 %v892, 32
    %v1342 = vpop.permute.xlu0 %1341
    %1347 = vrot.lane.b32.xlu0 %v1064, 64
    %v1348 = vpop.permute.xlu0 %1347
    %1349 = vrot.lane.b32.xlu0 %v1112, 64
    %v1350 = vpop.permute.xlu0 %1349
    %1355 = vrot.lane.b32.xlu0 %v1284, 96
    %v1356 = vpop.permute.xlu0 %1355
    %1357 = vrot.lane.b32.xlu0 %v1332, 96
    %v1358 = vpop.permute.xlu0 %1357
    %v1361 = vsel %vm460, %v620, %v1340
    %v1362 = vsel %vm460, %v666, %v1342
    %vm1363 = vcmask 523264
    %v1364 = vsel %vm1363, %v1361, %v1348
    %v1365 = vsel %vm1363, %v1362, %v1350
    %vm1366 = vcmask 785408
    %v1367 = vsel %vm1366, %v1364, %v1356
    %v1368 = vsel %vm1366, %v1365, %v1358
    %v1369 = vpack.c.bf16 %v1368, %v1367
    %v1370 = vld [vmem:[#allocation10] sm:$0xf]
    %v1371 = vld [vmem:[#allocation10 + $0x4] sm:$0xf]
    %v1372 = vld [vmem:[#allocation10 + $0x8] sm:$0xf]
    %v1373 = vld [vmem:[#allocation10 + $0xc] sm:$0xf]
    %v1374 = vld [vmem:[#allocation10 + $0x10] sm:$0xf]
    %v1375 = vld [vmem:[#allocation10 + $0x14] sm:$0xf]
    %v1376 = vld [vmem:[#allocation10 + $0x18] sm:$0xf]
    %v1377 = vld [vmem:[#allocation10 + $0x1c] sm:$0xf]
    %v1378 = vld [vmem:[#allocation10 + $0x20] sm:$0xf]
    %v1379 = vld [vmem:[#allocation10 + $0x24] sm:$0xf]
    %v1380 = vld [vmem:[#allocation10 + $0x28] sm:$0xf]
    %v1381 = vld [vmem:[#allocation10 + $0x2c] sm:$0xf]
    %v1382 = vld [vmem:[#allocation10 + $0x30] sm:$0xf]
    %v1383 = vld [vmem:[#allocation10 + $0x34] sm:$0xf]
    %v1384 = vld [vmem:[#allocation10 + $0x38] sm:$0xf]
    %v1385 = vld [vmem:[#allocation10 + $0x3c] sm:$0xf]
    %v1402 = vunpack.c.l.b16 %v1370
    %v1403 = vunpack.c.l.b16 %v1371
    %v1404 = vunpack.c.l.b16 %v1372
    %v1405 = vunpack.c.l.b16 %v1373
    %v1406 = vunpack.c.l.b16 %v1374
    %v1407 = vunpack.c.l.b16 %v1375
    %v1408 = vunpack.c.l.b16 %v1376
    %v1409 = vunpack.c.l.b16 %v1377
    %v1410 = vunpack.c.l.b16 %v1378
    %v1411 = vunpack.c.l.b16 %v1379
    %v1412 = vunpack.c.l.b16 %v1380
    %v1413 = vunpack.c.l.b16 %v1381
    %v1414 = vunpack.c.l.b16 %v1382
    %v1415 = vunpack.c.l.b16 %v1383
    %v1416 = vunpack.c.l.b16 %v1384
    %v1417 = vunpack.c.l.b16 %v1385
    %v1418 = vpack.c.b16 %v1403, %v1402
    %v1419 = vpack.c.b16 %v1405, %v1404
    %v1420 = vpack.c.b16 %v1407, %v1406
    %v1421 = vpack.c.b16 %v1409, %v1408
    %v1422 = vpack.c.b16 %v1411, %v1410
    %v1423 = vpack.c.b16 %v1413, %v1412
    %v1424 = vpack.c.b16 %v1415, %v1414
    %v1425 = vpack.c.b16 %v1417, %v1416
    %1434 = vmatprep.subr.bf16.mxu0 0
    %1435 = vmatpush1.bf16.msra.mxu0 %v1418
    %1436 = vmatprep.subr.bf16.mxu0 0
    %1437 = vmatpush1.bf16.msra.mxu0 %v1419
    %1438 = vmatprep.subr.bf16.mxu0 0
    %1439 = vmatpush1.bf16.msra.mxu0 %v1420
    %1440 = vmatprep.subr.bf16.mxu0 0
    %1441 = vmatpush1.bf16.msra.mxu0 %v1421
    %1442 = vmatprep.subr.bf16.mxu0 0
    %1443 = vmatpush1.bf16.msra.mxu0 %v1422
    %1444 = vmatprep.subr.bf16.mxu0 0
    %1445 = vmatpush1.bf16.msra.mxu0 %v1423
    %1446 = vmatprep.subr.bf16.mxu0 0
    %1447 = vmatpush1.bf16.msra.mxu0 %v1424
    %1448 = vmatprep.subr.bf16.mxu0 0
    %1449 = vmatpush1.bf16.msra.mxu0 %v1425
    %1450 = vmatprep.subr.bf16.mxu0 0
    %1451 = vmatpush1.bf16.msra.mxu0 0
    %1452 = vmatprep.subr.bf16.mxu0 0
    %1453 = vmatpush1.bf16.msra.mxu0 0
    %1454 = vmatprep.subr.bf16.mxu0 0
    %1455 = vmatpush1.bf16.msra.mxu0 0
    %1456 = vmatprep.subr.bf16.mxu0 0
    %1457 = vmatpush1.bf16.msra.mxu0 0
    %1458 = vmatprep.subr.bf16.mxu0 0
    %1459 = vmatpush1.bf16.msra.mxu0 0
    %1460 = vmatprep.subr.bf16.mxu0 0
    %1461 = vmatpush1.bf16.msra.mxu0 0
    %1462 = vmatprep.subr.bf16.mxu0 0
    %1463 = vmatpush1.bf16.msra.mxu0 0
    %1464 = vmatprep.subr.bf16.mxu0 0
    %1465 = vmatpush1.bf16.msra.mxu0 0
    %1466 = vmatprep.mubr.bf16.mxu0 0
    %1467 = vmatmul.mubr.bf16.gmra.mrb[0].mxu0 %v1369
    %v1468 = vpop.f32.mrb[0].mxu0
    %v1469 = vadd.f32 %v143, %v1468
    %v1470 = vpop.f32.mrb[0].mxu0
    %v1471 = vpop.f32.mrb[0].mxu0
    %v1472 = vadd.f32 %v143, %v1471
    %v1473 = vpop.f32.mrb[0].mxu0
    %1474 = vdwg.mxu0
    %v1475 = vadd.f32 %v129, %v1469
    %v1476 = vadd.f32 %v130, %v1472
    %1477 = vadd.xlane.f32.xlu0 %v1475
    %v1478 = vpop.xlane.xlu0 %1477
    %1479 = vadd.xlane.f32.xlu0 %v1476
    %v1480 = vpop.xlane.xlu0 %1479
    %v1481 = vmul.f32 %v1478, %v180
    %v1482 = vmul.f32 %v1480, %v180
    %v1483 = vsub.f32 %v1475, %v1481
    %v1484 = vsub.f32 %v1476, %v1482
    %v1485 = vmul.f32 %v1483, %v1483
    %v1486 = vmul.f32 %v1484, %v1484
    %1487 = vadd.xlane.f32.xlu0 %v1485
    %v1488 = vpop.xlane.xlu0 %1487
    %1489 = vadd.xlane.f32.xlu0 %v1486
    %v1490 = vpop.xlane.xlu0 %1489
    %v1491 = vmul.f32 %v1488, %v180
    %v1492 = vmul.f32 %v1490, %v180
    %v1493 = vadd.f32 %v1491, 1e-05
    %v1494 = vadd.f32 %v1492, 1e-05
    %v1495 = vrsqrt.pop %v1493
    %v1496 = vrsqrt.pop %v1494
    %v1497 = vmul.f32 %v1483, %v1495
    %v1498 = vmul.f32 %v1484, %v1496
    %v1499 = vmul.f32 %v1497, %v159
    %v1500 = vmul.f32 %v1498, %v159
    %v1501 = vadd.f32 %v1499, %v163
    %v1502 = vadd.f32 %v1500, %v163
    %v1503 = vpack.c.bf16 %v1502, %v1501
    %v1504 = vld [vmem:[#allocation11] sm:$0xff]
    %v1505 = vld [vmem:[#allocation11 + $0x8] sm:$0xff]
    %v1506 = vld [vmem:[#allocation11 + $0x10] sm:$0xff]
    %v1507 = vld [vmem:[#allocation11 + $0x18] sm:$0xff]
    %v1508 = vld [vmem:[#allocation11 + $0x20] sm:$0xff]
    %v1509 = vld [vmem:[#allocation11 + $0x28] sm:$0xff]
    %v1510 = vld [vmem:[#allocation11 + $0x30] sm:$0xff]
    %v1511 = vld [vmem:[#allocation11 + $0x38] sm:$0xff]
    %v1512 = vld [vmem:[#allocation11 + $0x40] sm:$0xff]
    %v1513 = vld [vmem:[#allocation11 + $0x48] sm:$0xff]
    %v1514 = vld [vmem:[#allocation11 + $0x50] sm:$0xff]
    %v1515 = vld [vmem:[#allocation11 + $0x58] sm:$0xff]
    %v1516 = vld [vmem:[#allocation11 + $0x60] sm:$0xff]
    %v1517 = vld [vmem:[#allocation11 + $0x68] sm:$0xff]
    %v1518 = vld [vmem:[#allocation11 + $0x70] sm:$0xff]
    %v1519 = vld [vmem:[#allocation11 + $0x78] sm:$0xff]
    %v1536 = vunpack.c.l.b16 %v1504
    %v1537 = vunpack.c.h.b16 %v1504
    %v1538 = vunpack.c.l.b16 %v1505
    %v1539 = vunpack.c.h.b16 %v1505
    %v1540 = vunpack.c.l.b16 %v1506
    %v1541 = vunpack.c.h.b16 %v1506
    %v1542 = vunpack.c.l.b16 %v1507
    %v1543 = vunpack.c.h.b16 %v1507
    %v1544 = vunpack.c.l.b16 %v1508
    %v1545 = vunpack.c.h.b16 %v1508
    %v1546 = vunpack.c.l.b16 %v1509
    %v1547 = vunpack.c.h.b16 %v1509
    %v1548 = vunpack.c.l.b16 %v1510
    %v1549 = vunpack.c.h.b16 %v1510
    %v1550 = vunpack.c.l.b16 %v1511
    %v1551 = vunpack.c.h.b16 %v1511
    %v1552 = vunpack.c.l.b16 %v1512
    %v1553 = vunpack.c.h.b16 %v1512
    %v1554 = vunpack.c.l.b16 %v1513
    %v1555 = vunpack.c.h.b16 %v1513
    %v1556 = vunpack.c.l.b16 %v1514
    %v1557 = vunpack.c.h.b16 %v1514
    %v1558 = vunpack.c.l.b16 %v1515
    %v1559 = vunpack.c.h.b16 %v1515
    %v1560 = vunpack.c.l.b16 %v1516
    %v1561 = vunpack.c.h.b16 %v1516
    %v1562 = vunpack.c.l.b16 %v1517
    %v1563 = vunpack.c.h.b16 %v1517
    %v1564 = vunpack.c.l.b16 %v1518
    %v1565 = vunpack.c.h.b16 %v1518
    %v1566 = vunpack.c.l.b16 %v1519
    %v1567 = vunpack.c.h.b16 %v1519
    %v1568 = vpack.c.b16 %v1538, %v1536
    %v1569 = vpack.c.b16 %v1539, %v1537
    %v1570 = vpack.c.b16 %v1542, %v1540
    %v1571 = vpack.c.b16 %v1543, %v1541
    %v1572 = vpack.c.b16 %v1546, %v1544
    %v1573 = vpack.c.b16 %v1547, %v1545
    %v1574 = vpack.c.b16 %v1550, %v1548
    %v1575 = vpack.c.b16 %v1551, %v1549
    %v1576 = vpack.c.b16 %v1554, %v1552
    %v1577 = vpack.c.b16 %v1555, %v1553
    %v1578 = vpack.c.b16 %v1558, %v1556
    %v1579 = vpack.c.b16 %v1559, %v1557
    %v1580 = vpack.c.b16 %v1562, %v1560
    %v1581 = vpack.c.b16 %v1563, %v1561
    %v1582 = vpack.c.b16 %v1566, %v1564
    %v1583 = vpack.c.b16 %v1567, %v1565
    %1600 = vmatprep.subr.bf16.mxu0 %v1569
    %1601 = vmatpush1.bf16.msra.mxu0 %v1568
    %1602 = vmatprep.subr.bf16.mxu0 %v1571
    %1603 = vmatpush1.bf16.msra.mxu0 %v1570
    %1604 = vmatprep.subr.bf16.mxu0 %v1573
    %1605 = vmatpush1.bf16.msra.mxu0 %v1572
    %1606 = vmatprep.subr.bf16.mxu0 %v1575
    %1607 = vmatpush1.bf16.msra.mxu0 %v1574
    %1608 = vmatprep.subr.bf16.mxu0 %v1577
    %1609 = vmatpush1.bf16.msra.mxu0 %v1576
    %1610 = vmatprep.subr.bf16.mxu0 %v1579
    %1611 = vmatpush1.bf16.msra.mxu0 %v1578
    %1612 = vmatprep.subr.bf16.mxu0 %v1581
    %1613 = vmatpush1.bf16.msra.mxu0 %v1580
    %1614 = vmatprep.subr.bf16.mxu0 %v1583
    %1615 = vmatpush1.bf16.msra.mxu0 %v1582
    %1616 = vmatprep.subr.bf16.mxu0 0
    %1617 = vmatpush1.bf16.msra.mxu0 0
    %1618 = vmatprep.subr.bf16.mxu0 0
    %1619 = vmatpush1.bf16.msra.mxu0 0
    %1620 = vmatprep.subr.bf16.mxu0 0
    %1621 = vmatpush1.bf16.msra.mxu0 0
    %1622 = vmatprep.subr.bf16.mxu0 0
    %1623 = vmatpush1.bf16.msra.mxu0 0
    %1624 = vmatprep.subr.bf16.mxu0 0
    %1625 = vmatpush1.bf16.msra.mxu0 0
    %1626 = vmatprep.subr.bf16.mxu0 0
    %1627 = vmatpush1.bf16.msra.mxu0 0
    %1628 = vmatprep.subr.bf16.mxu0 0
    %1629 = vmatpush1.bf16.msra.mxu0 0
    %1630 = vmatprep.subr.bf16.mxu0 0
    %1631 = vmatpush1.bf16.msra.mxu0 0
    %1632 = vmatprep.mubr.bf16.mxu0 0
    %1633 = vmatmul.mubr.bf16.gmra.mrb[0].mxu0 %v1503
    %v1634 = vpop.f32.mrb[0].mxu0
    %v1635 = vadd.f32 %v169, %v1634
    %v1636 = vpop.f32.mrb[0].mxu0
    %v1637 = vadd.f32 %v173, %v1636
    %v1638 = vpop.f32.mrb[0].mxu0
    %v1639 = vadd.f32 %v169, %v1638
    %v1640 = vpop.f32.mrb[0].mxu0
    %v1641 = vadd.f32 %v173, %v1640
    %1642 = vdwg.mxu0
    %v1643 = vmax.f32 %v1635, 0.0
    %v1644 = vmax.f32 %v1637, 0.0
    %v1645 = vmax.f32 %v1639, 0.0
    %v1646 = vmax.f32 %v1641, 0.0
    %v1647 = vpack.c.bf16 %v1645, %v1643
    %v1648 = vpack.c.bf16 %v1646, %v1644
    %v1649 = vld [vmem:[#allocation13] sm:$0xf]
    %v1650 = vld [vmem:[#allocation13 + $0x4] sm:$0xf]
    %v1651 = vld [vmem:[#allocation13 + $0x8] sm:$0xf]
    %v1652 = vld [vmem:[#allocation13 + $0xc] sm:$0xf]
    %v1653 = vld [vmem:[#allocation13 + $0x10] sm:$0xf]
    %v1654 = vld [vmem:[#allocation13 + $0x14] sm:$0xf]
    %v1655 = vld [vmem:[#allocation13 + $0x18] sm:$0xf]
    %v1656 = vld [vmem:[#allocation13 + $0x1c] sm:$0xf]
    %v1657 = vld [vmem:[#allocation13 + $0x20] sm:$0xf]
    %v1658 = vld [vmem:[#allocation13 + $0x24] sm:$0xf]
    %v1659 = vld [vmem:[#allocation13 + $0x28] sm:$0xf]
    %v1660 = vld [vmem:[#allocation13 + $0x2c] sm:$0xf]
    %v1661 = vld [vmem:[#allocation13 + $0x30] sm:$0xf]
    %v1662 = vld [vmem:[#allocation13 + $0x34] sm:$0xf]
    %v1663 = vld [vmem:[#allocation13 + $0x38] sm:$0xf]
    %v1664 = vld [vmem:[#allocation13 + $0x3c] sm:$0xf]
    %v1665 = vld [vmem:[#allocation13 + $0x40] sm:$0xf]
    %v1666 = vld [vmem:[#allocation13 + $0x44] sm:$0xf]
    %v1667 = vld [vmem:[#allocation13 + $0x48] sm:$0xf]
    %v1668 = vld [vmem:[#allocation13 + $0x4c] sm:$0xf]
    %v1669 = vld [vmem:[#allocation13 + $0x50] sm:$0xf]
    %v1670 = vld [vmem:[#allocation13 + $0x54] sm:$0xf]
    %v1671 = vld [vmem:[#allocation13 + $0x58] sm:$0xf]
    %v1672 = vld [vmem:[#allocation13 + $0x5c] sm:$0xf]
    %v1673 = vld [vmem:[#allocation13 + $0x60] sm:$0xf]
    %v1674 = vld [vmem:[#allocation13 + $0x64] sm:$0xf]
    %v1675 = vld [vmem:[#allocation13 + $0x68] sm:$0xf]
    %v1676 = vld [vmem:[#allocation13 + $0x6c] sm:$0xf]
    %v1677 = vld [vmem:[#allocation13 + $0x70] sm:$0xf]
    %v1678 = vld [vmem:[#allocation13 + $0x74] sm:$0xf]
    %v1679 = vld [vmem:[#allocation13 + $0x78] sm:$0xf]
    %v1680 = vld [vmem:[#allocation13 + $0x7c] sm:$0xf]
    %v1713 = vunpack.c.l.b16 %v1649
    %v1714 = vunpack.c.l.b16 %v1650
    %v1715 = vunpack.c.l.b16 %v1651
    %v1716 = vunpack.c.l.b16 %v1652
    %v1717 = vunpack.c.l.b16 %v1653
    %v1718 = vunpack.c.l.b16 %v1654
    %v1719 = vunpack.c.l.b16 %v1655
    %v1720 = vunpack.c.l.b16 %v1656
    %v1721 = vunpack.c.l.b16 %v1657
    %v1722 = vunpack.c.l.b16 %v1658
    %v1723 = vunpack.c.l.b16 %v1659
    %v1724 = vunpack.c.l.b16 %v1660
    %v1725 = vunpack.c.l.b16 %v1661
    %v1726 = vunpack.c.l.b16 %v1662
    %v1727 = vunpack.c.l.b16 %v1663
    %v1728 = vunpack.c.l.b16 %v1664
    %v1729 = vunpack.c.l.b16 %v1665
    %v1730 = vunpack.c.l.b16 %v1666
    %v1731 = vunpack.c.l.b16 %v1667
    %v1732 = vunpack.c.l.b16 %v1668
    %v1733 = vunpack.c.l.b16 %v1669
    %v1734 = vunpack.c.l.b16 %v1670
    %v1735 = vunpack.c.l.b16 %v1671
    %v1736 = vunpack.c.l.b16 %v1672
    %v1737 = vunpack.c.l.b16 %v1673
    %v1738 = vunpack.c.l.b16 %v1674
    %v1739 = vunpack.c.l.b16 %v1675
    %v1740 = vunpack.c.l.b16 %v1676
    %v1741 = vunpack.c.l.b16 %v1677
    %v1742 = vunpack.c.l.b16 %v1678
    %v1743 = vunpack.c.l.b16 %v1679
    %v1744 = vunpack.c.l.b16 %v1680
    %v1745 = vpack.c.b16 %v1714, %v1713
    %v1746 = vpack.c.b16 %v1716, %v1715
    %v1747 = vpack.c.b16 %v1718, %v1717
    %v1748 = vpack.c.b16 %v1720, %v1719
    %v1749 = vpack.c.b16 %v1722, %v1721
    %v1750 = vpack.c.b16 %v1724, %v1723
    %v1751 = vpack.c.b16 %v1726, %v1725
    %v1752 = vpack.c.b16 %v1728, %v1727
    %v1753 = vpack.c.b16 %v1730, %v1729
    %v1754 = vpack.c.b16 %v1732, %v1731
    %v1755 = vpack.c.b16 %v1734, %v1733
    %v1756 = vpack.c.b16 %v1736, %v1735
    %v1757 = vpack.c.b16 %v1738, %v1737
    %v1758 = vpack.c.b16 %v1740, %v1739
    %v1759 = vpack.c.b16 %v1742, %v1741
    %v1760 = vpack.c.b16 %v1744, %v1743
    %1777 = vmatprep.subr.bf16.mxu0 0
    %1778 = vmatpush1.bf16.msra.mxu0 %v1745
    %1779 = vmatprep.subr.bf16.mxu0 0
    %1780 = vmatpush1.bf16.msra.mxu0 %v1746
    %1781 = vmatprep.subr.bf16.mxu0 0
    %1782 = vmatpush1.bf16.msra.mxu0 %v1747
    %1783 = vmatprep.subr.bf16.mxu0 0
    %1784 = vmatpush1.bf16.msra.mxu0 %v1748
    %1785 = vmatprep.subr.bf16.mxu0 0
    %1786 = vmatpush1.bf16.msra.mxu0 %v1749
    %1787 = vmatprep.subr.bf16.mxu0 0
    %1788 = vmatpush1.bf16.msra.mxu0 %v1750
    %1789 = vmatprep.subr.bf16.mxu0 0
    %1790 = vmatpush1.bf16.msra.mxu0 %v1751
    %1791 = vmatprep.subr.bf16.mxu0 0
    %1792 = vmatpush1.bf16.msra.mxu0 %v1752
    %1793 = vmatprep.subr.bf16.mxu0 0
    %1794 = vmatpush1.bf16.msra.mxu0 %v1753
    %1795 = vmatprep.subr.bf16.mxu0 0
    %1796 = vmatpush1.bf16.msra.mxu0 %v1754
    %1797 = vmatprep.subr.bf16.mxu0 0
    %1798 = vmatpush1.bf16.msra.mxu0 %v1755
    %1799 = vmatprep.subr.bf16.mxu0 0
    %1800 = vmatpush1.bf16.msra.mxu0 %v1756
    %1801 = vmatprep.subr.bf16.mxu0 0
    %1802 = vmatpush1.bf16.msra.mxu0 %v1757
    %1803 = vmatprep.subr.bf16.mxu0 0
    %1804 = vmatpush1.bf16.msra.mxu0 %v1758
    %1805 = vmatprep.subr.bf16.mxu0 0
    %1806 = vmatpush1.bf16.msra.mxu0 %v1759
    %1807 = vmatprep.subr.bf16.mxu0 0
    %1808 = vmatpush1.bf16.msra.mxu0 %v1760
    %1809 = vmatprep.mubr.bf16.mxu0 %v1648
    %1810 = vmatmul.mubr.bf16.gmra.mrb[0].mxu0 %v1647
    %v1811 = vpop.f32.mrb[0].mxu0
    %v1812 = vadd.f32 %v147, %v1811
    %v1813 = vpop.f32.mrb[0].mxu0
    %v1814 = vpop.f32.mrb[0].mxu0
    %v1815 = vadd.f32 %v147, %v1814
    %v1816 = vpop.f32.mrb[0].mxu0
    %1817 = vdwg.mxu0
    %v1818 = vadd.f32 %v1475, %v1812
    %v1819 = vadd.f32 %v1476, %v1815
    %1820 = vadd.xlane.f32.xlu0 %v1818
    %v1821 = vpop.xlane.xlu0 %1820
    %1822 = vadd.xlane.f32.xlu0 %v1819
    %v1823 = vpop.xlane.xlu0 %1822
    %v1824 = vmul.f32 %v1821, %v180
    %v1825 = vmul.f32 %v1823, %v180
    %v1826 = vsub.f32 %v1818, %v1824
    %v1827 = vsub.f32 %v1819, %v1825
    %v1828 = vmul.f32 %v1826, %v1826
    %v1829 = vmul.f32 %v1827, %v1827
    %1830 = vadd.xlane.f32.xlu0 %v1828
    %v1831 = vpop.xlane.xlu0 %1830
    %1832 = vadd.xlane.f32.xlu0 %v1829
    %v1833 = vpop.xlane.xlu0 %1832
    %v1834 = vmul.f32 %v1831, %v180
    %v1835 = vmul.f32 %v1833, %v180
    %v1836 = vadd.f32 %v1834, 1e-05
    %v1837 = vadd.f32 %v1835, 1e-05
    %v1838 = vrsqrt.pop %v1836
    %v1839 = vrsqrt.pop %v1837
    %v1840 = vmul.f32 %v1826, %v1838
    %v1841 = vmul.f32 %v1827, %v1839
    %v1842 = vmul.f32 %v1840, %v151
    %v1843 = vmul.f32 %v1841, %v151
    %v1844 = vadd.f32 %v1842, %v155
    %v1845 = vadd.f32 %v1843, %v155
    %v1846 = vpack.c.bf16 %v1845, %v1844
    %v1847 = vld [vmem:[#allocation8] sm:$0xff]
    %v1848 = vld [vmem:[#allocation8 + $0x8] sm:$0xf]
    %v1849 = vld [vmem:[#allocation8 + $0xc] sm:$0xff]
    %v1850 = vld [vmem:[#allocation8 + $0x14] sm:$0xf]
    %v1851 = vld [vmem:[#allocation8 + $0x18] sm:$0xff]
    %v1852 = vld [vmem:[#allocation8 + $0x20] sm:$0xf]
    %v1853 = vld [vmem:[#allocation8 + $0x24] sm:$0xff]
    %v1854 = vld [vmem:[#allocation8 + $0x2c] sm:$0xf]
    %v1855 = vld [vmem:[#allocation8 + $0x30] sm:$0xff]
    %v1856 = vld [vmem:[#allocation8 + $0x38] sm:$0xf]
    %v1857 = vld [vmem:[#allocation8 + $0x3c] sm:$0xff]
    %v1858 = vld [vmem:[#allocation8 + $0x44] sm:$0xf]
    %v1859 = vld [vmem:[#allocation8 + $0x48] sm:$0xff]
    %v1860 = vld [vmem:[#allocation8 + $0x50] sm:$0xf]
    %v1861 = vld [vmem:[#allocation8 + $0x54] sm:$0xff]
    %v1862 = vld [vmem:[#allocation8 + $0x5c] sm:$0xf]
    %v1863 = vld [vmem:[#allocation8 + $0x60] sm:$0xff]
    %v1864 = vld [vmem:[#allocation8 + $0x68] sm:$0xf]
    %v1865 = vld [vmem:[#allocation8 + $0x6c] sm:$0xff]
    %v1866 = vld [vmem:[#allocation8 + $0x74] sm:$0xf]
    %v1867 = vld [vmem:[#allocation8 + $0x78] sm:$0xff]
    %v1868 = vld [vmem:[#allocation8 + $0x80] sm:$0xf]
    %v1869 = vld [vmem:[#allocation8 + $0x84] sm:$0xff]
    %v1870 = vld [vmem:[#allocation8 + $0x8c] sm:$0xf]
    %v1871 = vld [vmem:[#allocation8 + $0x90] sm:$0xff]
    %v1872 = vld [vmem:[#allocation8 + $0x98] sm:$0xf]
    %v1873 = vld [vmem:[#allocation8 + $0x9c] sm:$0xff]
    %v1874 = vld [vmem:[#allocation8 + $0xa4] sm:$0xf]
    %v1875 = vld [vmem:[#allocation8 + $0xa8] sm:$0xff]
    %v1876 = vld [vmem:[#allocation8 + $0xb0] sm:$0xf]
    %v1877 = vld [vmem:[#allocation8 + $0xb4] sm:$0xff]
    %v1878 = vld [vmem:[#allocation8 + $0xbc] sm:$0xf]
    %v1911 = vunpack.c.l.b16 %v1847
    %v1912 = vunpack.c.h.b16 %v1847
    %v1913 = vunpack.c.l.b16 %v1848
    %v1914 = vunpack.c.l.b16 %v1849
    %v1915 = vunpack.c.h.b16 %v1849
    %v1916 = vunpack.c.l.b16 %v1850
    %v1917 = vunpack.c.l.b16 %v1851
    %v1918 = vunpack.c.h.b16 %v1851
    %v1919 = vunpack.c.l.b16 %v1852
    %v1920 = vunpack.c.l.b16 %v1853
    %v1921 = vunpack.c.h.b16 %v1853
    %v1922 = vunpack.c.l.b16 %v1854
    %v1923 = vunpack.c.l.b16 %v1855
    %v1924 = vunpack.c.h.b16 %v1855
    %v1925 = vunpack.c.l.b16 %v1856
    %v1926 = vunpack.c.l.b16 %v1857
    %v1927 = vunpack.c.h.b16 %v1857
    %v1928 = vunpack.c.l.b16 %v1858
    %v1929 = vunpack.c.l.b16 %v1859
    %v1930 = vunpack.c.h.b16 %v1859
    %v1931 = vunpack.c.l.b16 %v1860
    %v1932 = vunpack.c.l.b16 %v1861
    %v1933 = vunpack.c.h.b16 %v1861
    %v1934 = vunpack.c.l.b16 %v1862
    %v1935 = vunpack.c.l.b16 %v1863
    %v1936 = vunpack.c.h.b16 %v1863
    %v1937 = vunpack.c.l.b16 %v1864
    %v1938 = vunpack.c.l.b16 %v1865
    %v1939 = vunpack.c.h.b16 %v1865
    %v1940 = vunpack.c.l.b16 %v1866
    %v1941 = vunpack.c.l.b16 %v1867
    %v1942 = vunpack.c.h.b16 %v1867
    %v1943 = vunpack.c.l.b16 %v1868
    %v1944 = vunpack.c.l.b16 %v1869
    %v1945 = vunpack.c.h.b16 %v1869
    %v1946 = vunpack.c.l.b16 %v1870
    %v1947 = vunpack.c.l.b16 %v1871
    %v1948 = vunpack.c.h.b16 %v1871
    %v1949 = vunpack.c.l.b16 %v1872
    %v1950 = vunpack.c.l.b16 %v1873
    %v1951 = vunpack.c.h.b16 %v1873
    %v1952 = vunpack.c.l.b16 %v1874
    %v1953 = vunpack.c.l.b16 %v1875
    %v1954 = vunpack.c.h.b16 %v1875
    %v1955 = vunpack.c.l.b16 %v1876
    %v1956 = vunpack.c.l.b16 %v1877
    %v1957 = vunpack.c.h.b16 %v1877
    %v1958 = vunpack.c.l.b16 %v1878
    %v1959 = vpack.c.b16 %v1914, %v1911
    %v1960 = vpack.c.b16 %v1915, %v1912
    %v1961 = vpack.c.b16 %v1916, %v1913
    %v1962 = vpack.c.b16 %v1920, %v1917
    %v1963 = vpack.c.b16 %v1921, %v1918
    %v1964 = vpack.c.b16 %v1922, %v1919
    %v1965 = vpack.c.b16 %v1926, %v1923
    %v1966 = vpack.c.b16 %v1927, %v1924
    %v1967 = vpack.c.b16 %v1928, %v1925
    %v1968 = vpack.c.b16 %v1932, %v1929
    %v1969 = vpack.c.b16 %v1933, %v1930
    %v1970 = vpack.c.b16 %v1934, %v1931
    %v1971 = vpack.c.b16 %v1938, %v1935
    %v1972 = vpack.c.b16 %v1939, %v1936
    %v1973 = vpack.c.b16 %v1940, %v1937
    %v1974 = vpack.c.b16 %v1944, %v1941
    %v1975 = vpack.c.b16 %v1945, %v1942
    %v1976 = vpack.c.b16 %v1946, %v1943
    %v1977 = vpack.c.b16 %v1950, %v1947
    %v1978 = vpack.c.b16 %v1951, %v1948
    %v1979 = vpack.c.b16 %v1952, %v1949
    %v1980 = vpack.c.b16 %v1956, %v1953
    %v1981 = vpack.c.b16 %v1957, %v1954
    %v1982 = vpack.c.b16 %v1958, %v1955
    %2007 = vmatprep.subr.bf16.mxu0 %v1960
    %2008 = vmatpush1.bf16.msra.mxu0 %v1959
    %2009 = vmatprep.subr.bf16.mxu0 %v1963
    %2010 = vmatpush1.bf16.msra.mxu0 %v1962
    %2011 = vmatprep.subr.bf16.mxu0 %v1966
    %2012 = vmatpush1.bf16.msra.mxu0 %v1965
    %2013 = vmatprep.subr.bf16.mxu0 %v1969
    %2014 = vmatpush1.bf16.msra.mxu0 %v1968
    %2015 = vmatprep.subr.bf16.mxu0 %v1972
    %2016 = vmatpush1.bf16.msra.mxu0 %v1971
    %2017 = vmatprep.subr.bf16.mxu0 %v1975
    %2018 = vmatpush1.bf16.msra.mxu0 %v1974
    %2019 = vmatprep.subr.bf16.mxu0 %v1978
    %2020 = vmatpush1.bf16.msra.mxu0 %v1977
    %2021 = vmatprep.subr.bf16.mxu0 %v1981
    %2022 = vmatpush1.bf16.msra.mxu0 %v1980
    %2023 = vmatprep.subr.bf16.mxu0 0
    %2024 = vmatpush1.bf16.msra.mxu0 0
    %2025 = vmatprep.subr.bf16.mxu0 0
    %2026 = vmatpush1.bf16.msra.mxu0 0
    %2027 = vmatprep.subr.bf16.mxu0 0
    %2028 = vmatpush1.bf16.msra.mxu0 0
    %2029 = vmatprep.subr.bf16.mxu0 0
    %2030 = vmatpush1.bf16.msra.mxu0 0
    %2031 = vmatprep.subr.bf16.mxu0 0
    %2032 = vmatpush1.bf16.msra.mxu0 0
    %2033 = vmatprep.subr.bf16.mxu0 0
    %2034 = vmatpush1.bf16.msra.mxu0 0
    %2035 = vmatprep.subr.bf16.mxu0 0
    %2036 = vmatpush1.bf16.msra.mxu0 0
    %2037 = vmatprep.subr.bf16.mxu0 0
    %2038 = vmatpush1.bf16.msra.mxu0 0
    %2039 = vmatprep.mubr.bf16.mxu0 0
    %2040 = vmatmul.mubr.bf16.gmra.mrb[0].mxu0 %v1846
    %v2041 = vpop.f32.mrb[0].mxu0
    %v2042 = vadd.f32 0.0, %v2041
    %v2043 = vpop.f32.mrb[0].mxu0
    %v2044 = vadd.f32 0.0, %v2043
    %v2045 = vpop.f32.mrb[0].mxu0
    %v2046 = vadd.f32 0.0, %v2045
    %v2047 = vpop.f32.mrb[0].mxu0
    %v2048 = vadd.f32 0.0, %v2047
    %2049 = vdwg.mxu0
    %2050 = vmatprep.subr.bf16.mxu0 0
    %2051 = vmatpush1.bf16.msra.mxu0 %v1961
    %2052 = vmatprep.subr.bf16.mxu0 0
    %2053 = vmatpush1.bf16.msra.mxu0 %v1964
    %2054 = vmatprep.subr.bf16.mxu0 0
    %2055 = vmatpush1.bf16.msra.mxu0 %v1967
    %2056 = vmatprep.subr.bf16.mxu0 0
    %2057 = vmatpush1.bf16.msra.mxu0 %v1970
    %2058 = vmatprep.subr.bf16.mxu0 0
    %2059 = vmatpush1.bf16.msra.mxu0 %v1973
    %2060 = vmatprep.subr.bf16.mxu0 0
    %2061 = vmatpush1.bf16.msra.mxu0 %v1976
    %2062 = vmatprep.subr.bf16.mxu0 0
    %2063 = vmatpush1.bf16.msra.mxu0 %v1979
    %2064 = vmatprep.subr.bf16.mxu0 0
    %2065 = vmatpush1.bf16.msra.mxu0 %v1982
    %2066 = vmatprep.subr.bf16.mxu0 0
    %2067 = vmatpush1.bf16.msra.mxu0 0
    %2068 = vmatprep.subr.bf16.mxu0 0
    %2069 = vmatpush1.bf16.msra.mxu0 0
    %2070 = vmatprep.subr.bf16.mxu0 0
    %2071 = vmatpush1.bf16.msra.mxu0 0
    %2072 = vmatprep.subr.bf16.mxu0 0
    %2073 = vmatpush1.bf16.msra.mxu0 0
    %2074 = vmatprep.subr.bf16.mxu0 0
    %2075 = vmatpush1.bf16.msra.mxu0 0
    %2076 = vmatprep.subr.bf16.mxu0 0
    %2077 = vmatpush1.bf16.msra.mxu0 0
    %2078 = vmatprep.subr.bf16.mxu0 0
    %2079 = vmatpush1.bf16.msra.mxu0 0
    %2080 = vmatprep.subr.bf16.mxu0 0
    %2081 = vmatpush1.bf16.msra.mxu0 0
    %2082 = vmatprep.mubr.bf16.mxu0 0
    %2083 = vmatmul.mubr.bf16.gmra.mrb[0].mxu0 %v1846
    %v2084 = vpop.f32.mrb[0].mxu0
    %v2085 = vadd.f32 0.0, %v2084
    %v2086 = vpop.f32.mrb[0].mxu0
    %v2087 = vpop.f32.mrb[0].mxu0
    %v2088 = vadd.f32 0.0, %v2087
    %v2089 = vpop.f32.mrb[0].mxu0
    %2090 = vdwg.mxu0
    %v2091 = vadd.f32 %v2042, %v131
    %v2092 = vadd.f32 %v2046, %v132
    %v2093 = vadd.f32 %v2044, %v133
    %v2094 = vadd.f32 %v2048, %v134
    %v2095 = vadd.f32 %v2085, %v139
    %v2096 = vadd.f32 %v2088, %v139
    %v2097 = vpack.c.bf16 %v2091, %v2091
    %v2098 = vpack.c.bf16 %v2092, %v2092
    %v2099 = vpack.c.bf16 %v2093, %v2093
    %v2100 = vpack.c.bf16 %v2094, %v2094
    %v2101 = vpack.c.bf16 %v2095, %v2095
    %v2102 = vpack.c.bf16 %v2096, %v2096
    %v2104 = vsel %vm460, %v2097, 0
    %v2107 = vsel %vm460, %v2099, 0
    %2109 = vmatprep.subr.bf16.mxu0 0
    %2110 = vmatpush1.bf16.xpose.msra.mxu0 %v2107
    %2111 = vmatprep.subr.bf16.mxu0 0
    %2112 = vmatpush1.bf16.xpose.msra.mxu0 0
    %2113 = vmatprep.subr.bf16.mxu0 0
    %2114 = vmatpush1.bf16.xpose.msra.mxu0 0
    %2115 = vmatprep.subr.bf16.mxu0 0
    %2116 = vmatpush1.bf16.xpose.msra.mxu0 0
    %2117 = vmatprep.subr.bf16.mxu0 0
    %2118 = vmatpush1.bf16.xpose.msra.mxu0 0
    %2119 = vmatprep.subr.bf16.mxu0 0
    %2120 = vmatpush1.bf16.xpose.msra.mxu0 0
    %2121 = vmatprep.subr.bf16.mxu0 0
    %2122 = vmatpush1.bf16.xpose.msra.mxu0 0
    %2123 = vmatprep.subr.bf16.mxu0 0
    %2124 = vmatpush1.bf16.xpose.msra.mxu0 0
    %2125 = vmatprep.subr.bf16.mxu0 0
    %2126 = vmatpush1.bf16.xpose.msra.mxu0 0
    %2127 = vmatprep.subr.bf16.mxu0 0
    %2128 = vmatpush1.bf16.xpose.msra.mxu0 0
    %2129 = vmatprep.subr.bf16.mxu0 0
    %2130 = vmatpush1.bf16.xpose.msra.mxu0 0
    %2131 = vmatprep.subr.bf16.mxu0 0
    %2132 = vmatpush1.bf16.xpose.msra.mxu0 0
    %2133 = vmatprep.subr.bf16.mxu0 0
    %2134 = vmatpush1.bf16.xpose.msra.mxu0 0
    %2135 = vmatprep.subr.bf16.mxu0 0
    %2136 = vmatpush1.bf16.xpose.msra.mxu0 0
    %2137 = vmatprep.subr.bf16.mxu0 0
    %2138 = vmatpush1.bf16.xpose.msra.mxu0 0
    %2139 = vmatprep.subr.bf16.mxu0 0
    %2140 = vmatpush1.bf16.xpose.msra.mxu0 0
    %2141 = vmatprep.mubr.bf16.mxu0 0
    %2142 = vmatmul.mubr.bf16.gmra.mrb[0].mxu0 %v2104
    %v2143 = vpop.f32.mrb[0].mxu0
    %v2144 = vadd.f32 0.0, %v2143
    %v2145 = vpop.f32.mrb[0].mxu0
    %v2146 = vpop.f32.mrb[0].mxu0
    %v2147 = vpop.f32.mrb[0].mxu0
    %2148 = vdwg.mxu0
    %v2150 = vsel %vm460, %v2098, 0
    %v2153 = vsel %vm460, %v2100, 0
    %2155 = vmatprep.subr.bf16.mxu0 0
    %2156 = vmatpush1.bf16.xpose.msra.mxu0 %v2153
    %2157 = vmatprep.subr.bf16.mxu0 0
    %2158 = vmatpush1.bf16.xpose.msra.mxu0 0
    %2159 = vmatprep.subr.bf16.mxu0 0
    %2160 = vmatpush1.bf16.xpose.msra.mxu0 0
    %2161 = vmatprep.subr.bf16.mxu0 0
    %2162 = vmatpush1.bf16.xpose.msra.mxu0 0
    %2163 = vmatprep.subr.bf16.mxu0 0
    %2164 = vmatpush1.bf16.xpose.msra.mxu0 0
    %2165 = vmatprep.subr.bf16.mxu0 0
    %2166 = vmatpush1.bf16.xpose.msra.mxu0 0
    %2167 = vmatprep.subr.bf16.mxu0 0
    %2168 = vmatpush1.bf16.xpose.msra.mxu0 0
    %2169 = vmatprep.subr.bf16.mxu0 0
    %2170 = vmatpush1.bf16.xpose.msra.mxu0 0
    %2171 = vmatprep.subr.bf16.mxu0 0
    %2172 = vmatpush1.bf16.xpose.msra.mxu0 0
    %2173 = vmatprep.subr.bf16.mxu0 0
    %2174 = vmatpush1.bf16.xpose.msra.mxu0 0
    %2175 = vmatprep.subr.bf16.mxu0 0
    %2176 = vmatpush1.bf16.xpose.msra.mxu0 0
    %2177 = vmatprep.subr.bf16.mxu0 0
    %2178 = vmatpush1.bf16.xpose.msra.mxu0 0
    %2179 = vmatprep.subr.bf16.mxu0 0
    %2180 = vmatpush1.bf16.xpose.msra.mxu0 0
    %2181 = vmatprep.subr.bf16.mxu0 0
    %2182 = vmatpush1.bf16.xpose.msra.mxu0 0
    %2183 = vmatprep.subr.bf16.mxu0 0
    %2184 = vmatpush1.bf16.xpose.msra.mxu0 0
    %2185 = vmatprep.subr.bf16.mxu0 0
    %2186 = vmatpush1.bf16.xpose.msra.mxu0 0
    %2187 = vmatprep.mubr.bf16.mxu0 0
    %2188 = vmatmul.mubr.bf16.gmra.mrb[0].mxu0 %v2150
    %v2189 = vpop.f32.mrb[0].mxu0
    %v2190 = vadd.f32 0.0, %v2189
    %v2191 = vpop.f32.mrb[0].mxu0
    %v2192 = vpop.f32.mrb[0].mxu0
    %v2193 = vpop.f32.mrb[0].mxu0
    %2194 = vdwg.mxu0
    %v2195 = vsel %vm553, %v2144, -inf
    %2196 = vmax.xlane.f32.xlu0 %v2195
    %v2197 = vpop.xlane.xlu0 %2196
    %v2198 = vsel %vm553, %v2190, -inf
    %2199 = vmax.xlane.f32.xlu0 %v2198
    %v2200 = vpop.xlane.xlu0 %2199
    %v2201 = vsub.f32 %v2144, %v2197
    %v2202 = vsub.f32 %v2190, %v2200
    %v2203 = vmul.f32 %v2201, 1.442695
    %v2204 = vpow.pop %v2203
    %v2205 = vmul.f32 %v2202, 1.442695
    %v2206 = vpow.pop %v2205
    %v2207 = vsel %vm553, %v2204, 0.0
    %2208 = vadd.xlane.f32.xlu0 %v2207
    %v2209 = vpop.xlane.xlu0 %2208
    %v2210 = vsel %vm553, %v2206, 0.0
    %2211 = vadd.xlane.f32.xlu0 %v2210
    %v2212 = vpop.xlane.xlu0 %2211
    %v2213 = vrcp.pop %v2209
    %v2214 = vrcp.pop %v2212
    %v2215 = vmul.f32 %v2204, %v2213
    %v2216 = vmul.f32 %v2206, %v2214
    %v2217 = vpack.c.bf16 %v2215, %v2215
    %v2218 = vpack.c.bf16 %v2216, %v2216
    %v2220 = vsel %vm553, %v2217, 0
    %v2223 = vsel %vm581, %v2101, 0
    %2225 = vmatprep.subr.bf16.mxu0 0
    %2226 = vmatpush1.bf16.msra.mxu0 %v2223
    %2227 = vmatprep.subr.bf16.mxu0 0
    %2228 = vmatpush1.bf16.msra.mxu0 0
    %2229 = vmatprep.subr.bf16.mxu0 0
    %2230 = vmatpush1.bf16.msra.mxu0 0
    %2231 = vmatprep.subr.bf16.mxu0 0
    %2232 = vmatpush1.bf16.msra.mxu0 0
    %2233 = vmatprep.subr.bf16.mxu0 0
    %2234 = vmatpush1.bf16.msra.mxu0 0
    %2235 = vmatprep.subr.bf16.mxu0 0
    %2236 = vmatpush1.bf16.msra.mxu0 0
    %2237 = vmatprep.subr.bf16.mxu0 0
    %2238 = vmatpush1.bf16.msra.mxu0 0
    %2239 = vmatprep.subr.bf16.mxu0 0
    %2240 = vmatpush1.bf16.msra.mxu0 0
    %2241 = vmatprep.subr.bf16.mxu0 0
    %2242 = vmatpush1.bf16.msra.mxu0 0
    %2243 = vmatprep.subr.bf16.mxu0 0
    %2244 = vmatpush1.bf16.msra.mxu0 0
    %2245 = vmatprep.subr.bf16.mxu0 0
    %2246 = vmatpush1.bf16.msra.mxu0 0
    %2247 = vmatprep.subr.bf16.mxu0 0
    %2248 = vmatpush1.bf16.msra.mxu0 0
    %2249 = vmatprep.subr.bf16.mxu0 0
    %2250 = vmatpush1.bf16.msra.mxu0 0
    %2251 = vmatprep.subr.bf16.mxu0 0
    %2252 = vmatpush1.bf16.msra.mxu0 0
    %2253 = vmatprep.subr.bf16.mxu0 0
    %2254 = vmatpush1.bf16.msra.mxu0 0
    %2255 = vmatprep.subr.bf16.mxu0 0
    %2256 = vmatpush1.bf16.msra.mxu0 0
    %2257 = vmatprep.mubr.bf16.mxu0 0
    %2258 = vmatmul.mubr.bf16.gmra.mrb[0].mxu0 %v2220
    %v2259 = vpop.f32.mrb[0].mxu0
    %v2260 = vadd.f32 0.0, %v2259
    %v2261 = vpop.f32.mrb[0].mxu0
    %v2262 = vpop.f32.mrb[0].mxu0
    %v2263 = vpop.f32.mrb[0].mxu0
    %2264 = vdwg.mxu0
    %v2266 = vsel %vm553, %v2218, 0
    %v2269 = vsel %vm581, %v2102, 0
    %2271 = vmatprep.subr.bf16.mxu0 0
    %2272 = vmatpush1.bf16.msra.mxu0 %v2269
    %2273 = vmatprep.subr.bf16.mxu0 0
    %2274 = vmatpush1.bf16.msra.mxu0 0
    %2275 = vmatprep.subr.bf16.mxu0 0
    %2276 = vmatpush1.bf16.msra.mxu0 0
    %2277 = vmatprep.subr.bf16.mxu0 0
    %2278 = vmatpush1.bf16.msra.mxu0 0
    %2279 = vmatprep.subr.bf16.mxu0 0
    %2280 = vmatpush1.bf16.msra.mxu0 0
    %2281 = vmatprep.subr.bf16.mxu0 0
    %2282 = vmatpush1.bf16.msra.mxu0 0
    %2283 = vmatprep.subr.bf16.mxu0 0
    %2284 = vmatpush1.bf16.msra.mxu0 0
    %2285 = vmatprep.subr.bf16.mxu0 0
    %2286 = vmatpush1.bf16.msra.mxu0 0
    %2287 = vmatprep.subr.bf16.mxu0 0
    %2288 = vmatpush1.bf16.msra.mxu0 0
    %2289 = vmatprep.subr.bf16.mxu0 0
    %2290 = vmatpush1.bf16.msra.mxu0 0
    %2291 = vmatprep.subr.bf16.mxu0 0
    %2292 = vmatpush1.bf16.msra.mxu0 0
    %2293 = vmatprep.subr.bf16.mxu0 0
    %2294 = vmatpush1.bf16.msra.mxu0 0
    %2295 = vmatprep.subr.bf16.mxu0 0
    %2296 = vmatpush1.bf16.msra.mxu0 0
    %2297 = vmatprep.subr.bf16.mxu0 0
    %2298 = vmatpush1.bf16.msra.mxu0 0
    %2299 = vmatprep.subr.bf16.mxu0 0
    %2300 = vmatpush1.bf16.msra.mxu0 0
    %2301 = vmatprep.subr.bf16.mxu0 0
    %2302 = vmatpush1.bf16.msra.mxu0 0
    %2303 = vmatprep.mubr.bf16.mxu0 0
    %2304 = vmatmul.mubr.bf16.gmra.mrb[0].mxu0 %v2266
    %v2305 = vpop.f32.mrb[0].mxu0
    %v2306 = vadd.f32 0.0, %v2305
    %v2307 = vpop.f32.mrb[0].mxu0
    %v2308 = vpop.f32.mrb[0].mxu0
    %v2309 = vpop.f32.mrb[0].mxu0
    %2310 = vdwg.mxu0
    %2312 = vrot.lane.b32.xlu0 %v2097, 96
    %v2313 = vpop.permute.xlu0 %2312
    %2315 = vrot.lane.b32.xlu0 %v2099, 96
    %v2316 = vpop.permute.xlu0 %2315
    %v2318 = vsel %vm460, %v2313, 0
    %v2321 = vsel %vm460, %v2316, 0
    %2323 = vmatprep.subr.bf16.mxu0 0
    %2324 = vmatpush1.bf16.xpose.msra.mxu0 %v2321
    %2325 = vmatprep.subr.bf16.mxu0 0
    %2326 = vmatpush1.bf16.xpose.msra.mxu0 0
    %2327 = vmatprep.subr.bf16.mxu0 0
    %2328 = vmatpush1.bf16.xpose.msra.mxu0 0
    %2329 = vmatprep.subr.bf16.mxu0 0
    %2330 = vmatpush1.bf16.xpose.msra.mxu0 0
    %2331 = vmatprep.subr.bf16.mxu0 0
    %2332 = vmatpush1.bf16.xpose.msra.mxu0 0
    %2333 = vmatprep.subr.bf16.mxu0 0
    %2334 = vmatpush1.bf16.xpose.msra.mxu0 0
    %2335 = vmatprep.subr.bf16.mxu0 0
    %2336 = vmatpush1.bf16.xpose.msra.mxu0 0
    %2337 = vmatprep.subr.bf16.mxu0 0
    %2338 = vmatpush1.bf16.xpose.msra.mxu0 0
    %2339 = vmatprep.subr.bf16.mxu0 0
    %2340 = vmatpush1.bf16.xpose.msra.mxu0 0
    %2341 = vmatprep.subr.bf16.mxu0 0
    %2342 = vmatpush1.bf16.xpose.msra.mxu0 0
    %2343 = vmatprep.subr.bf16.mxu0 0
    %2344 = vmatpush1.bf16.xpose.msra.mxu0 0
    %2345 = vmatprep.subr.bf16.mxu0 0
    %2346 = vmatpush1.bf16.xpose.msra.mxu0 0
    %2347 = vmatprep.subr.bf16.mxu0 0
    %2348 = vmatpush1.bf16.xpose.msra.mxu0 0
    %2349 = vmatprep.subr.bf16.mxu0 0
    %2350 = vmatpush1.bf16.xpose.msra.mxu0 0
    %2351 = vmatprep.subr.bf16.mxu0 0
    %2352 = vmatpush1.bf16.xpose.msra.mxu0 0
    %2353 = vmatprep.subr.bf16.mxu0 0
    %2354 = vmatpush1.bf16.xpose.msra.mxu0 0
    %2355 = vmatprep.mubr.bf16.mxu0 0
    %2356 = vmatmul.mubr.bf16.gmra.mrb[0].mxu0 %v2318
    %v2357 = vpop.f32.mrb[0].mxu0
    %v2358 = vadd.f32 0.0, %v2357
    %v2359 = vpop.f32.mrb[0].mxu0
    %v2360 = vpop.f32.mrb[0].mxu0
    %v2361 = vpop.f32.mrb[0].mxu0
    %2362 = vdwg.mxu0
    %2364 = vrot.lane.b32.xlu0 %v2098, 96
    %v2365 = vpop.permute.xlu0 %2364
    %2367 = vrot.lane.b32.xlu0 %v2100, 96
    %v2368 = vpop.permute.xlu0 %2367
    %v2370 = vsel %vm460, %v2365, 0
    %v2373 = vsel %vm460, %v2368, 0
    %2375 = vmatprep.subr.bf16.mxu0 0
    %2376 = vmatpush1.bf16.xpose.msra.mxu0 %v2373
    %2377 = vmatprep.subr.bf16.mxu0 0
    %2378 = vmatpush1.bf16.xpose.msra.mxu0 0
    %2379 = vmatprep.subr.bf16.mxu0 0
    %2380 = vmatpush1.bf16.xpose.msra.mxu0 0
    %2381 = vmatprep.subr.bf16.mxu0 0
    %2382 = vmatpush1.bf16.xpose.msra.mxu0 0
    %2383 = vmatprep.subr.bf16.mxu0 0
    %2384 = vmatpush1.bf16.xpose.msra.mxu0 0
    %2385 = vmatprep.subr.bf16.mxu0 0
    %2386 = vmatpush1.bf16.xpose.msra.mxu0 0
    %2387 = vmatprep.subr.bf16.mxu0 0
    %2388 = vmatpush1.bf16.xpose.msra.mxu0 0
    %2389 = vmatprep.subr.bf16.mxu0 0
    %2390 = vmatpush1.bf16.xpose.msra.mxu0 0
    %2391 = vmatprep.subr.bf16.mxu0 0
    %2392 = vmatpush1.bf16.xpose.msra.mxu0 0
    %2393 = vmatprep.subr.bf16.mxu0 0
    %2394 = vmatpush1.bf16.xpose.msra.mxu0 0
    %2395 = vmatprep.subr.bf16.mxu0 0
    %2396 = vmatpush1.bf16.xpose.msra.mxu0 0
    %2397 = vmatprep.subr.bf16.mxu0 0
    %2398 = vmatpush1.bf16.xpose.msra.mxu0 0
    %2399 = vmatprep.subr.bf16.mxu0 0
    %2400 = vmatpush1.bf16.xpose.msra.mxu0 0
    %2401 = vmatprep.subr.bf16.mxu0 0
    %2402 = vmatpush1.bf16.xpose.msra.mxu0 0
    %2403 = vmatprep.subr.bf16.mxu0 0
    %2404 = vmatpush1.bf16.xpose.msra.mxu0 0
    %2405 = vmatprep.subr.bf16.mxu0 0
    %2406 = vmatpush1.bf16.xpose.msra.mxu0 0
    %2407 = vmatprep.mubr.bf16.mxu0 0
    %2408 = vmatmul.mubr.bf16.gmra.mrb[0].mxu0 %v2370
    %v2409 = vpop.f32.mrb[0].mxu0
    %v2410 = vadd.f32 0.0, %v2409
    %v2411 = vpop.f32.mrb[0].mxu0
    %v2412 = vpop.f32.mrb[0].mxu0
    %v2413 = vpop.f32.mrb[0].mxu0
    %2414 = vdwg.mxu0
    %v2415 = vsel %vm553, %v2358, -inf
    %2416 = vmax.xlane.f32.xlu0 %v2415
    %v2417 = vpop.xlane.xlu0 %2416
    %v2418 = vsel %vm553, %v2410, -inf
    %2419 = vmax.xlane.f32.xlu0 %v2418
    %v2420 = vpop.xlane.xlu0 %2419
    %v2421 = vsub.f32 %v2358, %v2417
    %v2422 = vsub.f32 %v2410, %v2420
    %v2423 = vmul.f32 %v2421, 1.442695
    %v2424 = vpow.pop %v2423
    %v2425 = vmul.f32 %v2422, 1.442695
    %v2426 = vpow.pop %v2425
    %v2427 = vsel %vm553, %v2424, 0.0
    %2428 = vadd.xlane.f32.xlu0 %v2427
    %v2429 = vpop.xlane.xlu0 %2428
    %v2430 = vsel %vm553, %v2426, 0.0
    %2431 = vadd.xlane.f32.xlu0 %v2430
    %v2432 = vpop.xlane.xlu0 %2431
    %v2433 = vrcp.pop %v2429
    %v2434 = vrcp.pop %v2432
    %v2435 = vmul.f32 %v2424, %v2433
    %v2436 = vmul.f32 %v2426, %v2434
    %v2437 = vpack.c.bf16 %v2435, %v2435
    %v2438 = vpack.c.bf16 %v2436, %v2436
    %2440 = vrot.lane.b32.xlu0 %v2101, 96
    %v2441 = vpop.permute.xlu0 %2440
    %v2443 = vsel %vm553, %v2437, 0
    %v2446 = vsel %vm581, %v2441, 0
    %2448 = vmatprep.subr.bf16.mxu0 0
    %2449 = vmatpush1.bf16.msra.mxu0 %v2446
    %2450 = vmatprep.subr.bf16.mxu0 0
    %2451 = vmatpush1.bf16.msra.mxu0 0
    %2452 = vmatprep.subr.bf16.mxu0 0
    %2453 = vmatpush1.bf16.msra.mxu0 0
    %2454 = vmatprep.subr.bf16.mxu0 0
    %2455 = vmatpush1.bf16.msra.mxu0 0
    %2456 = vmatprep.subr.bf16.mxu0 0
    %2457 = vmatpush1.bf16.msra.mxu0 0
    %2458 = vmatprep.subr.bf16.mxu0 0
    %2459 = vmatpush1.bf16.msra.mxu0 0
    %2460 = vmatprep.subr.bf16.mxu0 0
    %2461 = vmatpush1.bf16.msra.mxu0 0
    %2462 = vmatprep.subr.bf16.mxu0 0
    %2463 = vmatpush1.bf16.msra.mxu0 0
    %2464 = vmatprep.subr.bf16.mxu0 0
    %2465 = vmatpush1.bf16.msra.mxu0 0
    %2466 = vmatprep.subr.bf16.mxu0 0
    %2467 = vmatpush1.bf16.msra.mxu0 0
    %2468 = vmatprep.subr.bf16.mxu0 0
    %2469 = vmatpush1.bf16.msra.mxu0 0
    %2470 = vmatprep.subr.bf16.mxu0 0
    %2471 = vmatpush1.bf16.msra.mxu0 0
    %2472 = vmatprep.subr.bf16.mxu0 0
    %2473 = vmatpush1.bf16.msra.mxu0 0
    %2474 = vmatprep.subr.bf16.mxu0 0
    %2475 = vmatpush1.bf16.msra.mxu0 0
    %2476 = vmatprep.subr.bf16.mxu0 0
    %2477 = vmatpush1.bf16.msra.mxu0 0
    %2478 = vmatprep.subr.bf16.mxu0 0
    %2479 = vmatpush1.bf16.msra.mxu0 0
    %2480 = vmatprep.mubr.bf16.mxu0 0
    %2481 = vmatmul.mubr.bf16.gmra.mrb[0].mxu0 %v2443
    %v2482 = vpop.f32.mrb[0].mxu0
    %v2483 = vadd.f32 0.0, %v2482
    %v2484 = vpop.f32.mrb[0].mxu0
    %v2485 = vpop.f32.mrb[0].mxu0
    %v2486 = vpop.f32.mrb[0].mxu0
    %2487 = vdwg.mxu0
    %2489 = vrot.lane.b32.xlu0 %v2102, 96
    %v2490 = vpop.permute.xlu0 %2489
    %v2492 = vsel %vm553, %v2438, 0
    %v2495 = vsel %vm581, %v2490, 0
    %2497 = vmatprep.subr.bf16.mxu0 0
    %2498 = vmatpush1.bf16.msra.mxu0 %v2495
    %2499 = vmatprep.subr.bf16.mxu0 0
    %2500 = vmatpush1.bf16.msra.mxu0 0
    %2501 = vmatprep.subr.bf16.mxu0 0
    %2502 = vmatpush1.bf16.msra.mxu0 0
    %2503 = vmatprep.subr.bf16.mxu0 0
    %2504 = vmatpush1.bf16.msra.mxu0 0
    %2505 = vmatprep.subr.bf16.mxu0 0
    %2506 = vmatpush1.bf16.msra.mxu0 0
    %2507 = vmatprep.subr.bf16.mxu0 0
    %2508 = vmatpush1.bf16.msra.mxu0 0
    %2509 = vmatprep.subr.bf16.mxu0 0
    %2510 = vmatpush1.bf16.msra.mxu0 0
    %2511 = vmatprep.subr.bf16.mxu0 0
    %2512 = vmatpush1.bf16.msra.mxu0 0
    %2513 = vmatprep.subr.bf16.mxu0 0
    %2514 = vmatpush1.bf16.msra.mxu0 0
    %2515 = vmatprep.subr.bf16.mxu0 0
    %2516 = vmatpush1.bf16.msra.mxu0 0
    %2517 = vmatprep.subr.bf16.mxu0 0
    %2518 = vmatpush1.bf16.msra.mxu0 0
    %2519 = vmatprep.subr.bf16.mxu0 0
    %2520 = vmatpush1.bf16.msra.mxu0 0
    %2521 = vmatprep.subr.bf16.mxu0 0
    %2522 = vmatpush1.bf16.msra.mxu0 0
    %2523 = vmatprep.subr.bf16.mxu0 0
    %2524 = vmatpush1.bf16.msra.mxu0 0
    %2525 = vmatprep.subr.bf16.mxu0 0
    %2526 = vmatpush1.bf16.msra.mxu0 0
    %2527 = vmatprep.subr.bf16.mxu0 0
    %2528 = vmatpush1.bf16.msra.mxu0 0
    %2529 = vmatprep.mubr.bf16.mxu0 0
    %2530 = vmatmul.mubr.bf16.gmra.mrb[0].mxu0 %v2492
    %v2531 = vpop.f32.mrb[0].mxu0
    %v2532 = vadd.f32 0.0, %v2531
    %v2533 = vpop.f32.mrb[0].mxu0
    %v2534 = vpop.f32.mrb[0].mxu0
    %v2535 = vpop.f32.mrb[0].mxu0
    %2536 = vdwg.mxu0
    %2537 = vrot.lane.b32.xlu0 %v2097, 64
    %v2538 = vpop.permute.xlu0 %2537
    %2539 = vrot.lane.b32.xlu0 %v2099, 64
    %v2540 = vpop.permute.xlu0 %2539
    %v2542 = vsel %vm460, %v2538, 0
    %v2545 = vsel %vm460, %v2540, 0
    %2547 = vmatprep.subr.bf16.mxu0 0
    %2548 = vmatpush1.bf16.xpose.msra.mxu0 %v2545
    %2549 = vmatprep.subr.bf16.mxu0 0
    %2550 = vmatpush1.bf16.xpose.msra.mxu0 0
    %2551 = vmatprep.subr.bf16.mxu0 0
    %2552 = vmatpush1.bf16.xpose.msra.mxu0 0
    %2553 = vmatprep.subr.bf16.mxu0 0
    %2554 = vmatpush1.bf16.xpose.msra.mxu0 0
    %2555 = vmatprep.subr.bf16.mxu0 0
    %2556 = vmatpush1.bf16.xpose.msra.mxu0 0
    %2557 = vmatprep.subr.bf16.mxu0 0
    %2558 = vmatpush1.bf16.xpose.msra.mxu0 0
    %2559 = vmatprep.subr.bf16.mxu0 0
    %2560 = vmatpush1.bf16.xpose.msra.mxu0 0
    %2561 = vmatprep.subr.bf16.mxu0 0
    %2562 = vmatpush1.bf16.xpose.msra.mxu0 0
    %2563 = vmatprep.subr.bf16.mxu0 0
    %2564 = vmatpush1.bf16.xpose.msra.mxu0 0
    %2565 = vmatprep.subr.bf16.mxu0 0
    %2566 = vmatpush1.bf16.xpose.msra.mxu0 0
    %2567 = vmatprep.subr.bf16.mxu0 0
    %2568 = vmatpush1.bf16.xpose.msra.mxu0 0
    %2569 = vmatprep.subr.bf16.mxu0 0
    %2570 = vmatpush1.bf16.xpose.msra.mxu0 0
    %2571 = vmatprep.subr.bf16.mxu0 0
    %2572 = vmatpush1.bf16.xpose.msra.mxu0 0
    %2573 = vmatprep.subr.bf16.mxu0 0
    %2574 = vmatpush1.bf16.xpose.msra.mxu0 0
    %2575 = vmatprep.subr.bf16.mxu0 0
    %2576 = vmatpush1.bf16.xpose.msra.mxu0 0
    %2577 = vmatprep.subr.bf16.mxu0 0
    %2578 = vmatpush1.bf16.xpose.msra.mxu0 0
    %2579 = vmatprep.mubr.bf16.mxu0 0
    %2580 = vmatmul.mubr.bf16.gmra.mrb[0].mxu0 %v2542
    %v2581 = vpop.f32.mrb[0].mxu0
    %v2582 = vadd.f32 0.0, %v2581
    %v2583 = vpop.f32.mrb[0].mxu0
    %v2584 = vpop.f32.mrb[0].mxu0
    %v2585 = vpop.f32.mrb[0].mxu0
    %2586 = vdwg.mxu0
    %2587 = vrot.lane.b32.xlu0 %v2098, 64
    %v2588 = vpop.permute.xlu0 %2587
    %2589 = vrot.lane.b32.xlu0 %v2100, 64
    %v2590 = vpop.permute.xlu0 %2589
    %v2592 = vsel %vm460, %v2588, 0
    %v2595 = vsel %vm460, %v2590, 0
    %2597 = vmatprep.subr.bf16.mxu0 0
    %2598 = vmatpush1.bf16.xpose.msra.mxu0 %v2595
    %2599 = vmatprep.subr.bf16.mxu0 0
    %2600 = vmatpush1.bf16.xpose.msra.mxu0 0
    %2601 = vmatprep.subr.bf16.mxu0 0
    %2602 = vmatpush1.bf16.xpose.msra.mxu0 0
    %2603 = vmatprep.subr.bf16.mxu0 0
    %2604 = vmatpush1.bf16.xpose.msra.mxu0 0
    %2605 = vmatprep.subr.bf16.mxu0 0
    %2606 = vmatpush1.bf16.xpose.msra.mxu0 0
    %2607 = vmatprep.subr.bf16.mxu0 0
    %2608 = vmatpush1.bf16.xpose.msra.mxu0 0
    %2609 = vmatprep.subr.bf16.mxu0 0
    %2610 = vmatpush1.bf16.xpose.msra.mxu0 0
    %2611 = vmatprep.subr.bf16.mxu0 0
    %2612 = vmatpush1.bf16.xpose.msra.mxu0 0
    %2613 = vmatprep.subr.bf16.mxu0 0
    %2614 = vmatpush1.bf16.xpose.msra.mxu0 0
    %2615 = vmatprep.subr.bf16.mxu0 0
    %2616 = vmatpush1.bf16.xpose.msra.mxu0 0
    %2617 = vmatprep.subr.bf16.mxu0 0
    %2618 = vmatpush1.bf16.xpose.msra.mxu0 0
    %2619 = vmatprep.subr.bf16.mxu0 0
    %2620 = vmatpush1.bf16.xpose.msra.mxu0 0
    %2621 = vmatprep.subr.bf16.mxu0 0
    %2622 = vmatpush1.bf16.xpose.msra.mxu0 0
    %2623 = vmatprep.subr.bf16.mxu0 0
    %2624 = vmatpush1.bf16.xpose.msra.mxu0 0
    %2625 = vmatprep.subr.bf16.mxu0 0
    %2626 = vmatpush1.bf16.xpose.msra.mxu0 0
    %2627 = vmatprep.subr.bf16.mxu0 0
    %2628 = vmatpush1.bf16.xpose.msra.mxu0 0
    %2629 = vmatprep.mubr.bf16.mxu0 0
    %2630 = vmatmul.mubr.bf16.gmra.mrb[0].mxu0 %v2592
    %v2631 = vpop.f32.mrb[0].mxu0
    %v2632 = vadd.f32 0.0, %v2631
    %v2633 = vpop.f32.mrb[0].mxu0
    %v2634 = vpop.f32.mrb[0].mxu0
    %v2635 = vpop.f32.mrb[0].mxu0
    %2636 = vdwg.mxu0
    %v2637 = vsel %vm553, %v2582, -inf
    %2638 = vmax.xlane.f32.xlu0 %v2637
    %v2639 = vpop.xlane.xlu0 %2638
    %v2640 = vsel %vm553, %v2632, -inf
    %2641 = vmax.xlane.f32.xlu0 %v2640
    %v2642 = vpop.xlane.xlu0 %2641
    %v2643 = vsub.f32 %v2582, %v2639
    %v2644 = vsub.f32 %v2632, %v2642
    %v2645 = vmul.f32 %v2643, 1.442695
    %v2646 = vpow.pop %v2645
    %v2647 = vmul.f32 %v2644, 1.442695
    %v2648 = vpow.pop %v2647
    %v2649 = vsel %vm553, %v2646, 0.0
    %2650 = vadd.xlane.f32.xlu0 %v2649
    %v2651 = vpop.xlane.xlu0 %2650
    %v2652 = vsel %vm553, %v2648, 0.0
    %2653 = vadd.xlane.f32.xlu0 %v2652
    %v2654 = vpop.xlane.xlu0 %2653
    %v2655 = vrcp.pop %v2651
    %v2656 = vrcp.pop %v2654
    %v2657 = vmul.f32 %v2646, %v2655
    %v2658 = vmul.f32 %v2648, %v2656
    %v2659 = vpack.c.bf16 %v2657, %v2657
    %v2660 = vpack.c.bf16 %v2658, %v2658
    %2661 = vrot.lane.b32.xlu0 %v2101, 64
    %v2662 = vpop.permute.xlu0 %2661
    %v2664 = vsel %vm553, %v2659, 0
    %v2667 = vsel %vm581, %v2662, 0
    %2669 = vmatprep.subr.bf16.mxu0 0
    %2670 = vmatpush1.bf16.msra.mxu0 %v2667
    %2671 = vmatprep.subr.bf16.mxu0 0
    %2672 = vmatpush1.bf16.msra.mxu0 0
    %2673 = vmatprep.subr.bf16.mxu0 0
    %2674 = vmatpush1.bf16.msra.mxu0 0
    %2675 = vmatprep.subr.bf16.mxu0 0
    %2676 = vmatpush1.bf16.msra.mxu0 0
    %2677 = vmatprep.subr.bf16.mxu0 0
    %2678 = vmatpush1.bf16.msra.mxu0 0
    %2679 = vmatprep.subr.bf16.mxu0 0
    %2680 = vmatpush1.bf16.msra.mxu0 0
    %2681 = vmatprep.subr.bf16.mxu0 0
    %2682 = vmatpush1.bf16.msra.mxu0 0
    %2683 = vmatprep.subr.bf16.mxu0 0
    %2684 = vmatpush1.bf16.msra.mxu0 0
    %2685 = vmatprep.subr.bf16.mxu0 0
    %2686 = vmatpush1.bf16.msra.mxu0 0
    %2687 = vmatprep.subr.bf16.mxu0 0
    %2688 = vmatpush1.bf16.msra.mxu0 0
    %2689 = vmatprep.subr.bf16.mxu0 0
    %2690 = vmatpush1.bf16.msra.mxu0 0
    %2691 = vmatprep.subr.bf16.mxu0 0
    %2692 = vmatpush1.bf16.msra.mxu0 0
    %2693 = vmatprep.subr.bf16.mxu0 0
    %2694 = vmatpush1.bf16.msra.mxu0 0
    %2695 = vmatprep.subr.bf16.mxu0 0
    %2696 = vmatpush1.bf16.msra.mxu0 0
    %2697 = vmatprep.subr.bf16.mxu0 0
    %2698 = vmatpush1.bf16.msra.mxu0 0
    %2699 = vmatprep.subr.bf16.mxu0 0
    %2700 = vmatpush1.bf16.msra.mxu0 0
    %2701 = vmatprep.mubr.bf16.mxu0 0
    %2702 = vmatmul.mubr.bf16.gmra.mrb[0].mxu0 %v2664
    %v2703 = vpop.f32.mrb[0].mxu0
    %v2704 = vadd.f32 0.0, %v2703
    %v2705 = vpop.f32.mrb[0].mxu0
    %v2706 = vpop.f32.mrb[0].mxu0
    %v2707 = vpop.f32.mrb[0].mxu0
    %2708 = vdwg.mxu0
    %2709 = vrot.lane.b32.xlu0 %v2102, 64
    %v2710 = vpop.permute.xlu0 %2709
    %v2712 = vsel %vm553, %v2660, 0
    %v2715 = vsel %vm581, %v2710, 0
    %2717 = vmatprep.subr.bf16.mxu0 0
    %2718 = vmatpush1.bf16.msra.mxu0 %v2715
    %2719 = vmatprep.subr.bf16.mxu0 0
    %2720 = vmatpush1.bf16.msra.mxu0 0
    %2721 = vmatprep.subr.bf16.mxu0 0
    %2722 = vmatpush1.bf16.msra.mxu0 0
    %2723 = vmatprep.subr.bf16.mxu0 0
    %2724 = vmatpush1.bf16.msra.mxu0 0
    %2725 = vmatprep.subr.bf16.mxu0 0
    %2726 = vmatpush1.bf16.msra.mxu0 0
    %2727 = vmatprep.subr.bf16.mxu0 0
    %2728 = vmatpush1.bf16.msra.mxu0 0
    %2729 = vmatprep.subr.bf16.mxu0 0
    %2730 = vmatpush1.bf16.msra.mxu0 0
    %2731 = vmatprep.subr.bf16.mxu0 0
    %2732 = vmatpush1.bf16.msra.mxu0 0
    %2733 = vmatprep.subr.bf16.mxu0 0
    %2734 = vmatpush1.bf16.msra.mxu0 0
    %2735 = vmatprep.subr.bf16.mxu0 0
    %2736 = vmatpush1.bf16.msra.mxu0 0
    %2737 = vmatprep.subr.bf16.mxu0 0
    %2738 = vmatpush1.bf16.msra.mxu0 0
    %2739 = vmatprep.subr.bf16.mxu0 0
    %2740 = vmatpush1.bf16.msra.mxu0 0
    %2741 = vmatprep.subr.bf16.mxu0 0
    %2742 = vmatpush1.bf16.msra.mxu0 0
    %2743 = vmatprep.subr.bf16.mxu0 0
    %2744 = vmatpush1.bf16.msra.mxu0 0
    %2745 = vmatprep.subr.bf16.mxu0 0
    %2746 = vmatpush1.bf16.msra.mxu0 0
    %2747 = vmatprep.subr.bf16.mxu0 0
    %2748 = vmatpush1.bf16.msra.mxu0 0
    %2749 = vmatprep.mubr.bf16.mxu0 0
    %2750 = vmatmul.mubr.bf16.gmra.mrb[0].mxu0 %v2712
    %v2751 = vpop.f32.mrb[0].mxu0
    %v2752 = vadd.f32 0.0, %v2751
    %v2753 = vpop.f32.mrb[0].mxu0
    %v2754 = vpop.f32.mrb[0].mxu0
    %v2755 = vpop.f32.mrb[0].mxu0
    %2756 = vdwg.mxu0
    %2757 = vrot.lane.b32.xlu0 %v2097, 32
    %v2758 = vpop.permute.xlu0 %2757
    %2759 = vrot.lane.b32.xlu0 %v2099, 32
    %v2760 = vpop.permute.xlu0 %2759
    %v2762 = vsel %vm460, %v2758, 0
    %v2765 = vsel %vm460, %v2760, 0
    %2767 = vmatprep.subr.bf16.mxu0 0
    %2768 = vmatpush1.bf16.xpose.msra.mxu0 %v2765
    %2769 = vmatprep.subr.bf16.mxu0 0
    %2770 = vmatpush1.bf16.xpose.msra.mxu0 0
    %2771 = vmatprep.subr.bf16.mxu0 0
    %2772 = vmatpush1.bf16.xpose.msra.mxu0 0
    %2773 = vmatprep.subr.bf16.mxu0 0
    %2774 = vmatpush1.bf16.xpose.msra.mxu0 0
    %2775 = vmatprep.subr.bf16.mxu0 0
    %2776 = vmatpush1.bf16.xpose.msra.mxu0 0
    %2777 = vmatprep.subr.bf16.mxu0 0
    %2778 = vmatpush1.bf16.xpose.msra.mxu0 0
    %2779 = vmatprep.subr.bf16.mxu0 0
    %2780 = vmatpush1.bf16.xpose.msra.mxu0 0
    %2781 = vmatprep.subr.bf16.mxu0 0
    %2782 = vmatpush1.bf16.xpose.msra.mxu0 0
    %2783 = vmatprep.subr.bf16.mxu0 0
    %2784 = vmatpush1.bf16.xpose.msra.mxu0 0
    %2785 = vmatprep.subr.bf16.mxu0 0
    %2786 = vmatpush1.bf16.xpose.msra.mxu0 0
    %2787 = vmatprep.subr.bf16.mxu0 0
    %2788 = vmatpush1.bf16.xpose.msra.mxu0 0
    %2789 = vmatprep.subr.bf16.mxu0 0
    %2790 = vmatpush1.bf16.xpose.msra.mxu0 0
    %2791 = vmatprep.subr.bf16.mxu0 0
    %2792 = vmatpush1.bf16.xpose.msra.mxu0 0
    %2793 = vmatprep.subr.bf16.mxu0 0
    %2794 = vmatpush1.bf16.xpose.msra.mxu0 0
    %2795 = vmatprep.subr.bf16.mxu0 0
    %2796 = vmatpush1.bf16.xpose.msra.mxu0 0
    %2797 = vmatprep.subr.bf16.mxu0 0
    %2798 = vmatpush1.bf16.xpose.msra.mxu0 0
    %2799 = vmatprep.mubr.bf16.mxu0 0
    %2800 = vmatmul.mubr.bf16.gmra.mrb[0].mxu0 %v2762
    %v2801 = vpop.f32.mrb[0].mxu0
    %v2802 = vadd.f32 0.0, %v2801
    %v2803 = vpop.f32.mrb[0].mxu0
    %v2804 = vpop.f32.mrb[0].mxu0
    %v2805 = vpop.f32.mrb[0].mxu0
    %2806 = vdwg.mxu0
    %2807 = vrot.lane.b32.xlu0 %v2098, 32
    %v2808 = vpop.permute.xlu0 %2807
    %2809 = vrot.lane.b32.xlu0 %v2100, 32
    %v2810 = vpop.permute.xlu0 %2809
    %v2812 = vsel %vm460, %v2808, 0
    %v2815 = vsel %vm460, %v2810, 0
    %2817 = vmatprep.subr.bf16.mxu0 0
    %2818 = vmatpush1.bf16.xpose.msra.mxu0 %v2815
    %2819 = vmatprep.subr.bf16.mxu0 0
    %2820 = vmatpush1.bf16.xpose.msra.mxu0 0
    %2821 = vmatprep.subr.bf16.mxu0 0
    %2822 = vmatpush1.bf16.xpose.msra.mxu0 0
    %2823 = vmatprep.subr.bf16.mxu0 0
    %2824 = vmatpush1.bf16.xpose.msra.mxu0 0
    %2825 = vmatprep.subr.bf16.mxu0 0
    %2826 = vmatpush1.bf16.xpose.msra.mxu0 0
    %2827 = vmatprep.subr.bf16.mxu0 0
    %2828 = vmatpush1.bf16.xpose.msra.mxu0 0
    %2829 = vmatprep.subr.bf16.mxu0 0
    %2830 = vmatpush1.bf16.xpose.msra.mxu0 0
    %2831 = vmatprep.subr.bf16.mxu0 0
    %2832 = vmatpush1.bf16.xpose.msra.mxu0 0
    %2833 = vmatprep.subr.bf16.mxu0 0
    %2834 = vmatpush1.bf16.xpose.msra.mxu0 0
    %2835 = vmatprep.subr.bf16.mxu0 0
    %2836 = vmatpush1.bf16.xpose.msra.mxu0 0
    %2837 = vmatprep.subr.bf16.mxu0 0
    %2838 = vmatpush1.bf16.xpose.msra.mxu0 0
    %2839 = vmatprep.subr.bf16.mxu0 0
    %2840 = vmatpush1.bf16.xpose.msra.mxu0 0
    %2841 = vmatprep.subr.bf16.mxu0 0
    %2842 = vmatpush1.bf16.xpose.msra.mxu0 0
    %2843 = vmatprep.subr.bf16.mxu0 0
    %2844 = vmatpush1.bf16.xpose.msra.mxu0 0
    %2845 = vmatprep.subr.bf16.mxu0 0
    %2846 = vmatpush1.bf16.xpose.msra.mxu0 0
    %2847 = vmatprep.subr.bf16.mxu0 0
    %2848 = vmatpush1.bf16.xpose.msra.mxu0 0
    %2849 = vmatprep.mubr.bf16.mxu0 0
    %2850 = vmatmul.mubr.bf16.gmra.mrb[0].mxu0 %v2812
    %v2851 = vpop.f32.mrb[0].mxu0
    %v2852 = vadd.f32 0.0, %v2851
    %v2853 = vpop.f32.mrb[0].mxu0
    %v2854 = vpop.f32.mrb[0].mxu0
    %v2855 = vpop.f32.mrb[0].mxu0
    %2856 = vdwg.mxu0
    %v2857 = vsel %vm553, %v2802, -inf
    %2858 = vmax.xlane.f32.xlu0 %v2857
    %v2859 = vpop.xlane.xlu0 %2858
    %v2860 = vsel %vm553, %v2852, -inf
    %2861 = vmax.xlane.f32.xlu0 %v2860
    %v2862 = vpop.xlane.xlu0 %2861
    %v2863 = vsub.f32 %v2802, %v2859
    %v2864 = vsub.f32 %v2852, %v2862
    %v2865 = vmul.f32 %v2863, 1.442695
    %v2866 = vpow.pop %v2865
    %v2867 = vmul.f32 %v2864, 1.442695
    %v2868 = vpow.pop %v2867
    %v2869 = vsel %vm553, %v2866, 0.0
    %2870 = vadd.xlane.f32.xlu0 %v2869
    %v2871 = vpop.xlane.xlu0 %2870
    %v2872 = vsel %vm553, %v2868, 0.0
    %2873 = vadd.xlane.f32.xlu0 %v2872
    %v2874 = vpop.xlane.xlu0 %2873
    %v2875 = vrcp.pop %v2871
    %v2876 = vrcp.pop %v2874
    %v2877 = vmul.f32 %v2866, %v2875
    %v2878 = vmul.f32 %v2868, %v2876
    %v2879 = vpack.c.bf16 %v2877, %v2877
    %v2880 = vpack.c.bf16 %v2878, %v2878
    %2881 = vrot.lane.b32.xlu0 %v2101, 32
    %v2882 = vpop.permute.xlu0 %2881
    %v2884 = vsel %vm553, %v2879, 0
    %v2887 = vsel %vm581, %v2882, 0
    %2889 = vmatprep.subr.bf16.mxu0 0
    %2890 = vmatpush1.bf16.msra.mxu0 %v2887
    %2891 = vmatprep.subr.bf16.mxu0 0
    %2892 = vmatpush1.bf16.msra.mxu0 0
    %2893 = vmatprep.subr.bf16.mxu0 0
    %2894 = vmatpush1.bf16.msra.mxu0 0
    %2895 = vmatprep.subr.bf16.mxu0 0
    %2896 = vmatpush1.bf16.msra.mxu0 0
    %2897 = vmatprep.subr.bf16.mxu0 0
    %2898 = vmatpush1.bf16.msra.mxu0 0
    %2899 = vmatprep.subr.bf16.mxu0 0
    %2900 = vmatpush1.bf16.msra.mxu0 0
    %2901 = vmatprep.subr.bf16.mxu0 0
    %2902 = vmatpush1.bf16.msra.mxu0 0
    %2903 = vmatprep.subr.bf16.mxu0 0
    %2904 = vmatpush1.bf16.msra.mxu0 0
    %2905 = vmatprep.subr.bf16.mxu0 0
    %2906 = vmatpush1.bf16.msra.mxu0 0
    %2907 = vmatprep.subr.bf16.mxu0 0
    %2908 = vmatpush1.bf16.msra.mxu0 0
    %2909 = vmatprep.subr.bf16.mxu0 0
    %2910 = vmatpush1.bf16.msra.mxu0 0
    %2911 = vmatprep.subr.bf16.mxu0 0
    %2912 = vmatpush1.bf16.msra.mxu0 0
    %2913 = vmatprep.subr.bf16.mxu0 0
    %2914 = vmatpush1.bf16.msra.mxu0 0
    %2915 = vmatprep.subr.bf16.mxu0 0
    %2916 = vmatpush1.bf16.msra.mxu0 0
    %2917 = vmatprep.subr.bf16.mxu0 0
    %2918 = vmatpush1.bf16.msra.mxu0 0
    %2919 = vmatprep.subr.bf16.mxu0 0
    %2920 = vmatpush1.bf16.msra.mxu0 0
    %2921 = vmatprep.mubr.bf16.mxu0 0
    %2922 = vmatmul.mubr.bf16.gmra.mrb[0].mxu0 %v2884
    %v2923 = vpop.f32.mrb[0].mxu0
    %v2924 = vadd.f32 0.0, %v2923
    %v2925 = vpop.f32.mrb[0].mxu0
    %v2926 = vpop.f32.mrb[0].mxu0
    %v2927 = vpop.f32.mrb[0].mxu0
    %2928 = vdwg.mxu0
    %2929 = vrot.lane.b32.xlu0 %v2102, 32
    %v2930 = vpop.permute.xlu0 %2929
    %v2932 = vsel %vm553, %v2880, 0
    %v2935 = vsel %vm581, %v2930, 0
    %2937 = vmatprep.subr.bf16.mxu0 0
    %2938 = vmatpush1.bf16.msra.mxu0 %v2935
    %2939 = vmatprep.subr.bf16.mxu0 0
    %2940 = vmatpush1.bf16.msra.mxu0 0
    %2941 = vmatprep.subr.bf16.mxu0 0
    %2942 = vmatpush1.bf16.msra.mxu0 0
    %2943 = vmatprep.subr.bf16.mxu0 0
    %2944 = vmatpush1.bf16.msra.mxu0 0
    %2945 = vmatprep.subr.bf16.mxu0 0
    %2946 = vmatpush1.bf16.msra.mxu0 0
    %2947 = vmatprep.subr.bf16.mxu0 0
    %2948 = vmatpush1.bf16.msra.mxu0 0
    %2949 = vmatprep.subr.bf16.mxu0 0
    %2950 = vmatpush1.bf16.msra.mxu0 0
    %2951 = vmatprep.subr.bf16.mxu0 0
    %2952 = vmatpush1.bf16.msra.mxu0 0
    %2953 = vmatprep.subr.bf16.mxu0 0
    %2954 = vmatpush1.bf16.msra.mxu0 0
    %2955 = vmatprep.subr.bf16.mxu0 0
    %2956 = vmatpush1.bf16.msra.mxu0 0
    %2957 = vmatprep.subr.bf16.mxu0 0
    %2958 = vmatpush1.bf16.msra.mxu0 0
    %2959 = vmatprep.subr.bf16.mxu0 0
    %2960 = vmatpush1.bf16.msra.mxu0 0
    %2961 = vmatprep.subr.bf16.mxu0 0
    %2962 = vmatpush1.bf16.msra.mxu0 0
    %2963 = vmatprep.subr.bf16.mxu0 0
    %2964 = vmatpush1.bf16.msra.mxu0 0
    %2965 = vmatprep.subr.bf16.mxu0 0
    %2966 = vmatpush1.bf16.msra.mxu0 0
    %2967 = vmatprep.subr.bf16.mxu0 0
    %2968 = vmatpush1.bf16.msra.mxu0 0
    %2969 = vmatprep.mubr.bf16.mxu0 0
    %2970 = vmatmul.mubr.bf16.gmra.mrb[0].mxu0 %v2932
    %v2971 = vpop.f32.mrb[0].mxu0
    %v2972 = vadd.f32 0.0, %v2971
    %v2973 = vpop.f32.mrb[0].mxu0
    %v2974 = vpop.f32.mrb[0].mxu0
    %v2975 = vpop.f32.mrb[0].mxu0
    %2976 = vdwg.mxu0
    %2979 = vrot.lane.b32.xlu0 %v2483, 32
    %v2980 = vpop.permute.xlu0 %2979
    %2981 = vrot.lane.b32.xlu0 %v2532, 32
    %v2982 = vpop.permute.xlu0 %2981
    %2987 = vrot.lane.b32.xlu0 %v2704, 64
    %v2988 = vpop.permute.xlu0 %2987
    %2989 = vrot.lane.b32.xlu0 %v2752, 64
    %v2990 = vpop.permute.xlu0 %2989
    %2995 = vrot.lane.b32.xlu0 %v2924, 96
    %v2996 = vpop.permute.xlu0 %2995
    %2997 = vrot.lane.b32.xlu0 %v2972, 96
    %v2998 = vpop.permute.xlu0 %2997
    %v3001 = vsel %vm460, %v2260, %v2980
    %v3002 = vsel %vm460, %v2306, %v2982
    %v3003 = vsel %vm1363, %v3001, %v2988
    %v3004 = vsel %vm1363, %v3002, %v2990
    %v3005 = vsel %vm1366, %v3003, %v2996
    %v3006 = vsel %vm1366, %v3004, %v2998
    %v3007 = vpack.c.bf16 %v3006, %v3005
    %v3008 = vld [vmem:[#allocation10] sm:$0xf]
    %v3009 = vld [vmem:[#allocation10 + $0x4] sm:$0xf]
    %v3010 = vld [vmem:[#allocation10 + $0x8] sm:$0xf]
    %v3011 = vld [vmem:[#allocation10 + $0xc] sm:$0xf]
    %v3012 = vld [vmem:[#allocation10 + $0x10] sm:$0xf]
    %v3013 = vld [vmem:[#allocation10 + $0x14] sm:$0xf]
    %v3014 = vld [vmem:[#allocation10 + $0x18] sm:$0xf]
    %v3015 = vld [vmem:[#allocation10 + $0x1c] sm:$0xf]
    %v3016 = vld [vmem:[#allocation10 + $0x20] sm:$0xf]
    %v3017 = vld [vmem:[#allocation10 + $0x24] sm:$0xf]
    %v3018 = vld [vmem:[#allocation10 + $0x28] sm:$0xf]
    %v3019 = vld [vmem:[#allocation10 + $0x2c] sm:$0xf]
    %v3020 = vld [vmem:[#allocation10 + $0x30] sm:$0xf]
    %v3021 = vld [vmem:[#allocation10 + $0x34] sm:$0xf]
    %v3022 = vld [vmem:[#allocation10 + $0x38] sm:$0xf]
    %v3023 = vld [vmem:[#allocation10 + $0x3c] sm:$0xf]
    %v3040 = vunpack.c.l.b16 %v3008
    %v3041 = vunpack.c.l.b16 %v3009
    %v3042 = vunpack.c.l.b16 %v3010
    %v3043 = vunpack.c.l.b16 %v3011
    %v3044 = vunpack.c.l.b16 %v3012
    %v3045 = vunpack.c.l.b16 %v3013
    %v3046 = vunpack.c.l.b16 %v3014
    %v3047 = vunpack.c.l.b16 %v3015
    %v3048 = vunpack.c.l.b16 %v3016
    %v3049 = vunpack.c.l.b16 %v3017
    %v3050 = vunpack.c.l.b16 %v3018
    %v3051 = vunpack.c.l.b16 %v3019
    %v3052 = vunpack.c.l.b16 %v3020
    %v3053 = vunpack.c.l.b16 %v3021
    %v3054 = vunpack.c.l.b16 %v3022
    %v3055 = vunpack.c.l.b16 %v3023
    %v3056 = vpack.c.b16 %v3041, %v3040
    %v3057 = vpack.c.b16 %v3043, %v3042
    %v3058 = vpack.c.b16 %v3045, %v3044
    %v3059 = vpack.c.b16 %v3047, %v3046
    %v3060 = vpack.c.b16 %v3049, %v3048
    %v3061 = vpack.c.b16 %v3051, %v3050
    %v3062 = vpack.c.b16 %v3053, %v3052
    %v3063 = vpack.c.b16 %v3055, %v3054
    %3072 = vmatprep.subr.bf16.mxu0 0
    %3073 = vmatpush1.bf16.msra.mxu0 %v3056
    %3074 = vmatprep.subr.bf16.mxu0 0
    %3075 = vmatpush1.bf16.msra.mxu0 %v3057
    %3076 = vmatprep.subr.bf16.mxu0 0
    %3077 = vmatpush1.bf16.msra.mxu0 %v3058
    %3078 = vmatprep.subr.bf16.mxu0 0
    %3079 = vmatpush1.bf16.msra.mxu0 %v3059
    %3080 = vmatprep.subr.bf16.mxu0 0
    %3081 = vmatpush1.bf16.msra.mxu0 %v3060
    %3082 = vmatprep.subr.bf16.mxu0 0
    %3083 = vmatpush1.bf16.msra.mxu0 %v3061
    %3084 = vmatprep.subr.bf16.mxu0 0
    %3085 = vmatpush1.bf16.msra.mxu0 %v3062
    %3086 = vmatprep.subr.bf16.mxu0 0
    %3087 = vmatpush1.bf16.msra.mxu0 %v3063
    %3088 = vmatprep.subr.bf16.mxu0 0
    %3089 = vmatpush1.bf16.msra.mxu0 0
    %3090 = vmatprep.subr.bf16.mxu0 0
    %3091 = vmatpush1.bf16.msra.mxu0 0
    %3092 = vmatprep.subr.bf16.mxu0 0
    %3093 = vmatpush1.bf16.msra.mxu0 0
    %3094 = vmatprep.subr.bf16.mxu0 0
    %3095 = vmatpush1.bf16.msra.mxu0 0
    %3096 = vmatprep.subr.bf16.mxu0 0
    %3097 = vmatpush1.bf16.msra.mxu0 0
    %3098 = vmatprep.subr.bf16.mxu0 0
    %3099 = vmatpush1.bf16.msra.mxu0 0
    %3100 = vmatprep.subr.bf16.mxu0 0
    %3101 = vmatpush1.bf16.msra.mxu0 0
    %3102 = vmatprep.subr.bf16.mxu0 0
    %3103 = vmatpush1.bf16.msra.mxu0 0
    %3104 = vmatprep.mubr.bf16.mxu0 0
    %3105 = vmatmul.mubr.bf16.gmra.mrb[0].mxu0 %v3007
    %v3106 = vpop.f32.mrb[0].mxu0
    %v3107 = vadd.f32 %v143, %v3106
    %v3108 = vpop.f32.mrb[0].mxu0
    %v3109 = vpop.f32.mrb[0].mxu0
    %v3110 = vadd.f32 %v143, %v3109
    %v3111 = vpop.f32.mrb[0].mxu0
    %3112 = vdwg.mxu0
    %v3113 = vadd.f32 %v1818, %v3107
    %v3114 = vadd.f32 %v1819, %v3110
    %3115 = vadd.xlane.f32.xlu0 %v3113
    %v3116 = vpop.xlane.xlu0 %3115
    %3117 = vadd.xlane.f32.xlu0 %v3114
    %v3118 = vpop.xlane.xlu0 %3117
    %v3119 = vmul.f32 %v3116, %v180
    %v3120 = vmul.f32 %v3118, %v180
    %v3121 = vsub.f32 %v3113, %v3119
    %v3122 = vsub.f32 %v3114, %v3120
    %v3123 = vmul.f32 %v3121, %v3121
    %v3124 = vmul.f32 %v3122, %v3122
    %3125 = vadd.xlane.f32.xlu0 %v3123
    %v3126 = vpop.xlane.xlu0 %3125
    %3127 = vadd.xlane.f32.xlu0 %v3124
    %v3128 = vpop.xlane.xlu0 %3127
    %v3129 = vmul.f32 %v3126, %v180
    %v3130 = vmul.f32 %v3128, %v180
    %v3131 = vadd.f32 %v3129, 1e-05
    %v3132 = vadd.f32 %v3130, 1e-05
    %v3133 = vrsqrt.pop %v3131
    %v3134 = vrsqrt.pop %v3132
    %v3135 = vmul.f32 %v3121, %v3133
    %v3136 = vmul.f32 %v3122, %v3134
    %v3137 = vmul.f32 %v3135, %v159
    %v3138 = vmul.f32 %v3136, %v159
    %v3139 = vadd.f32 %v3137, %v163
    %v3140 = vadd.f32 %v3138, %v163
    %v3141 = vpack.c.bf16 %v3140, %v3139
    %v3142 = vld [vmem:[#allocation11] sm:$0xff]
    %v3143 = vld [vmem:[#allocation11 + $0x8] sm:$0xff]
    %v3144 = vld [vmem:[#allocation11 + $0x10] sm:$0xff]
    %v3145 = vld [vmem:[#allocation11 + $0x18] sm:$0xff]
    %v3146 = vld [vmem:[#allocation11 + $0x20] sm:$0xff]
    %v3147 = vld [vmem:[#allocation11 + $0x28] sm:$0xff]
    %v3148 = vld [vmem:[#allocation11 + $0x30] sm:$0xff]
    %v3149 = vld [vmem:[#allocation11 + $0x38] sm:$0xff]
    %v3150 = vld [vmem:[#allocation11 + $0x40] sm:$0xff]
    %v3151 = vld [vmem:[#allocation11 + $0x48] sm:$0xff]
    %v3152 = vld [vmem:[#allocation11 + $0x50] sm:$0xff]
    %v3153 = vld [vmem:[#allocation11 + $0x58] sm:$0xff]
    %v3154 = vld [vmem:[#allocation11 + $0x60] sm:$0xff]
    %v3155 = vld [vmem:[#allocation11 + $0x68] sm:$0xff]
    %v3156 = vld [vmem:[#allocation11 + $0x70] sm:$0xff]
    %v3157 = vld [vmem:[#allocation11 + $0x78] sm:$0xff]
    %v3174 = vunpack.c.l.b16 %v3142
    %v3175 = vunpack.c.h.b16 %v3142
    %v3176 = vunpack.c.l.b16 %v3143
    %v3177 = vunpack.c.h.b16 %v3143
    %v3178 = vunpack.c.l.b16 %v3144
    %v3179 = vunpack.c.h.b16 %v3144
    %v3180 = vunpack.c.l.b16 %v3145
    %v3181 = vunpack.c.h.b16 %v3145
    %v3182 = vunpack.c.l.b16 %v3146
    %v3183 = vunpack.c.h.b16 %v3146
    %v3184 = vunpack.c.l.b16 %v3147
    %v3185 = vunpack.c.h.b16 %v3147
    %v3186 = vunpack.c.l.b16 %v3148
    %v3187 = vunpack.c.h.b16 %v3148
    %v3188 = vunpack.c.l.b16 %v3149
    %v3189 = vunpack.c.h.b16 %v3149
    %v3190 = vunpack.c.l.b16 %v3150
    %v3191 = vunpack.c.h.b16 %v3150
    %v3192 = vunpack.c.l.b16 %v3151
    %v3193 = vunpack.c.h.b16 %v3151
    %v3194 = vunpack.c.l.b16 %v3152
    %v3195 = vunpack.c.h.b16 %v3152
    %v3196 = vunpack.c.l.b16 %v3153
    %v3197 = vunpack.c.h.b16 %v3153
    %v3198 = vunpack.c.l.b16 %v3154
    %v3199 = vunpack.c.h.b16 %v3154
    %v3200 = vunpack.c.l.b16 %v3155
    %v3201 = vunpack.c.h.b16 %v3155
    %v3202 = vunpack.c.l.b16 %v3156
    %v3203 = vunpack.c.h.b16 %v3156
    %v3204 = vunpack.c.l.b16 %v3157
    %v3205 = vunpack.c.h.b16 %v3157
    %v3206 = vpack.c.b16 %v3176, %v3174
    %v3207 = vpack.c.b16 %v3177, %v3175
    %v3208 = vpack.c.b16 %v3180, %v3178
    %v3209 = vpack.c.b16 %v3181, %v3179
    %v3210 = vpack.c.b16 %v3184, %v3182
    %v3211 = vpack.c.b16 %v3185, %v3183
    %v3212 = vpack.c.b16 %v3188, %v3186
    %v3213 = vpack.c.b16 %v3189, %v3187
    %v3214 = vpack.c.b16 %v3192, %v3190
    %v3215 = vpack.c.b16 %v3193, %v3191
    %v3216 = vpack.c.b16 %v3196, %v3194
    %v3217 = vpack.c.b16 %v3197, %v3195
    %v3218 = vpack.c.b16 %v3200, %v3198
    %v3219 = vpack.c.b16 %v3201, %v3199
    %v3220 = vpack.c.b16 %v3204, %v3202
    %v3221 = vpack.c.b16 %v3205, %v3203
    %3238 = vmatprep.subr.bf16.mxu0 %v3207
    %3239 = vmatpush1.bf16.msra.mxu0 %v3206
    %3240 = vmatprep.subr.bf16.mxu0 %v3209
    %3241 = vmatpush1.bf16.msra.mxu0 %v3208
    %3242 = vmatprep.subr.bf16.mxu0 %v3211
    %3243 = vmatpush1.bf16.msra.mxu0 %v3210
    %3244 = vmatprep.subr.bf16.mxu0 %v3213
    %3245 = vmatpush1.bf16.msra.mxu0 %v3212
    %3246 = vmatprep.subr.bf16.mxu0 %v3215
    %3247 = vmatpush1.bf16.msra.mxu0 %v3214
    %3248 = vmatprep.subr.bf16.mxu0 %v3217
    %3249 = vmatpush1.bf16.msra.mxu0 %v3216
    %3250 = vmatprep.subr.bf16.mxu0 %v3219
    %3251 = vmatpush1.bf16.msra.mxu0 %v3218
    %3252 = vmatprep.subr.bf16.mxu0 %v3221
    %3253 = vmatpush1.bf16.msra.mxu0 %v3220
    %3254 = vmatprep.subr.bf16.mxu0 0
    %3255 = vmatpush1.bf16.msra.mxu0 0
    %3256 = vmatprep.subr.bf16.mxu0 0
    %3257 = vmatpush1.bf16.msra.mxu0 0
    %3258 = vmatprep.subr.bf16.mxu0 0
    %3259 = vmatpush1.bf16.msra.mxu0 0
    %3260 = vmatprep.subr.bf16.mxu0 0
    %3261 = vmatpush1.bf16.msra.mxu0 0
    %3262 = vmatprep.subr.bf16.mxu0 0
    %3263 = vmatpush1.bf16.msra.mxu0 0
    %3264 = vmatprep.subr.bf16.mxu0 0
    %3265 = vmatpush1.bf16.msra.mxu0 0
    %3266 = vmatprep.subr.bf16.mxu0 0
    %3267 = vmatpush1.bf16.msra.mxu0 0
    %3268 = vmatprep.subr.bf16.mxu0 0
    %3269 = vmatpush1.bf16.msra.mxu0 0
    %3270 = vmatprep.mubr.bf16.mxu0 0
    %3271 = vmatmul.mubr.bf16.gmra.mrb[0].mxu0 %v3141
    %v3272 = vpop.f32.mrb[0].mxu0
    %v3273 = vadd.f32 %v169, %v3272
    %v3274 = vpop.f32.mrb[0].mxu0
    %v3275 = vadd.f32 %v173, %v3274
    %v3276 = vpop.f32.mrb[0].mxu0
    %v3277 = vadd.f32 %v169, %v3276
    %v3278 = vpop.f32.mrb[0].mxu0
    %v3279 = vadd.f32 %v173, %v3278
    %3280 = vdwg.mxu0
    %v3281 = vmax.f32 %v3273, 0.0
    %v3282 = vmax.f32 %v3275, 0.0
    %v3283 = vmax.f32 %v3277, 0.0
    %v3284 = vmax.f32 %v3279, 0.0
    %v3285 = vpack.c.bf16 %v3283, %v3281
    %v3286 = vpack.c.bf16 %v3284, %v3282
    %v3287 = vld [vmem:[#allocation13] sm:$0xf]
    %v3288 = vld [vmem:[#allocation13 + $0x4] sm:$0xf]
    %v3289 = vld [vmem:[#allocation13 + $0x8] sm:$0xf]
    %v3290 = vld [vmem:[#allocation13 + $0xc] sm:$0xf]
    %v3291 = vld [vmem:[#allocation13 + $0x10] sm:$0xf]
    %v3292 = vld [vmem:[#allocation13 + $0x14] sm:$0xf]
    %v3293 = vld [vmem:[#allocation13 + $0x18] sm:$0xf]
    %v3294 = vld [vmem:[#allocation13 + $0x1c] sm:$0xf]
    %v3295 = vld [vmem:[#allocation13 + $0x20] sm:$0xf]
    %v3296 = vld [vmem:[#allocation13 + $0x24] sm:$0xf]
    %v3297 = vld [vmem:[#allocation13 + $0x28] sm:$0xf]
    %v3298 = vld [vmem:[#allocation13 + $0x2c] sm:$0xf]
    %v3299 = vld [vmem:[#allocation13 + $0x30] sm:$0xf]
    %v3300 = vld [vmem:[#allocation13 + $0x34] sm:$0xf]
    %v3301 = vld [vmem:[#allocation13 + $0x38] sm:$0xf]
    %v3302 = vld [vmem:[#allocation13 + $0x3c] sm:$0xf]
    %v3303 = vld [vmem:[#allocation13 + $0x40] sm:$0xf]
    %v3304 = vld [vmem:[#allocation13 + $0x44] sm:$0xf]
    %v3305 = vld [vmem:[#allocation13 + $0x48] sm:$0xf]
    %v3306 = vld [vmem:[#allocation13 + $0x4c] sm:$0xf]
    %v3307 = vld [vmem:[#allocation13 + $0x50] sm:$0xf]
    %v3308 = vld [vmem:[#allocation13 + $0x54] sm:$0xf]
    %v3309 = vld [vmem:[#allocation13 + $0x58] sm:$0xf]
    %v3310 = vld [vmem:[#allocation13 + $0x5c] sm:$0xf]
    %v3311 = vld [vmem:[#allocation13 + $0x60] sm:$0xf]
    %v3312 = vld [vmem:[#allocation13 + $0x64] sm:$0xf]
    %v3313 = vld [vmem:[#allocation13 + $0x68] sm:$0xf]
    %v3314 = vld [vmem:[#allocation13 + $0x6c] sm:$0xf]
    %v3315 = vld [vmem:[#allocation13 + $0x70] sm:$0xf]
    %v3316 = vld [vmem:[#allocation13 + $0x74] sm:$0xf]
    %v3317 = vld [vmem:[#allocation13 + $0x78] sm:$0xf]
    %v3318 = vld [vmem:[#allocation13 + $0x7c] sm:$0xf]
    %v3351 = vunpack.c.l.b16 %v3287
    %v3352 = vunpack.c.l.b16 %v3288
    %v3353 = vunpack.c.l.b16 %v3289
    %v3354 = vunpack.c.l.b16 %v3290
    %v3355 = vunpack.c.l.b16 %v3291
    %v3356 = vunpack.c.l.b16 %v3292
    %v3357 = vunpack.c.l.b16 %v3293
    %v3358 = vunpack.c.l.b16 %v3294
    %v3359 = vunpack.c.l.b16 %v3295
    %v3360 = vunpack.c.l.b16 %v3296
    %v3361 = vunpack.c.l.b16 %v3297
    %v3362 = vunpack.c.l.b16 %v3298
    %v3363 = vunpack.c.l.b16 %v3299
    %v3364 = vunpack.c.l.b16 %v3300
    %v3365 = vunpack.c.l.b16 %v3301
    %v3366 = vunpack.c.l.b16 %v3302
    %v3367 = vunpack.c.l.b16 %v3303
    %v3368 = vunpack.c.l.b16 %v3304
    %v3369 = vunpack.c.l.b16 %v3305
    %v3370 = vunpack.c.l.b16 %v3306
    %v3371 = vunpack.c.l.b16 %v3307
    %v3372 = vunpack.c.l.b16 %v3308
    %v3373 = vunpack.c.l.b16 %v3309
    %v3374 = vunpack.c.l.b16 %v3310
    %v3375 = vunpack.c.l.b16 %v3311
    %v3376 = vunpack.c.l.b16 %v3312
    %v3377 = vunpack.c.l.b16 %v3313
    %v3378 = vunpack.c.l.b16 %v3314
    %v3379 = vunpack.c.l.b16 %v3315
    %v3380 = vunpack.c.l.b16 %v3316
    %v3381 = vunpack.c.l.b16 %v3317
    %v3382 = vunpack.c.l.b16 %v3318
    %v3383 = vpack.c.b16 %v3352, %v3351
    %v3384 = vpack.c.b16 %v3354, %v3353
    %v3385 = vpack.c.b16 %v3356, %v3355
    %v3386 = vpack.c.b16 %v3358, %v3357
    %v3387 = vpack.c.b16 %v3360, %v3359
    %v3388 = vpack.c.b16 %v3362, %v3361
    %v3389 = vpack.c.b16 %v3364, %v3363
    %v3390 = vpack.c.b16 %v3366, %v3365
    %v3391 = vpack.c.b16 %v3368, %v3367
    %v3392 = vpack.c.b16 %v3370, %v3369
    %v3393 = vpack.c.b16 %v3372, %v3371
    %v3394 = vpack.c.b16 %v3374, %v3373
    %v3395 = vpack.c.b16 %v3376, %v3375
    %v3396 = vpack.c.b16 %v3378, %v3377
    %v3397 = vpack.c.b16 %v3380, %v3379
    %v3398 = vpack.c.b16 %v3382, %v3381
    %3415 = vmatprep.subr.bf16.mxu0 0
    %3416 = vmatpush1.bf16.msra.mxu0 %v3383
    %3417 = vmatprep.subr.bf16.mxu0 0
    %3418 = vmatpush1.bf16.msra.mxu0 %v3384
    %3419 = vmatprep.subr.bf16.mxu0 0
    %3420 = vmatpush1.bf16.msra.mxu0 %v3385
    %3421 = vmatprep.subr.bf16.mxu0 0
    %3422 = vmatpush1.bf16.msra.mxu0 %v3386
    %3423 = vmatprep.subr.bf16.mxu0 0
    %3424 = vmatpush1.bf16.msra.mxu0 %v3387
    %3425 = vmatprep.subr.bf16.mxu0 0
    %3426 = vmatpush1.bf16.msra.mxu0 %v3388
    %3427 = vmatprep.subr.bf16.mxu0 0
    %3428 = vmatpush1.bf16.msra.mxu0 %v3389
    %3429 = vmatprep.subr.bf16.mxu0 0
    %3430 = vmatpush1.bf16.msra.mxu0 %v3390
    %3431 = vmatprep.subr.bf16.mxu0 0
    %3432 = vmatpush1.bf16.msra.mxu0 %v3391
    %3433 = vmatprep.subr.bf16.mxu0 0
    %3434 = vmatpush1.bf16.msra.mxu0 %v3392
    %3435 = vmatprep.subr.bf16.mxu0 0
    %3436 = vmatpush1.bf16.msra.mxu0 %v3393
    %3437 = vmatprep.subr.bf16.mxu0 0
    %3438 = vmatpush1.bf16.msra.mxu0 %v3394
    %3439 = vmatprep.subr.bf16.mxu0 0
    %3440 = vmatpush1.bf16.msra.mxu0 %v3395
    %3441 = vmatprep.subr.bf16.mxu0 0
    %3442 = vmatpush1.bf16.msra.mxu0 %v3396
    %3443 = vmatprep.subr.bf16.mxu0 0
    %3444 = vmatpush1.bf16.msra.mxu0 %v3397
    %3445 = vmatprep.subr.bf16.mxu0 0
    %3446 = vmatpush1.bf16.msra.mxu0 %v3398
    %3447 = vmatprep.mubr.bf16.mxu0 %v3286
    %3448 = vmatmul.mubr.bf16.gmra.mrb[0].mxu0 %v3285
    %v3449 = vpop.f32.mrb[0].mxu0
    %v3450 = vadd.f32 %v147, %v3449
    %v3451 = vpop.f32.mrb[0].mxu0
    %v3452 = vpop.f32.mrb[0].mxu0
    %v3453 = vadd.f32 %v147, %v3452
    %v3454 = vpop.f32.mrb[0].mxu0
    %3455 = vdwg.mxu0
    %v3456 = vadd.f32 %v3113, %v3450
    %v3457 = vadd.f32 %v3114, %v3453
    %3458 = vst [vmem:[#allocation14] sm:$0xff] %v3456
    %3459 = vst [vmem:[#allocation14 + $0x8] sm:$0xff] %v3457
    // Predicated region
    $region66: #{tpu_custom_call.1} parent=1 // pred_check
      _
    $region67: #{tpu_custom_call.1} parent=1 // pred_check_branch
      %3461 = sbr.rel (0) target = $region69
    $region68: #{tpu_custom_call.1} parent=1 // pred_region
      %s3463 = ssub.s32 256, 256
      %3464 = vsyncadd [#allocation4], %s3463
      %s3465 = sshll.u32 [#allocation14], 4
      %s3466 = int_to_ptr.vmem [resolvable:$true] %s3465
      %3471 = dma.vmem_to_hbm [thread:$0]  %s3466, 256, %s9, [#allocation4], 128, 128, 8
    $region69: #{tpu_custom_call.1} parent=1 // pred_fallthru
      _
    // Predicated region
    $region70: #{tpu_custom_call.1} parent=1 // pred_check
      _
    $region71: #{tpu_custom_call.1} parent=1 // pred_check_branch
      %3473 = sbr.rel (0) target = $region73
    $region72: #{tpu_custom_call.1} parent=1 // pred_region
      %3474 = dma.done [#allocation4], 256
    $region73: #{tpu_custom_call.1} parent=1 // pred_fallthru
      _
    %3475 = vsyncpa [#allocation3], 1
    %3476 = vsyncpa [#allocation6], 1
    %3477 = vsyncpa [#allocation9], 1
    %3478 = vsyncpa [#allocation12], 1
    %3479 = vsyncpa [#allocation4], 1

</llo_original>
